<compile_context>
chip_gen: v5e
topology: v5e:2x2
jax: 0.10.0
libtpu: 0.0.40
codegen_flags: <defaults>
</compile_context>

<pallas_src>
import functools
import math

import jax
import jax.numpy as jnp
from jax.experimental import pallas as pl
from jax.experimental.pallas import tpu as pltpu

_VMEM_LIMIT = 32 * 1024 * 1024   # safe on v5e/v6e (128 MiB) and v7x (64 MiB physical)
_ACT_DTYPE = jnp.bfloat16        # inter-kernel activation storage dtype
_LN_EPS = 1e-5


# ----------------------------- Linear (+PE/ReLU/residual/LayerNorm) -----------------------------

def _linear_kernel_factory(has_pe, has_res, act, has_ln, eps):
    """(x[+pe]) @ w + b [+relu] [+residual] [-> LayerNorm].  All epilogue math in f32."""
    def kernel(*refs):
        idx = 0
        x_ref = refs[idx]; idx += 1
        pe_ref = None
        if has_pe:
            pe_ref = refs[idx]; idx += 1
        w_ref = refs[idx]; idx += 1
        b_ref = refs[idx]; idx += 1
        res_ref = None
        if has_res:
            res_ref = refs[idx]; idx += 1
        g_ref = beta_ref = None
        if has_ln:
            g_ref = refs[idx]; idx += 1
            beta_ref = refs[idx]; idx += 1
        o_ref = refs[idx]

        x = x_ref[...]
        if pe_ref is not None:
            x = x + pe_ref[...]
        y = jnp.dot(x, w_ref[...], preferred_element_type=jnp.float32)
        y = y + b_ref[...]
        if act == "relu":
            y = jnp.maximum(y, 0.0)
        if res_ref is not None:
            y = y + res_ref[...].astype(jnp.float32)
        if has_ln:
            mean = jnp.mean(y, axis=-1, keepdims=True)
            var = jnp.mean(jnp.square(y - mean), axis=-1, keepdims=True)
            y = (y - mean) * jax.lax.rsqrt(var + eps)
            y = y * g_ref[...] + beta_ref[...]
        o_ref[...] = y.astype(o_ref.dtype)
    return kernel


def fused_linear(x, w, b, *, pe=None, residual=None, act=None, ln=None,
                 eps=_LN_EPS, tm=512, tn=512):
    """y = (x [+ pe]) @ w + b [+relu] [+residual] [-> LayerNorm].

    If dout fits one N tile (always true in this model) the grid is 1-D over rows so
    the weight block index is constant (weight stays VMEM-resident across row tiles).
    LayerNorm fusion requires the full feature dim in a single block.
    """
    orig_shape = x.shape
    din = orig_shape[-1]
    dout = w.shape[1]
    x2 = x.reshape(-1, din)
    m = x2.shape[0]
    TM = m if m <= tm else tm

    one_d = (dout <= tn) or (ln is not None)
    assert ln is None or one_d, "LayerNorm fusion needs the full feature dim in one block"

    if one_d:
        TN = dout
        grid = (pl.cdiv(m, TM),)
        dims = ("parallel",)
        x_map = lambda i: (i, 0)
        w_map = lambda i: (0, 0)
        o_map = lambda i: (i, 0)
    else:
        TN = tn
        grid = (pl.cdiv(m, TM), pl.cdiv(dout, TN))
        dims = ("parallel", "parallel")
        x_map = lambda i, j: (i, 0)
        w_map = lambda i, j: (0, j)
        o_map = lambda i, j: (i, j)

    in_specs = [pl.BlockSpec((TM, din), x_map)]
    args = [x2]
    if pe is not None:
        in_specs.append(pl.BlockSpec((TM, din), x_map))
        args.append(pe.reshape(-1, din))
    in_specs.append(pl.BlockSpec((din, TN), w_map))
    args.append(w)
    in_specs.append(pl.BlockSpec((1, TN), w_map))
    args.append(b.reshape(1, dout))
    if residual is not None:
        in_specs.append(pl.BlockSpec((TM, TN), o_map))
        args.append(residual.reshape(-1, dout))
    if ln is not None:
        g, beta = ln
        in_specs.append(pl.BlockSpec((1, TN), w_map))
        args.append(g.reshape(1, dout))
        in_specs.append(pl.BlockSpec((1, TN), w_map))
        args.append(beta.reshape(1, dout))

    out = pl.pallas_call(
        _linear_kernel_factory(pe is not None, residual is not None, act,
                               ln is not None, eps),
        grid=grid,
        in_specs=in_specs,
        out_specs=pl.BlockSpec((TM, TN), o_map),
        out_shape=jax.ShapeDtypeStruct((m, dout), _ACT_DTYPE),
        compiler_params=pltpu.CompilerParams(
            dimension_semantics=dims, vmem_limit_bytes=_VMEM_LIMIT),
    )(*args)
    return out.reshape(orig_shape[:-1] + (dout,))


# ----------------------------- Fused Q/K/V projections -----------------------------

def _qkv_self_kernel_factory(has_pe):
    """Self-attention projections: x is read once; Q/K use x+pe, V uses x."""
    def kernel(*refs):
        idx = 0
        x_ref = refs[idx]; idx += 1
        pe_ref = None
        if has_pe:
            pe_ref = refs[idx]; idx += 1
        qw, qb, kw, kb, vw, vb = refs[idx:idx + 6]; idx += 6
        q_ref, k_ref, v_ref = refs[idx:idx + 3]

        x = x_ref[...]
        xp = x + pe_ref[...] if pe_ref is not None else x
        q = jnp.dot(xp, qw[...], preferred_element_type=jnp.float32) + qb[...]
        k = jnp.dot(xp, kw[...], preferred_element_type=jnp.float32) + kb[...]
        v = jnp.dot(x, vw[...], preferred_element_type=jnp.float32) + vb[...]
        q_ref[...] = q.astype(q_ref.dtype)
        k_ref[...] = k.astype(k_ref.dtype)
        v_ref[...] = v.astype(v_ref.dtype)
    return kernel


def fused_qkv_self(x, pe, p, *, tm=512):
    B, n, din = x.shape
    internal = p["q_w"].shape[1]
    x2 = x.reshape(-1, din)
    m = x2.shape[0]
    TM = m if m <= tm else tm
    grid = (pl.cdiv(m, TM),)
    row = lambda i: (i, 0)
    const = lambda i: (0, 0)

    in_specs = [pl.BlockSpec((TM, din), row)]
    args = [x2]
    if pe is not None:
        in_specs.append(pl.BlockSpec((TM, din), row))
        args.append(pe.reshape(-1, din))
    for name in ("q", "k", "v"):
        in_specs.append(pl.BlockSpec((din, internal), const))
        args.append(p[name + "_w"])
        in_specs.append(pl.BlockSpec((1, internal), const))
        args.append(p[name + "_b"])

    out_spec = pl.BlockSpec((TM, internal), row)
    out_shape = jax.ShapeDtypeStruct((m, internal), _ACT_DTYPE)
    q, k, v = pl.pallas_call(
        _qkv_self_kernel_factory(pe is not None),
        grid=grid,
        in_specs=in_specs,
        out_specs=(out_spec, out_spec, out_spec),
        out_shape=(out_shape, out_shape, out_shape),
        compiler_params=pltpu.CompilerParams(
            dimension_semantics=("parallel",), vmem_limit_bytes=_VMEM_LIMIT),
    )(*args)
    return (q.reshape(B, n, internal), k.reshape(B, n, internal),
            v.reshape(B, n, internal))


def _kv_kernel_factory(has_pe):
    """Cross-attention K/V projections sharing the same input (K uses x+pe, V uses x)."""
    def kernel(*refs):
        idx = 0
        x_ref = refs[idx]; idx += 1
        pe_ref = None
        if has_pe:
            pe_ref = refs[idx]; idx += 1
        kw, kb, vw, vb = refs[idx:idx + 4]; idx += 4
        k_ref, v_ref = refs[idx:idx + 2]

        x = x_ref[...]
        xk = x + pe_ref[...] if pe_ref is not None else x
        k = jnp.dot(xk, kw[...], preferred_element_type=jnp.float32) + kb[...]
        v = jnp.dot(x, vw[...], preferred_element_type=jnp.float32) + vb[...]
        k_ref[...] = k.astype(k_ref.dtype)
        v_ref[...] = v.astype(v_ref.dtype)
    return kernel


def fused_kv(x, pe, p, *, tm=512):
    B, n, din = x.shape
    internal = p["k_w"].shape[1]
    x2 = x.reshape(-1, din)
    m = x2.shape[0]
    TM = m if m <= tm else tm
    grid = (pl.cdiv(m, TM),)
    row = lambda i: (i, 0)
    const = lambda i: (0, 0)

    in_specs = [pl.BlockSpec((TM, din), row)]
    args = [x2]
    if pe is not None:
        in_specs.append(pl.BlockSpec((TM, din), row))
        args.append(pe.reshape(-1, din))
    for name in ("k", "v"):
        in_specs.append(pl.BlockSpec((din, internal), const))
        args.append(p[name + "_w"])
        in_specs.append(pl.BlockSpec((1, internal), const))
        args.append(p[name + "_b"])

    out_spec = pl.BlockSpec((TM, internal), row)
    out_shape = jax.ShapeDtypeStruct((m, internal), _ACT_DTYPE)
    k, v = pl.pallas_call(
        _kv_kernel_factory(pe is not None),
        grid=grid,
        in_specs=in_specs,
        out_specs=(out_spec, out_spec),
        out_shape=(out_shape, out_shape),
        compiler_params=pltpu.CompilerParams(
            dimension_semantics=("parallel",), vmem_limit_bytes=_VMEM_LIMIT),
    )(*args)
    return k.reshape(B, n, internal), v.reshape(B, n, internal)


# ----------------------------- Attention core (heads merged on lanes) -----------------------------

def _attn_core_kernel(q_ref, k_ref, v_ref, o_ref, *, num_heads):
    # q: (TQ, C), k/v: (NK, C) with C = num_heads * d_head.  The 1/sqrt(d) scale is
    # already folded into the Q projection weights.  Heads are split with static lane
    # slices (no HBM transposes) and the output store is a single lane-dense (TQ, C) slab.
    q = q_ref[...]
    k = k_ref[...]
    v = v_ref[...]
    c = q.shape[-1]
    d = c // num_heads
    outs = []
    for h in range(num_heads):            # static unroll over heads
        qh = q[:, h * d:(h + 1) * d]
        kh = k[:, h * d:(h + 1) * d]
        vh = v[:, h * d:(h + 1) * d]
        s = jax.lax.dot_general(qh, kh, (((1,), (1,)), ((), ())),
                                preferred_element_type=jnp.float32)   # (TQ, NK)
        s = s - jnp.max(s, axis=-1, keepdims=True)
        p = jnp.exp(s)
        denom = jnp.sum(p, axis=-1, keepdims=True)
        p = p * pl.reciprocal(denom, approx=True)                     # EUP slot
        outs.append(jnp.dot(p.astype(vh.dtype), vh,
                            preferred_element_type=jnp.float32))
    o_ref[...] = jnp.concatenate(outs, axis=-1).astype(o_ref.dtype)


def attn_core(q, k, v, num_heads, *, tq=512):
    """Softmax attention with heads kept merged on the feature axis.

    q: (B, Nq, C), k/v: (B, Nk, C).  Grid = (B, q tiles); each step reads the full
    K/V for its batch (index-invariant over the q-tile axis -> fetched once).
    """
    B, nq, c = q.shape
    nk = k.shape[1]
    TQ = nq if nq <= tq else tq
    grid = (B, pl.cdiv(nq, TQ))
    # TODO(synk): for very long key sequences, tile Nk with a flash-style online-softmax
    # accumulator instead of holding the full (TQ, Nk) score block.
    return pl.pallas_call(
        functools.partial(_attn_core_kernel, num_heads=num_heads),
        grid=grid,
        in_specs=[
            pl.BlockSpec((pl.Squeezed(), TQ, c), lambda b, j: (b, j, 0)),
            pl.BlockSpec((pl.Squeezed(), nk, c), lambda b, j: (b, 0, 0)),
            pl.BlockSpec((pl.Squeezed(), nk, c), lambda b, j: (b, 0, 0)),
        ],
        out_specs=pl.BlockSpec((pl.Squeezed(), TQ, c), lambda b, j: (b, j, 0)),
        out_shape=jax.ShapeDtypeStruct((B, nq, c), _ACT_DTYPE),
        compiler_params=pltpu.CompilerParams(
            dimension_semantics=("parallel", "parallel"),
            vmem_limit_bytes=_VMEM_LIMIT),
    )(q, k, v)


# ----------------------------- Fused MLP block (token path) -----------------------------

def _mlp_kernel(x_ref, w1_ref, b1_ref, w2_ref, b2_ref, res_ref, g_ref, beta_ref,
                o_ref, *, eps):
    x = x_ref[...]
    h = jnp.dot(x, w1_ref[...], preferred_element_type=jnp.float32) + b1_ref[...]
    h = jnp.maximum(h, 0.0)
    y = jnp.dot(h.astype(w2_ref.dtype), w2_ref[...],
                preferred_element_type=jnp.float32) + b2_ref[...]
    y = y + res_ref[...].astype(jnp.float32)
    mean = jnp.mean(y, axis=-1, keepdims=True)
    var = jnp.mean(jnp.square(y - mean), axis=-1, keepdims=True)
    y = (y - mean) * jax.lax.rsqrt(var + eps)
    o_ref[...] = (y * g_ref[...] + beta_ref[...]).astype(o_ref.dtype)


def fused_mlp(x, mlp_p, residual, ln_g, ln_b, *, eps=_LN_EPS, tm=256):
    """LayerNorm(residual + lin2(relu(lin1(x)))) in a single kernel.

    Only used on the (tiny) point-token path, so the whole thing is one grid step
    and both weight matrices stay VMEM-resident.
    """
    B, n, din = x.shape
    mlp_dim = mlp_p["lin1_w"].shape[1]
    dout = mlp_p["lin2_w"].shape[1]
    x2 = x.reshape(-1, din)
    m = x2.shape[0]
    TM = m if m <= tm else tm
    grid = (pl.cdiv(m, TM),)
    row = lambda i: (i, 0)
    const = lambda i: (0, 0)

    out = pl.pallas_call(
        functools.partial(_mlp_kernel, eps=eps),
        grid=grid,
        in_specs=[
            pl.BlockSpec((TM, din), row),
            pl.BlockSpec((din, mlp_dim), const),
            pl.BlockSpec((1, mlp_dim), const),
            pl.BlockSpec((mlp_dim, dout), const),
            pl.BlockSpec((1, dout), const),
            pl.BlockSpec((TM, dout), row),
            pl.BlockSpec((1, dout), const),
            pl.BlockSpec((1, dout), const),
        ],
        out_specs=pl.BlockSpec((TM, dout), row),
        out_shape=jax.ShapeDtypeStruct((m, dout), _ACT_DTYPE),
        compiler_params=pltpu.CompilerParams(
            dimension_semantics=("parallel",), vmem_limit_bytes=_VMEM_LIMIT),
    )(x2, mlp_p["lin1_w"], mlp_p["lin1_b"], mlp_p["lin2_w"], mlp_p["lin2_b"],
      residual.reshape(-1, dout), ln_g, ln_b)
    return out.reshape(B, n, dout)


# ----------------------------- Module logic (glue) -----------------------------

def attention_forward(p, q_in, k_in, v_in, num_heads, *,
                      q_pe=None, k_pe=None, residual=None, ln=None):
    """Attention(q_in[+q_pe], k_in[+k_pe], v_in) with the residual add and LayerNorm
    fused into the out-projection epilogue."""
    if (q_in is k_in) and (k_in is v_in) and (q_pe is k_pe):
        q, k, v = fused_qkv_self(q_in, q_pe, p)
    else:
        q = fused_linear(q_in, p["q_w"], p["q_b"], pe=q_pe)
        if k_in is v_in:
            k, v = fused_kv(k_in, k_pe, p)
        else:
            k = fused_linear(k_in, p["k_w"], p["k_b"], pe=k_pe)
            v = fused_linear(v_in, p["v_w"], p["v_b"])
    attn = attn_core(q, k, v, num_heads)
    return fused_linear(attn, p["out_w"], p["out_b"], residual=residual, ln=ln)


def two_way_block(p, queries, keys, query_pe, key_pe, num_heads, skip_first_layer_pe):
    # Self attention (+ norm1 fused into out-proj).
    if skip_first_layer_pe:
        queries = attention_forward(p["self_attn"], queries, queries, queries,
                                    num_heads, ln=(p["norm1_g"], p["norm1_b"]))
    else:
        queries = attention_forward(p["self_attn"], queries, queries, queries,
                                    num_heads, q_pe=query_pe, k_pe=query_pe,
                                    residual=queries, ln=(p["norm1_g"], p["norm1_b"]))
    # Cross attention: tokens -> image (+ norm2 fused).
    queries = attention_forward(p["cross_t2i"], queries, keys, keys, num_heads,
                                q_pe=query_pe, k_pe=key_pe, residual=queries,
                                ln=(p["norm2_g"], p["norm2_b"]))
    # MLP + residual + norm3 in one kernel.
    queries = fused_mlp(queries, p["mlp"], queries, p["norm3_g"], p["norm3_b"])
    # Cross attention: image -> tokens (q/k swapped, v = queries; + norm4 fused on keys).
    keys = attention_forward(p["cross_i2t"], keys, queries, queries, num_heads,
                             q_pe=key_pe, k_pe=query_pe, residual=keys,
                             ln=(p["norm4_g"], p["norm4_b"]))
    return queries, keys


def two_way_transformer(params, image_embedding, image_pe, point_embedding, num_heads):
    """Forward pass.  `params` must come from prepare_params() (bf16 weights etc.)."""
    B, C, H, W = image_embedding.shape
    image_embedding = image_embedding.astype(_ACT_DTYPE).reshape(B, C, H * W).transpose(0, 2, 1)
    image_pe = image_pe.astype(_ACT_DTYPE).reshape(B, C, H * W).transpose(0, 2, 1)
    point_embedding = point_embedding.astype(_ACT_DTYPE)

    queries = point_embedding
    keys = image_embedding
    for i, lp in enumerate(params["layers"]):
        queries, keys = two_way_block(lp, queries, keys, point_embedding, image_pe,
                                      num_heads, skip_first_layer_pe=(i == 0))
    queries = attention_forward(params["final_attn"], queries, keys, keys, num_heads,
                                q_pe=point_embedding, k_pe=image_pe, residual=queries,
                                ln=(params["norm_final_g"], params["norm_final_b"]))
    return queries.astype(jnp.float32), keys.astype(jnp.float32)


# ----------------------------- Parameter init & one-time prep -----------------------------

def init_linear(key, din, dout):
    kw, kb = jax.random.split(key)
    bound = 1.0 / math.sqrt(din)
    w = jax.random.uniform(kw, (din, dout), jnp.float32, -bound, bound)
    b = jax.random.uniform(kb, (dout,), jnp.float32, -bound, bound)
    return w, b


def init_attention(key, embedding_dim, downsample_rate=1):
    internal = embedding_dim // downsample_rate
    k1, k2, k3, k4 = jax.random.split(key, 4)
    qw, qb = init_linear(k1, embedding_dim, internal)
    kw, kb = init_linear(k2, embedding_dim, internal)
    vw, vb = init_linear(k3, embedding_dim, internal)
    ow, ob = init_linear(k4, internal, embedding_dim)
    return {"q_w": qw, "q_b": qb, "k_w": kw, "k_b": kb,
            "v_w": vw, "v_b": vb, "out_w": ow, "out_b": ob}


def init_block(key, embedding_dim, mlp_dim, downsample_rate):
    keys = jax.random.split(key, 5)
    lin1_w, lin1_b = init_linear(keys[3], embedding_dim, mlp_dim)
    lin2_w, lin2_b = init_linear(keys[4], mlp_dim, embedding_dim)
    return {
        "self_attn": init_attention(keys[0], embedding_dim, 1),
        "cross_t2i": init_attention(keys[1], embedding_dim, downsample_rate),
        "cross_i2t": init_attention(keys[2], embedding_dim, downsample_rate),
        "mlp": {"lin1_w": lin1_w, "lin1_b": lin1_b, "lin2_w": lin2_w, "lin2_b": lin2_b},
        "norm1_g": jnp.ones((embedding_dim,), jnp.float32),
        "norm1_b": jnp.zeros((embedding_dim,), jnp.float32),
        "norm2_g": jnp.ones((embedding_dim,), jnp.float32),
        "norm2_b": jnp.zeros((embedding_dim,), jnp.float32),
        "norm3_g": jnp.ones((embedding_dim,), jnp.float32),
        "norm3_b": jnp.zeros((embedding_dim,), jnp.float32),
        "norm4_g": jnp.ones((embedding_dim,), jnp.float32),
        "norm4_b": jnp.zeros((embedding_dim,), jnp.float32),
    }


def init_two_way_transformer(key, depth, embedding_dim, mlp_dim, downsample_rate=2):
    keys = jax.random.split(key, depth + 1)
    return {
        "layers": [init_block(keys[i], embedding_dim, mlp_dim, downsample_rate)
                   for i in range(depth)],
        "final_attn": init_attention(keys[depth], embedding_dim, downsample_rate),
        "norm_final_g": jnp.ones((embedding_dim,), jnp.float32),
        "norm_final_b": jnp.zeros((embedding_dim,), jnp.float32),
    }


def prepare_params(params, num_heads, dtype=_ACT_DTYPE):
    """One-time prep (outside the layer loop): cast matmul weights to bf16, reshape
    biases / LN params to (1, d), and fold 1/sqrt(d_head) into the Q projection."""
    def prep_attn(p):
        internal = p["q_w"].shape[1]
        scale = 1.0 / math.sqrt(internal // num_heads)
        return {
            "q_w": (p["q_w"] * scale).astype(dtype),
            "q_b": (p["q_b"] * scale).reshape(1, -1).astype(jnp.float32),
            "k_w": p["k_w"].astype(dtype),
            "k_b": p["k_b"].reshape(1, -1).astype(jnp.float32),
            "v_w": p["v_w"].astype(dtype),
            "v_b": p["v_b"].reshape(1, -1).astype(jnp.float32),
            "out_w": p["out_w"].astype(dtype),
            "out_b": p["out_b"].reshape(1, -1).astype(jnp.float32),
        }

    def vec(v):
        return v.reshape(1, -1).astype(jnp.float32)

    out = {"layers": []}
    for lp in params["layers"]:
        out["layers"].append({
            "self_attn": prep_attn(lp["self_attn"]),
            "cross_t2i": prep_attn(lp["cross_t2i"]),
            "cross_i2t": prep_attn(lp["cross_i2t"]),
            "mlp": {
                "lin1_w": lp["mlp"]["lin1_w"].astype(dtype),
                "lin1_b": vec(lp["mlp"]["lin1_b"]),
                "lin2_w": lp["mlp"]["lin2_w"].astype(dtype),
                "lin2_b": vec(lp["mlp"]["lin2_b"]),
            },
            **{k: vec(lp[k]) for k in (
                "norm1_g", "norm1_b", "norm2_g", "norm2_b",
                "norm3_g", "norm3_b", "norm4_g", "norm4_b")},
        })
    out["final_attn"] = prep_attn(params["final_attn"])
    out["norm_final_g"] = vec(params["norm_final_g"])
    out["norm_final_b"] = vec(params["norm_final_b"])
    return out


# ----------------------------- Main -----------------------------

if __name__ == "__main__":
    depth = 2
    embedding_dim = 32
    num_heads = 2
    mlp_dim = 64
    B, H, W = 2, 4, 4
    n_points = 8

    root = jax.random.PRNGKey(0)
    kp, k1, k2, k3 = jax.random.split(root, 4)
    params = init_two_way_transformer(kp, depth, embedding_dim, mlp_dim,
                                      downsample_rate=2)
    # bf16 cast / bias reshape / scale folding happen ONCE, outside the layer loop.
    pparams = prepare_params(params, num_heads)

    image_embedding = jax.random.normal(k1, (B, embedding_dim, H, W), jnp.float32)
    image_pe = jax.random.normal(k2, (B, embedding_dim, H, W), jnp.float32)
    point_embedding = jax.random.normal(k3, (B, n_points, embedding_dim), jnp.float32)

    fwd = jax.jit(functools.partial(two_way_transformer, num_heads=num_heads))
    queries, keys = fwd(pparams, image_embedding, image_pe, point_embedding)
    queries = jax.block_until_ready(queries)
    keys = jax.block_until_ready(keys)

    assert queries.shape == (B, n_points, embedding_dim)
    assert keys.shape == (B, H * W, embedding_dim)
    assert jnp.all(jnp.isfinite(queries)) and jnp.all(jnp.isfinite(keys))
    print("KERNEL_OK")
</pallas_src>

<mosaic_0001>
module attributes {stable_mosaic.version = 11 : i64} {
  func.func @kernel(%arg0: i32, %arg1: memref<16x32xbf16, #tpu.memory_space<vmem>>, %arg2: memref<32x32xbf16, #tpu.memory_space<vmem>>, %arg3: memref<1x32xf32, #tpu.memory_space<vmem>>, %arg4: memref<32x32xbf16, #tpu.memory_space<vmem>>, %arg5: memref<1x32xf32, #tpu.memory_space<vmem>>, %arg6: memref<32x32xbf16, #tpu.memory_space<vmem>>, %arg7: memref<1x32xf32, #tpu.memory_space<vmem>>, %arg8: memref<16x32xbf16, #tpu.memory_space<vmem>>, %arg9: memref<16x32xbf16, #tpu.memory_space<vmem>>, %arg10: memref<16x32xbf16, #tpu.memory_space<vmem>>) attributes {dimension_semantics = [#tpu.dimension_semantics<parallel>], iteration_bounds = array<i64: 1>, scalar_prefetch = 0 : i64, scratch_operands = 0 : i64, tpu.core_type = #tpu.core_type<tc>, window_params = [{transform_indices = @transform_0, window_bounds = array<i64: 16, 32>}, {pipeline_mode = #tpu.pipeline_mode<synchronous>, transform_indices = @transform_1, window_bounds = array<i64: 32, 32>}, {pipeline_mode = #tpu.pipeline_mode<synchronous>, transform_indices = @transform_2, window_bounds = array<i64: 1, 32>}, {pipeline_mode = #tpu.pipeline_mode<synchronous>, transform_indices = @transform_3, window_bounds = array<i64: 32, 32>}, {pipeline_mode = #tpu.pipeline_mode<synchronous>, transform_indices = @transform_4, window_bounds = array<i64: 1, 32>}, {pipeline_mode = #tpu.pipeline_mode<synchronous>, transform_indices = @transform_5, window_bounds = array<i64: 32, 32>}, {pipeline_mode = #tpu.pipeline_mode<synchronous>, transform_indices = @transform_6, window_bounds = array<i64: 1, 32>}, {transform_indices = @transform_7, window_bounds = array<i64: 16, 32>}, {transform_indices = @transform_8, window_bounds = array<i64: 16, 32>}, {transform_indices = @transform_9, window_bounds = array<i64: 16, 32>}]} {
    %c0 = arith.constant 0 : index
    %c0_0 = arith.constant 0 : index
    %0 = vector.load %arg1[%c0, %c0_0] : memref<16x32xbf16, #tpu.memory_space<vmem>>, vector<16x32xbf16>
    %c0_1 = arith.constant 0 : index
    %c0_2 = arith.constant 0 : index
    %1 = vector.load %arg2[%c0_1, %c0_2] : memref<32x32xbf16, #tpu.memory_space<vmem>>, vector<32x32xbf16>
    %cst = arith.constant dense<0.000000e+00> : vector<16x32xf32>
    %2 = tpu.matmul %0, %1, %cst {dimension_numbers = #tpu.dot_dimension_numbers<[1], [0], [0], [1], [0, 0, 1, 1], [], []>} : vector<16x32xbf16>, vector<32x32xbf16>, vector<16x32xf32> -> vector<16x32xf32>
    %c0_3 = arith.constant 0 : index
    %c0_4 = arith.constant 0 : index
    %3 = vector.load %arg3[%c0_3, %c0_4] : memref<1x32xf32, #tpu.memory_space<vmem>>, vector<1x32xf32>
    %4 = vector.broadcast %3 : vector<1x32xf32> to vector<16x32xf32>
    %5 = arith.addf %2, %4 : vector<16x32xf32>
    %c0_5 = arith.constant 0 : index
    %c0_6 = arith.constant 0 : index
    %6 = vector.load %arg4[%c0_5, %c0_6] : memref<32x32xbf16, #tpu.memory_space<vmem>>, vector<32x32xbf16>
    %cst_7 = arith.constant dense<0.000000e+00> : vector<16x32xf32>
    %7 = tpu.matmul %0, %6, %cst_7 {dimension_numbers = #tpu.dot_dimension_numbers<[1], [0], [0], [1], [0, 0, 1, 1], [], []>} : vector<16x32xbf16>, vector<32x32xbf16>, vector<16x32xf32> -> vector<16x32xf32>
    %c0_8 = arith.constant 0 : index
    %c0_9 = arith.constant 0 : index
    %8 = vector.load %arg5[%c0_8, %c0_9] : memref<1x32xf32, #tpu.memory_space<vmem>>, vector<1x32xf32>
    %9 = vector.broadcast %8 : vector<1x32xf32> to vector<16x32xf32>
    %10 = arith.addf %7, %9 : vector<16x32xf32>
    %c0_10 = arith.constant 0 : index
    %c0_11 = arith.constant 0 : index
    %11 = vector.load %arg6[%c0_10, %c0_11] : memref<32x32xbf16, #tpu.memory_space<vmem>>, vector<32x32xbf16>
    %cst_12 = arith.constant dense<0.000000e+00> : vector<16x32xf32>
    %12 = tpu.matmul %0, %11, %cst_12 {dimension_numbers = #tpu.dot_dimension_numbers<[1], [0], [0], [1], [0, 0, 1, 1], [], []>} : vector<16x32xbf16>, vector<32x32xbf16>, vector<16x32xf32> -> vector<16x32xf32>
    %c0_13 = arith.constant 0 : index
    %c0_14 = arith.constant 0 : index
    %13 = vector.load %arg7[%c0_13, %c0_14] : memref<1x32xf32, #tpu.memory_space<vmem>>, vector<1x32xf32>
    %14 = vector.broadcast %13 : vector<1x32xf32> to vector<16x32xf32>
    %15 = arith.addf %12, %14 : vector<16x32xf32>
    %16 = arith.truncf %5 : vector<16x32xf32> to vector<16x32xbf16>
    %c0_15 = arith.constant 0 : index
    %c0_16 = arith.constant 0 : index
    %17 = vector.load %arg8[%c0_15, %c0_16] : memref<16x32xbf16, #tpu.memory_space<vmem>>, vector<16x32xbf16>
    tpu.vector_store %arg8[%c0_15, %c0_16], %16 {strides = array<i32>} : memref<16x32xbf16, #tpu.memory_space<vmem>>, vector<16x32xbf16>,
    %18 = arith.truncf %10 : vector<16x32xf32> to vector<16x32xbf16>
    %c0_17 = arith.constant 0 : index
    %c0_18 = arith.constant 0 : index
    %19 = vector.load %arg9[%c0_17, %c0_18] : memref<16x32xbf16, #tpu.memory_space<vmem>>, vector<16x32xbf16>
    tpu.vector_store %arg9[%c0_17, %c0_18], %18 {strides = array<i32>} : memref<16x32xbf16, #tpu.memory_space<vmem>>, vector<16x32xbf16>,
    %20 = arith.truncf %15 : vector<16x32xf32> to vector<16x32xbf16>
    %c0_19 = arith.constant 0 : index
    %c0_20 = arith.constant 0 : index
    %21 = vector.load %arg10[%c0_19, %c0_20] : memref<16x32xbf16, #tpu.memory_space<vmem>>, vector<16x32xbf16>
    tpu.vector_store %arg10[%c0_19, %c0_20], %20 {strides = array<i32>} : memref<16x32xbf16, #tpu.memory_space<vmem>>, vector<16x32xbf16>,
    return
  }
  func.func @transform_0(%arg0: i32) -> (i32, i32) {
    %c0_i32 = arith.constant 0 : i32
    %c0_i32_0 = arith.constant 0 : i32
    return %arg0, %c0_i32 : i32, i32
  }
  func.func @transform_1(%arg0: i32) -> (i32, i32) {
    %c0_i32 = arith.constant 0 : i32
    %c0_i32_0 = arith.constant 0 : i32
    %c0_i32_1 = arith.constant 0 : i32
    return %c0_i32, %c0_i32_0 : i32, i32
  }
  func.func @transform_2(%arg0: i32) -> (i32, i32) {
    %c0_i32 = arith.constant 0 : i32
    %c0_i32_0 = arith.constant 0 : i32
    %c0_i32_1 = arith.constant 0 : i32
    return %c0_i32, %c0_i32_0 : i32, i32
  }
  func.func @transform_3(%arg0: i32) -> (i32, i32) {
    %c0_i32 = arith.constant 0 : i32
    %c0_i32_0 = arith.constant 0 : i32
    %c0_i32_1 = arith.constant 0 : i32
    return %c0_i32, %c0_i32_0 : i32, i32
  }
  func.func @transform_4(%arg0: i32) -> (i32, i32) {
    %c0_i32 = arith.constant 0 : i32
    %c0_i32_0 = arith.constant 0 : i32
    %c0_i32_1 = arith.constant 0 : i32
    return %c0_i32, %c0_i32_0 : i32, i32
  }
  func.func @transform_5(%arg0: i32) -> (i32, i32) {
    %c0_i32 = arith.constant 0 : i32
    %c0_i32_0 = arith.constant 0 : i32
    %c0_i32_1 = arith.constant 0 : i32
    return %c0_i32, %c0_i32_0 : i32, i32
  }
  func.func @transform_6(%arg0: i32) -> (i32, i32) {
    %c0_i32 = arith.constant 0 : i32
    %c0_i32_0 = arith.constant 0 : i32
    %c0_i32_1 = arith.constant 0 : i32
    return %c0_i32, %c0_i32_0 : i32, i32
  }
  func.func @transform_7(%arg0: i32) -> (i32, i32) {
    %c0_i32 = arith.constant 0 : i32
    %c0_i32_0 = arith.constant 0 : i32
    return %arg0, %c0_i32 : i32, i32
  }
  func.func @transform_8(%arg0: i32) -> (i32, i32) {
    %c0_i32 = arith.constant 0 : i32
    %c0_i32_0 = arith.constant 0 : i32
    return %arg0, %c0_i32 : i32, i32
  }
  func.func @transform_9(%arg0: i32) -> (i32, i32) {
    %c0_i32 = arith.constant 0 : i32
    %c0_i32_0 = arith.constant 0 : i32
    return %arg0, %c0_i32 : i32, i32
  }
}

module attributes {stable_mosaic.version = 11 : i64} {
  func.func @kernel(%arg0: i32, %arg1: memref<16x32xbf16, #tpu.memory_space<vmem>>, %arg2: memref<32x32xbf16, #tpu.memory_space<vmem>>, %arg3: memref<1x32xf32, #tpu.memory_space<vmem>>, %arg4: memref<1x32xf32, #tpu.memory_space<vmem>>, %arg5: memref<1x32xf32, #tpu.memory_space<vmem>>, %arg6: memref<16x32xbf16, #tpu.memory_space<vmem>>) attributes {dimension_semantics = [#tpu.dimension_semantics<parallel>], iteration_bounds = array<i64: 1>, scalar_prefetch = 0 : i64, scratch_operands = 0 : i64, tpu.core_type = #tpu.core_type<tc>, window_params = [{transform_indices = @transform_0, window_bounds = array<i64: 16, 32>}, {pipeline_mode = #tpu.pipeline_mode<synchronous>, transform_indices = @transform_1, window_bounds = array<i64: 32, 32>}, {pipeline_mode = #tpu.pipeline_mode<synchronous>, transform_indices = @transform_2, window_bounds = array<i64: 1, 32>}, {pipeline_mode = #tpu.pipeline_mode<synchronous>, transform_indices = @transform_3, window_bounds = array<i64: 1, 32>}, {pipeline_mode = #tpu.pipeline_mode<synchronous>, transform_indices = @transform_4, window_bounds = array<i64: 1, 32>}, {transform_indices = @transform_5, window_bounds = array<i64: 16, 32>}]} {
    %c0 = arith.constant 0 : index
    %c0_0 = arith.constant 0 : index
    %0 = vector.load %arg1[%c0, %c0_0] : memref<16x32xbf16, #tpu.memory_space<vmem>>, vector<16x32xbf16>
    %c0_1 = arith.constant 0 : index
    %c0_2 = arith.constant 0 : index
    %1 = vector.load %arg2[%c0_1, %c0_2] : memref<32x32xbf16, #tpu.memory_space<vmem>>, vector<32x32xbf16>
    %cst = arith.constant dense<0.000000e+00> : vector<16x32xf32>
    %2 = tpu.matmul %0, %1, %cst {dimension_numbers = #tpu.dot_dimension_numbers<[1], [0], [0], [1], [0, 0, 1, 1], [], []>} : vector<16x32xbf16>, vector<32x32xbf16>, vector<16x32xf32> -> vector<16x32xf32>
    %c0_3 = arith.constant 0 : index
    %c0_4 = arith.constant 0 : index
    %3 = vector.load %arg3[%c0_3, %c0_4] : memref<1x32xf32, #tpu.memory_space<vmem>>, vector<1x32xf32>
    %4 = vector.broadcast %3 : vector<1x32xf32> to vector<16x32xf32>
    %5 = arith.addf %2, %4 : vector<16x32xf32>
    %cst_5 = arith.constant dense<0.000000e+00> : vector<16xf32>
    %6 = vector.multi_reduction <add>, %5, %cst_5 [1] : vector<16x32xf32> to vector<16xf32>
    %7 = vector.shape_cast %6 : vector<16xf32> to vector<16x1xf32>
    %cst_6 = arith.constant 3.200000e+01 : f32
    %8 = vector.broadcast %cst_6 : f32 to vector<16x1xf32>
    %9 = arith.divf %7, %8 : vector<16x1xf32>
    %10 = vector.broadcast %9 : vector<16x1xf32> to vector<16x32xf32>
    %11 = arith.subf %5, %10 : vector<16x32xf32>
    %12 = arith.mulf %11, %11 : vector<16x32xf32>
    %cst_7 = arith.constant dense<0.000000e+00> : vector<16xf32>
    %13 = vector.multi_reduction <add>, %12, %cst_7 [1] : vector<16x32xf32> to vector<16xf32>
    %14 = vector.shape_cast %13 : vector<16xf32> to vector<16x1xf32>
    %cst_8 = arith.constant 3.200000e+01 : f32
    %15 = vector.broadcast %cst_8 : f32 to vector<16x1xf32>
    %16 = arith.divf %14, %15 : vector<16x1xf32>
    %17 = vector.broadcast %9 : vector<16x1xf32> to vector<16x32xf32>
    %18 = arith.subf %5, %17 : vector<16x32xf32>
    %cst_9 = arith.constant 9.99999974E-6 : f32
    %19 = vector.broadcast %cst_9 : f32 to vector<16x1xf32>
    %20 = arith.addf %16, %19 : vector<16x1xf32>
    %21 = math.rsqrt %20 : vector<16x1xf32>
    %22 = vector.broadcast %21 : vector<16x1xf32> to vector<16x32xf32>
    %23 = arith.mulf %18, %22 : vector<16x32xf32>
    %c0_10 = arith.constant 0 : index
    %c0_11 = arith.constant 0 : index
    %24 = vector.load %arg4[%c0_10, %c0_11] : memref<1x32xf32, #tpu.memory_space<vmem>>, vector<1x32xf32>
    %25 = vector.broadcast %24 : vector<1x32xf32> to vector<16x32xf32>
    %26 = arith.mulf %23, %25 : vector<16x32xf32>
    %c0_12 = arith.constant 0 : index
    %c0_13 = arith.constant 0 : index
    %27 = vector.load %arg5[%c0_12, %c0_13] : memref<1x32xf32, #tpu.memory_space<vmem>>, vector<1x32xf32>
    %28 = vector.broadcast %27 : vector<1x32xf32> to vector<16x32xf32>
    %29 = arith.addf %26, %28 : vector<16x32xf32>
    %30 = arith.truncf %29 : vector<16x32xf32> to vector<16x32xbf16>
    %c0_14 = arith.constant 0 : index
    %c0_15 = arith.constant 0 : index
    %31 = vector.load %arg6[%c0_14, %c0_15] : memref<16x32xbf16, #tpu.memory_space<vmem>>, vector<16x32xbf16>
    tpu.vector_store %arg6[%c0_14, %c0_15], %30 {strides = array<i32>} : memref<16x32xbf16, #tpu.memory_space<vmem>>, vector<16x32xbf16>,
    return
  }
  func.func @transform_0(%arg0: i32) -> (i32, i32) {
    %c0_i32 = arith.constant 0 : i32
    %c0_i32_0 = arith.constant 0 : i32
    return %arg0, %c0_i32 : i32, i32
  }
  func.func @transform_1(%arg0: i32) -> (i32, i32) {
    %c0_i32 = arith.constant 0 : i32
    %c0_i32_0 = arith.constant 0 : i32
    %c0_i32_1 = arith.constant 0 : i32
    return %c0_i32, %c0_i32_0 : i32, i32
  }
  func.func @transform_2(%arg0: i32) -> (i32, i32) {
    %c0_i32 = arith.constant 0 : i32
    %c0_i32_0 = arith.constant 0 : i32
    %c0_i32_1 = arith.constant 0 : i32
    return %c0_i32, %c0_i32_0 : i32, i32
  }
  func.func @transform_3(%arg0: i32) -> (i32, i32) {
    %c0_i32 = arith.constant 0 : i32
    %c0_i32_0 = arith.constant 0 : i32
    %c0_i32_1 = arith.constant 0 : i32
    return %c0_i32, %c0_i32_0 : i32, i32
  }
  func.func @transform_4(%arg0: i32) -> (i32, i32) {
    %c0_i32 = arith.constant 0 : i32
    %c0_i32_0 = arith.constant 0 : i32
    %c0_i32_1 = arith.constant 0 : i32
    return %c0_i32, %c0_i32_0 : i32, i32
  }
  func.func @transform_5(%arg0: i32) -> (i32, i32) {
    %c0_i32 = arith.constant 0 : i32
    %c0_i32_0 = arith.constant 0 : i32
    return %arg0, %c0_i32 : i32, i32
  }
}

module attributes {stable_mosaic.version = 11 : i64} {
  func.func @_attn_core_kernel(%arg0: i32, %arg1: i32, %arg2: memref<1x8x32xbf16, #tpu.memory_space<vmem>>, %arg3: memref<1x8x32xbf16, #tpu.memory_space<vmem>>, %arg4: memref<1x8x32xbf16, #tpu.memory_space<vmem>>, %arg5: memref<1x8x32xbf16, #tpu.memory_space<vmem>>) attributes {dimension_semantics = [#tpu.dimension_semantics<parallel>, #tpu.dimension_semantics<parallel>], iteration_bounds = array<i64: 2, 1>, scalar_prefetch = 0 : i64, scratch_operands = 0 : i64, tpu.core_type = #tpu.core_type<tc>, window_params = [{transform_indices = @transform_0, window_bounds = array<i64: 1, 8, 32>}, {transform_indices = @transform_1, window_bounds = array<i64: 1, 8, 32>}, {transform_indices = @transform_2, window_bounds = array<i64: 1, 8, 32>}, {transform_indices = @transform_3, window_bounds = array<i64: 1, 8, 32>}]} {
    %c0 = arith.constant 0 : index
    %c0_0 = arith.constant 0 : index
    %c0_1 = arith.constant 0 : index
    %0 = vector.load %arg2[%c0, %c0_0, %c0_1] : memref<1x8x32xbf16, #tpu.memory_space<vmem>>, vector<1x8x32xbf16>
    %1 = vector.shape_cast %0 : vector<1x8x32xbf16> to vector<8x32xbf16>
    %c0_2 = arith.constant 0 : index
    %c0_3 = arith.constant 0 : index
    %c0_4 = arith.constant 0 : index
    %2 = vector.load %arg3[%c0_2, %c0_3, %c0_4] : memref<1x8x32xbf16, #tpu.memory_space<vmem>>, vector<1x8x32xbf16>
    %3 = vector.shape_cast %2 : vector<1x8x32xbf16> to vector<8x32xbf16>
    %c0_5 = arith.constant 0 : index
    %c0_6 = arith.constant 0 : index
    %c0_7 = arith.constant 0 : index
    %4 = vector.load %arg4[%c0_5, %c0_6, %c0_7] : memref<1x8x32xbf16, #tpu.memory_space<vmem>>, vector<1x8x32xbf16>
    %5 = vector.shape_cast %4 : vector<1x8x32xbf16> to vector<8x32xbf16>
    %6 = vector.extract_strided_slice %1 {offsets = [0, 0], sizes = [8, 16], strides = [1, 1]} : vector<8x32xbf16> to vector<8x16xbf16>
    %7 = vector.extract_strided_slice %3 {offsets = [0, 0], sizes = [8, 16], strides = [1, 1]} : vector<8x32xbf16> to vector<8x16xbf16>
    %8 = vector.extract_strided_slice %5 {offsets = [0, 0], sizes = [8, 16], strides = [1, 1]} : vector<8x32xbf16> to vector<8x16xbf16>
    %cst = arith.constant dense<0.000000e+00> : vector<8x8xf32>
    %9 = tpu.matmul %6, %7, %cst {dimension_numbers = #tpu.dot_dimension_numbers<[1], [1], [0], [0], [0, 0, 1, 0], [], []>} : vector<8x16xbf16>, vector<8x16xbf16>, vector<8x8xf32> -> vector<8x8xf32>
    %cst_8 = arith.constant dense<0xFF800000> : vector<8xf32>
    %10 = vector.multi_reduction <maximumf>, %9, %cst_8 [1] : vector<8x8xf32> to vector<8xf32>
    %11 = vector.shape_cast %10 : vector<8xf32> to vector<8x1xf32>
    %12 = vector.broadcast %11 : vector<8x1xf32> to vector<8x8xf32>
    %13 = arith.subf %9, %12 : vector<8x8xf32>
    %14 = math.exp %13 : vector<8x8xf32>
    %cst_9 = arith.constant dense<0.000000e+00> : vector<8xf32>
    %15 = vector.multi_reduction <add>, %14, %cst_9 [1] : vector<8x8xf32> to vector<8xf32>
    %16 = vector.shape_cast %15 : vector<8xf32> to vector<8x1xf32>
    %17 = tpu.reciprocal %16 {approx = true} : vector<8x1xf32> -> vector<8x1xf32>
    %18 = vector.broadcast %17 : vector<8x1xf32> to vector<8x8xf32>
    %19 = arith.mulf %14, %18 : vector<8x8xf32>
    %20 = arith.truncf %19 : vector<8x8xf32> to vector<8x8xbf16>
    %cst_10 = arith.constant dense<0.000000e+00> : vector<8x16xf32>
    %21 = tpu.matmul %20, %8, %cst_10 {dimension_numbers = #tpu.dot_dimension_numbers<[1], [0], [0], [1], [0, 0, 1, 1], [], []>} : vector<8x8xbf16>, vector<8x16xbf16>, vector<8x16xf32> -> vector<8x16xf32>
    %22 = vector.extract_strided_slice %1 {offsets = [0, 16], sizes = [8, 16], strides = [1, 1]} : vector<8x32xbf16> to vector<8x16xbf16>
    %23 = vector.extract_strided_slice %3 {offsets = [0, 16], sizes = [8, 16], strides = [1, 1]} : vector<8x32xbf16> to vector<8x16xbf16>
    %24 = vector.extract_strided_slice %5 {offsets = [0, 16], sizes = [8, 16], strides = [1, 1]} : vector<8x32xbf16> to vector<8x16xbf16>
    %cst_11 = arith.constant dense<0.000000e+00> : vector<8x8xf32>
    %25 = tpu.matmul %22, %23, %cst_11 {dimension_numbers = #tpu.dot_dimension_numbers<[1], [1], [0], [0], [0, 0, 1, 0], [], []>} : vector<8x16xbf16>, vector<8x16xbf16>, vector<8x8xf32> -> vector<8x8xf32>
    %cst_12 = arith.constant dense<0xFF800000> : vector<8xf32>
    %26 = vector.multi_reduction <maximumf>, %25, %cst_12 [1] : vector<8x8xf32> to vector<8xf32>
    %27 = vector.shape_cast %26 : vector<8xf32> to vector<8x1xf32>
    %28 = vector.broadcast %27 : vector<8x1xf32> to vector<8x8xf32>
    %29 = arith.subf %25, %28 : vector<8x8xf32>
    %30 = math.exp %29 : vector<8x8xf32>
    %cst_13 = arith.constant dense<0.000000e+00> : vector<8xf32>
    %31 = vector.multi_reduction <add>, %30, %cst_13 [1] : vector<8x8xf32> to vector<8xf32>
    %32 = vector.shape_cast %31 : vector<8xf32> to vector<8x1xf32>
    %33 = tpu.reciprocal %32 {approx = true} : vector<8x1xf32> -> vector<8x1xf32>
    %34 = vector.broadcast %33 : vector<8x1xf32> to vector<8x8xf32>
    %35 = arith.mulf %30, %34 : vector<8x8xf32>
    %36 = arith.truncf %35 : vector<8x8xf32> to vector<8x8xbf16>
    %cst_14 = arith.constant dense<0.000000e+00> : vector<8x16xf32>
    %37 = tpu.matmul %36, %24, %cst_14 {dimension_numbers = #tpu.dot_dimension_numbers<[1], [0], [0], [1], [0, 0, 1, 1], [], []>} : vector<8x8xbf16>, vector<8x16xbf16>, vector<8x16xf32> -> vector<8x16xf32>
    %38 = tpu.concatenate %21, %37 in 1 : vector<8x16xf32>, vector<8x16xf32> -> vector<8x32xf32>
    %39 = arith.truncf %38 : vector<8x32xf32> to vector<8x32xbf16>
    %c0_15 = arith.constant 0 : index
    %c0_16 = arith.constant 0 : index
    %c0_17 = arith.constant 0 : index
    %40 = vector.load %arg5[%c0_15, %c0_16, %c0_17] : memref<1x8x32xbf16, #tpu.memory_space<vmem>>, vector<1x8x32xbf16>
    %41 = vector.shape_cast %40 : vector<1x8x32xbf16> to vector<8x32xbf16>
    %42 = vector.shape_cast %39 : vector<8x32xbf16> to vector<1x8x32xbf16>
    tpu.vector_store %arg5[%c0_15, %c0_16, %c0_17], %42 {strides = array<i32>} : memref<1x8x32xbf16, #tpu.memory_space<vmem>>, vector<1x8x32xbf16>,
    return
  }
  func.func @transform_0(%arg0: i32, %arg1: i32) -> (i32, i32, i32) {
    %c0_i32 = arith.constant 0 : i32
    %c0_i32_0 = arith.constant 0 : i32
    return %arg0, %arg1, %c0_i32 : i32, i32, i32
  }
  func.func @transform_1(%arg0: i32, %arg1: i32) -> (i32, i32, i32) {
    %c0_i32 = arith.constant 0 : i32
    %c0_i32_0 = arith.constant 0 : i32
    %c0_i32_1 = arith.constant 0 : i32
    return %arg0, %c0_i32, %c0_i32_0 : i32, i32, i32
  }
  func.func @transform_2(%arg0: i32, %arg1: i32) -> (i32, i32, i32) {
    %c0_i32 = arith.constant 0 : i32
    %c0_i32_0 = arith.constant 0 : i32
    %c0_i32_1 = arith.constant 0 : i32
    return %arg0, %c0_i32, %c0_i32_0 : i32, i32, i32
  }
  func.func @transform_3(%arg0: i32, %arg1: i32) -> (i32, i32, i32) {
    %c0_i32 = arith.constant 0 : i32
    %c0_i32_0 = arith.constant 0 : i32
    return %arg0, %arg1, %c0_i32 : i32, i32, i32
  }
}

module attributes {stable_mosaic.version = 11 : i64} {
  func.func @kernel(%arg0: i32, %arg1: memref<16x32xbf16, #tpu.memory_space<vmem>>, %arg2: memref<16x32xbf16, #tpu.memory_space<vmem>>, %arg3: memref<32x16xbf16, #tpu.memory_space<vmem>>, %arg4: memref<1x16xf32, #tpu.memory_space<vmem>>, %arg5: memref<16x16xbf16, #tpu.memory_space<vmem>>) attributes {dimension_semantics = [#tpu.dimension_semantics<parallel>], iteration_bounds = array<i64: 1>, scalar_prefetch = 0 : i64, scratch_operands = 0 : i64, tpu.core_type = #tpu.core_type<tc>, window_params = [{transform_indices = @transform_0, window_bounds = array<i64: 16, 32>}, {transform_indices = @transform_1, window_bounds = array<i64: 16, 32>}, {pipeline_mode = #tpu.pipeline_mode<synchronous>, transform_indices = @transform_2, window_bounds = array<i64: 32, 16>}, {pipeline_mode = #tpu.pipeline_mode<synchronous>, transform_indices = @transform_3, window_bounds = array<i64: 1, 16>}, {transform_indices = @transform_4, window_bounds = array<i64: 16, 16>}]} {
    %c0 = arith.constant 0 : index
    %c0_0 = arith.constant 0 : index
    %0 = vector.load %arg1[%c0, %c0_0] : memref<16x32xbf16, #tpu.memory_space<vmem>>, vector<16x32xbf16>
    %c0_1 = arith.constant 0 : index
    %c0_2 = arith.constant 0 : index
    %1 = vector.load %arg2[%c0_1, %c0_2] : memref<16x32xbf16, #tpu.memory_space<vmem>>, vector<16x32xbf16>
    %2 = arith.addf %0, %1 : vector<16x32xbf16>
    %c0_3 = arith.constant 0 : index
    %c0_4 = arith.constant 0 : index
    %3 = vector.load %arg3[%c0_3, %c0_4] : memref<32x16xbf16, #tpu.memory_space<vmem>>, vector<32x16xbf16>
    %cst = arith.constant dense<0.000000e+00> : vector<16x16xf32>
    %4 = tpu.matmul %2, %3, %cst {dimension_numbers = #tpu.dot_dimension_numbers<[1], [0], [0], [1], [0, 0, 1, 1], [], []>} : vector<16x32xbf16>, vector<32x16xbf16>, vector<16x16xf32> -> vector<16x16xf32>
    %c0_5 = arith.constant 0 : index
    %c0_6 = arith.constant 0 : index
    %5 = vector.load %arg4[%c0_5, %c0_6] : memref<1x16xf32, #tpu.memory_space<vmem>>, vector<1x16xf32>
    %6 = vector.broadcast %5 : vector<1x16xf32> to vector<16x16xf32>
    %7 = arith.addf %4, %6 : vector<16x16xf32>
    %8 = arith.truncf %7 : vector<16x16xf32> to vector<16x16xbf16>
    %c0_7 = arith.constant 0 : index
    %c0_8 = arith.constant 0 : index
    %9 = vector.load %arg5[%c0_7, %c0_8] : memref<16x16xbf16, #tpu.memory_space<vmem>>, vector<16x16xbf16>
    tpu.vector_store %arg5[%c0_7, %c0_8], %8 {strides = array<i32>} : memref<16x16xbf16, #tpu.memory_space<vmem>>, vector<16x16xbf16>,
    return
  }
  func.func @transform_0(%arg0: i32) -> (i32, i32) {
    %c0_i32 = arith.constant 0 : i32
    %c0_i32_0 = arith.constant 0 : i32
    return %arg0, %c0_i32 : i32, i32
  }
  func.func @transform_1(%arg0: i32) -> (i32, i32) {
    %c0_i32 = arith.constant 0 : i32
    %c0_i32_0 = arith.constant 0 : i32
    return %arg0, %c0_i32 : i32, i32
  }
  func.func @transform_2(%arg0: i32) -> (i32, i32) {
    %c0_i32 = arith.constant 0 : i32
    %c0_i32_0 = arith.constant 0 : i32
    %c0_i32_1 = arith.constant 0 : i32
    return %c0_i32, %c0_i32_0 : i32, i32
  }
  func.func @transform_3(%arg0: i32) -> (i32, i32) {
    %c0_i32 = arith.constant 0 : i32
    %c0_i32_0 = arith.constant 0 : i32
    %c0_i32_1 = arith.constant 0 : i32
    return %c0_i32, %c0_i32_0 : i32, i32
  }
  func.func @transform_4(%arg0: i32) -> (i32, i32) {
    %c0_i32 = arith.constant 0 : i32
    %c0_i32_0 = arith.constant 0 : i32
    return %arg0, %c0_i32 : i32, i32
  }
}

module attributes {stable_mosaic.version = 11 : i64} {
  func.func @kernel(%arg0: i32, %arg1: memref<16x16xbf16, #tpu.memory_space<vmem>>, %arg2: memref<16x32xbf16, #tpu.memory_space<vmem>>, %arg3: memref<1x32xf32, #tpu.memory_space<vmem>>, %arg4: memref<16x32xbf16, #tpu.memory_space<vmem>>, %arg5: memref<1x32xf32, #tpu.memory_space<vmem>>, %arg6: memref<1x32xf32, #tpu.memory_space<vmem>>, %arg7: memref<16x32xbf16, #tpu.memory_space<vmem>>) attributes {dimension_semantics = [#tpu.dimension_semantics<parallel>], iteration_bounds = array<i64: 1>, scalar_prefetch = 0 : i64, scratch_operands = 0 : i64, tpu.core_type = #tpu.core_type<tc>, window_params = [{transform_indices = @transform_0, window_bounds = array<i64: 16, 16>}, {pipeline_mode = #tpu.pipeline_mode<synchronous>, transform_indices = @transform_1, window_bounds = array<i64: 16, 32>}, {pipeline_mode = #tpu.pipeline_mode<synchronous>, transform_indices = @transform_2, window_bounds = array<i64: 1, 32>}, {transform_indices = @transform_3, window_bounds = array<i64: 16, 32>}, {pipeline_mode = #tpu.pipeline_mode<synchronous>, transform_indices = @transform_4, window_bounds = array<i64: 1, 32>}, {pipeline_mode = #tpu.pipeline_mode<synchronous>, transform_indices = @transform_5, window_bounds = array<i64: 1, 32>}, {transform_indices = @transform_6, window_bounds = array<i64: 16, 32>}]} {
    %c0 = arith.constant 0 : index
    %c0_0 = arith.constant 0 : index
    %0 = vector.load %arg1[%c0, %c0_0] : memref<16x16xbf16, #tpu.memory_space<vmem>>, vector<16x16xbf16>
    %c0_1 = arith.constant 0 : index
    %c0_2 = arith.constant 0 : index
    %1 = vector.load %arg2[%c0_1, %c0_2] : memref<16x32xbf16, #tpu.memory_space<vmem>>, vector<16x32xbf16>
    %cst = arith.constant dense<0.000000e+00> : vector<16x32xf32>
    %2 = tpu.matmul %0, %1, %cst {dimension_numbers = #tpu.dot_dimension_numbers<[1], [0], [0], [1], [0, 0, 1, 1], [], []>} : vector<16x16xbf16>, vector<16x32xbf16>, vector<16x32xf32> -> vector<16x32xf32>
    %c0_3 = arith.constant 0 : index
    %c0_4 = arith.constant 0 : index
    %3 = vector.load %arg3[%c0_3, %c0_4] : memref<1x32xf32, #tpu.memory_space<vmem>>, vector<1x32xf32>
    %4 = vector.broadcast %3 : vector<1x32xf32> to vector<16x32xf32>
    %5 = arith.addf %2, %4 : vector<16x32xf32>
    %c0_5 = arith.constant 0 : index
    %c0_6 = arith.constant 0 : index
    %6 = vector.load %arg4[%c0_5, %c0_6] : memref<16x32xbf16, #tpu.memory_space<vmem>>, vector<16x32xbf16>
    %7 = arith.extf %6 : vector<16x32xbf16> to vector<16x32xf32>
    %8 = arith.addf %5, %7 : vector<16x32xf32>
    %cst_7 = arith.constant dense<0.000000e+00> : vector<16xf32>
    %9 = vector.multi_reduction <add>, %8, %cst_7 [1] : vector<16x32xf32> to vector<16xf32>
    %10 = vector.shape_cast %9 : vector<16xf32> to vector<16x1xf32>
    %cst_8 = arith.constant 3.200000e+01 : f32
    %11 = vector.broadcast %cst_8 : f32 to vector<16x1xf32>
    %12 = arith.divf %10, %11 : vector<16x1xf32>
    %13 = vector.broadcast %12 : vector<16x1xf32> to vector<16x32xf32>
    %14 = arith.subf %8, %13 : vector<16x32xf32>
    %15 = arith.mulf %14, %14 : vector<16x32xf32>
    %cst_9 = arith.constant dense<0.000000e+00> : vector<16xf32>
    %16 = vector.multi_reduction <add>, %15, %cst_9 [1] : vector<16x32xf32> to vector<16xf32>
    %17 = vector.shape_cast %16 : vector<16xf32> to vector<16x1xf32>
    %cst_10 = arith.constant 3.200000e+01 : f32
    %18 = vector.broadcast %cst_10 : f32 to vector<16x1xf32>
    %19 = arith.divf %17, %18 : vector<16x1xf32>
    %20 = vector.broadcast %12 : vector<16x1xf32> to vector<16x32xf32>
    %21 = arith.subf %8, %20 : vector<16x32xf32>
    %cst_11 = arith.constant 9.99999974E-6 : f32
    %22 = vector.broadcast %cst_11 : f32 to vector<16x1xf32>
    %23 = arith.addf %19, %22 : vector<16x1xf32>
    %24 = math.rsqrt %23 : vector<16x1xf32>
    %25 = vector.broadcast %24 : vector<16x1xf32> to vector<16x32xf32>
    %26 = arith.mulf %21, %25 : vector<16x32xf32>
    %c0_12 = arith.constant 0 : index
    %c0_13 = arith.constant 0 : index
    %27 = vector.load %arg5[%c0_12, %c0_13] : memref<1x32xf32, #tpu.memory_space<vmem>>, vector<1x32xf32>
    %28 = vector.broadcast %27 : vector<1x32xf32> to vector<16x32xf32>
    %29 = arith.mulf %26, %28 : vector<16x32xf32>
    %c0_14 = arith.constant 0 : index
    %c0_15 = arith.constant 0 : index
    %30 = vector.load %arg6[%c0_14, %c0_15] : memref<1x32xf32, #tpu.memory_space<vmem>>, vector<1x32xf32>
    %31 = vector.broadcast %30 : vector<1x32xf32> to vector<16x32xf32>
    %32 = arith.addf %29, %31 : vector<16x32xf32>
    %33 = arith.truncf %32 : vector<16x32xf32> to vector<16x32xbf16>
    %c0_16 = arith.constant 0 : index
    %c0_17 = arith.constant 0 : index
    %34 = vector.load %arg7[%c0_16, %c0_17] : memref<16x32xbf16, #tpu.memory_space<vmem>>, vector<16x32xbf16>
    tpu.vector_store %arg7[%c0_16, %c0_17], %33 {strides = array<i32>} : memref<16x32xbf16, #tpu.memory_space<vmem>>, vector<16x32xbf16>,
    return
  }
  func.func @transform_0(%arg0: i32) -> (i32, i32) {
    %c0_i32 = arith.constant 0 : i32
    %c0_i32_0 = arith.constant 0 : i32
    return %arg0, %c0_i32 : i32, i32
  }
  func.func @transform_1(%arg0: i32) -> (i32, i32) {
    %c0_i32 = arith.constant 0 : i32
    %c0_i32_0 = arith.constant 0 : i32
    %c0_i32_1 = arith.constant 0 : i32
    return %c0_i32, %c0_i32_0 : i32, i32
  }
  func.func @transform_2(%arg0: i32) -> (i32, i32) {
    %c0_i32 = arith.constant 0 : i32
    %c0_i32_0 = arith.constant 0 : i32
    %c0_i32_1 = arith.constant 0 : i32
    return %c0_i32, %c0_i32_0 : i32, i32
  }
  func.func @transform_3(%arg0: i32) -> (i32, i32) {
    %c0_i32 = arith.constant 0 : i32
    %c0_i32_0 = arith.constant 0 : i32
    return %arg0, %c0_i32 : i32, i32
  }
  func.func @transform_4(%arg0: i32) -> (i32, i32) {
    %c0_i32 = arith.constant 0 : i32
    %c0_i32_0 = arith.constant 0 : i32
    %c0_i32_1 = arith.constant 0 : i32
    return %c0_i32, %c0_i32_0 : i32, i32
  }
  func.func @transform_5(%arg0: i32) -> (i32, i32) {
    %c0_i32 = arith.constant 0 : i32
    %c0_i32_0 = arith.constant 0 : i32
    %c0_i32_1 = arith.constant 0 : i32
    return %c0_i32, %c0_i32_0 : i32, i32
  }
  func.func @transform_6(%arg0: i32) -> (i32, i32) {
    %c0_i32 = arith.constant 0 : i32
    %c0_i32_0 = arith.constant 0 : i32
    return %arg0, %c0_i32 : i32, i32
  }
}

module attributes {stable_mosaic.version = 11 : i64} {
  func.func @kernel(%arg0: i32, %arg1: memref<32x32xbf16, #tpu.memory_space<vmem>>, %arg2: memref<32x32xbf16, #tpu.memory_space<vmem>>, %arg3: memref<32x16xbf16, #tpu.memory_space<vmem>>, %arg4: memref<1x16xf32, #tpu.memory_space<vmem>>, %arg5: memref<32x16xbf16, #tpu.memory_space<vmem>>, %arg6: memref<1x16xf32, #tpu.memory_space<vmem>>, %arg7: memref<32x16xbf16, #tpu.memory_space<vmem>>, %arg8: memref<32x16xbf16, #tpu.memory_space<vmem>>) attributes {dimension_semantics = [#tpu.dimension_semantics<parallel>], iteration_bounds = array<i64: 1>, scalar_prefetch = 0 : i64, scratch_operands = 0 : i64, tpu.core_type = #tpu.core_type<tc>, window_params = [{transform_indices = @transform_0, window_bounds = array<i64: 32, 32>}, {transform_indices = @transform_1, window_bounds = array<i64: 32, 32>}, {pipeline_mode = #tpu.pipeline_mode<synchronous>, transform_indices = @transform_2, window_bounds = array<i64: 32, 16>}, {pipeline_mode = #tpu.pipeline_mode<synchronous>, transform_indices = @transform_3, window_bounds = array<i64: 1, 16>}, {pipeline_mode = #tpu.pipeline_mode<synchronous>, transform_indices = @transform_4, window_bounds = array<i64: 32, 16>}, {pipeline_mode = #tpu.pipeline_mode<synchronous>, transform_indices = @transform_5, window_bounds = array<i64: 1, 16>}, {transform_indices = @transform_6, window_bounds = array<i64: 32, 16>}, {transform_indices = @transform_7, window_bounds = array<i64: 32, 16>}]} {
    %c0 = arith.constant 0 : index
    %c0_0 = arith.constant 0 : index
    %0 = vector.load %arg1[%c0, %c0_0] : memref<32x32xbf16, #tpu.memory_space<vmem>>, vector<32x32xbf16>
    %c0_1 = arith.constant 0 : index
    %c0_2 = arith.constant 0 : index
    %1 = vector.load %arg2[%c0_1, %c0_2] : memref<32x32xbf16, #tpu.memory_space<vmem>>, vector<32x32xbf16>
    %2 = arith.addf %0, %1 : vector<32x32xbf16>
    %c0_3 = arith.constant 0 : index
    %c0_4 = arith.constant 0 : index
    %3 = vector.load %arg3[%c0_3, %c0_4] : memref<32x16xbf16, #tpu.memory_space<vmem>>, vector<32x16xbf16>
    %cst = arith.constant dense<0.000000e+00> : vector<32x16xf32>
    %4 = tpu.matmul %2, %3, %cst {dimension_numbers = #tpu.dot_dimension_numbers<[1], [0], [0], [1], [0, 0, 1, 1], [], []>} : vector<32x32xbf16>, vector<32x16xbf16>, vector<32x16xf32> -> vector<32x16xf32>
    %c0_5 = arith.constant 0 : index
    %c0_6 = arith.constant 0 : index
    %5 = vector.load %arg4[%c0_5, %c0_6] : memref<1x16xf32, #tpu.memory_space<vmem>>, vector<1x16xf32>
    %6 = vector.broadcast %5 : vector<1x16xf32> to vector<32x16xf32>
    %7 = arith.addf %4, %6 : vector<32x16xf32>
    %c0_7 = arith.constant 0 : index
    %c0_8 = arith.constant 0 : index
    %8 = vector.load %arg5[%c0_7, %c0_8] : memref<32x16xbf16, #tpu.memory_space<vmem>>, vector<32x16xbf16>
    %cst_9 = arith.constant dense<0.000000e+00> : vector<32x16xf32>
    %9 = tpu.matmul %0, %8, %cst_9 {dimension_numbers = #tpu.dot_dimension_numbers<[1], [0], [0], [1], [0, 0, 1, 1], [], []>} : vector<32x32xbf16>, vector<32x16xbf16>, vector<32x16xf32> -> vector<32x16xf32>
    %c0_10 = arith.constant 0 : index
    %c0_11 = arith.constant 0 : index
    %10 = vector.load %arg6[%c0_10, %c0_11] : memref<1x16xf32, #tpu.memory_space<vmem>>, vector<1x16xf32>
    %11 = vector.broadcast %10 : vector<1x16xf32> to vector<32x16xf32>
    %12 = arith.addf %9, %11 : vector<32x16xf32>
    %13 = arith.truncf %7 : vector<32x16xf32> to vector<32x16xbf16>
    %c0_12 = arith.constant 0 : index
    %c0_13 = arith.constant 0 : index
    %14 = vector.load %arg7[%c0_12, %c0_13] : memref<32x16xbf16, #tpu.memory_space<vmem>>, vector<32x16xbf16>
    tpu.vector_store %arg7[%c0_12, %c0_13], %13 {strides = array<i32>} : memref<32x16xbf16, #tpu.memory_space<vmem>>, vector<32x16xbf16>,
    %15 = arith.truncf %12 : vector<32x16xf32> to vector<32x16xbf16>
    %c0_14 = arith.constant 0 : index
    %c0_15 = arith.constant 0 : index
    %16 = vector.load %arg8[%c0_14, %c0_15] : memref<32x16xbf16, #tpu.memory_space<vmem>>, vector<32x16xbf16>
    tpu.vector_store %arg8[%c0_14, %c0_15], %15 {strides = array<i32>} : memref<32x16xbf16, #tpu.memory_space<vmem>>, vector<32x16xbf16>,
    return
  }
  func.func @transform_0(%arg0: i32) -> (i32, i32) {
    %c0_i32 = arith.constant 0 : i32
    %c0_i32_0 = arith.constant 0 : i32
    return %arg0, %c0_i32 : i32, i32
  }
  func.func @transform_1(%arg0: i32) -> (i32, i32) {
    %c0_i32 = arith.constant 0 : i32
    %c0_i32_0 = arith.constant 0 : i32
    return %arg0, %c0_i32 : i32, i32
  }
  func.func @transform_2(%arg0: i32) -> (i32, i32) {
    %c0_i32 = arith.constant 0 : i32
    %c0_i32_0 = arith.constant 0 : i32
    %c0_i32_1 = arith.constant 0 : i32
    return %c0_i32, %c0_i32_0 : i32, i32
  }
  func.func @transform_3(%arg0: i32) -> (i32, i32) {
    %c0_i32 = arith.constant 0 : i32
    %c0_i32_0 = arith.constant 0 : i32
    %c0_i32_1 = arith.constant 0 : i32
    return %c0_i32, %c0_i32_0 : i32, i32
  }
  func.func @transform_4(%arg0: i32) -> (i32, i32) {
    %c0_i32 = arith.constant 0 : i32
    %c0_i32_0 = arith.constant 0 : i32
    %c0_i32_1 = arith.constant 0 : i32
    return %c0_i32, %c0_i32_0 : i32, i32
  }
  func.func @transform_5(%arg0: i32) -> (i32, i32) {
    %c0_i32 = arith.constant 0 : i32
    %c0_i32_0 = arith.constant 0 : i32
    %c0_i32_1 = arith.constant 0 : i32
    return %c0_i32, %c0_i32_0 : i32, i32
  }
  func.func @transform_6(%arg0: i32) -> (i32, i32) {
    %c0_i32 = arith.constant 0 : i32
    %c0_i32_0 = arith.constant 0 : i32
    return %arg0, %c0_i32 : i32, i32
  }
  func.func @transform_7(%arg0: i32) -> (i32, i32) {
    %c0_i32 = arith.constant 0 : i32
    %c0_i32_0 = arith.constant 0 : i32
    return %arg0, %c0_i32 : i32, i32
  }
}

module attributes {stable_mosaic.version = 11 : i64} {
  func.func @_attn_core_kernel(%arg0: i32, %arg1: i32, %arg2: memref<1x8x16xbf16, #tpu.memory_space<vmem>>, %arg3: memref<1x16x16xbf16, #tpu.memory_space<vmem>>, %arg4: memref<1x16x16xbf16, #tpu.memory_space<vmem>>, %arg5: memref<1x8x16xbf16, #tpu.memory_space<vmem>>) attributes {dimension_semantics = [#tpu.dimension_semantics<parallel>, #tpu.dimension_semantics<parallel>], iteration_bounds = array<i64: 2, 1>, scalar_prefetch = 0 : i64, scratch_operands = 0 : i64, tpu.core_type = #tpu.core_type<tc>, window_params = [{transform_indices = @transform_0, window_bounds = array<i64: 1, 8, 16>}, {transform_indices = @transform_1, window_bounds = array<i64: 1, 16, 16>}, {transform_indices = @transform_2, window_bounds = array<i64: 1, 16, 16>}, {transform_indices = @transform_3, window_bounds = array<i64: 1, 8, 16>}]} {
    %c0 = arith.constant 0 : index
    %c0_0 = arith.constant 0 : index
    %c0_1 = arith.constant 0 : index
    %0 = vector.load %arg2[%c0, %c0_0, %c0_1] : memref<1x8x16xbf16, #tpu.memory_space<vmem>>, vector<1x8x16xbf16>
    %1 = vector.shape_cast %0 : vector<1x8x16xbf16> to vector<8x16xbf16>
    %c0_2 = arith.constant 0 : index
    %c0_3 = arith.constant 0 : index
    %c0_4 = arith.constant 0 : index
    %2 = vector.load %arg3[%c0_2, %c0_3, %c0_4] : memref<1x16x16xbf16, #tpu.memory_space<vmem>>, vector<1x16x16xbf16>
    %3 = vector.shape_cast %2 : vector<1x16x16xbf16> to vector<16x16xbf16>
    %c0_5 = arith.constant 0 : index
    %c0_6 = arith.constant 0 : index
    %c0_7 = arith.constant 0 : index
    %4 = vector.load %arg4[%c0_5, %c0_6, %c0_7] : memref<1x16x16xbf16, #tpu.memory_space<vmem>>, vector<1x16x16xbf16>
    %5 = vector.shape_cast %4 : vector<1x16x16xbf16> to vector<16x16xbf16>
    %6 = vector.extract_strided_slice %1 {offsets = [0, 0], sizes = [8, 8], strides = [1, 1]} : vector<8x16xbf16> to vector<8x8xbf16>
    %7 = vector.extract_strided_slice %3 {offsets = [0, 0], sizes = [16, 8], strides = [1, 1]} : vector<16x16xbf16> to vector<16x8xbf16>
    %8 = vector.extract_strided_slice %5 {offsets = [0, 0], sizes = [16, 8], strides = [1, 1]} : vector<16x16xbf16> to vector<16x8xbf16>
    %cst = arith.constant dense<0.000000e+00> : vector<8x16xf32>
    %9 = tpu.matmul %6, %7, %cst {dimension_numbers = #tpu.dot_dimension_numbers<[1], [1], [0], [0], [0, 0, 1, 0], [], []>} : vector<8x8xbf16>, vector<16x8xbf16>, vector<8x16xf32> -> vector<8x16xf32>
    %cst_8 = arith.constant dense<0xFF800000> : vector<8xf32>
    %10 = vector.multi_reduction <maximumf>, %9, %cst_8 [1] : vector<8x16xf32> to vector<8xf32>
    %11 = vector.shape_cast %10 : vector<8xf32> to vector<8x1xf32>
    %12 = vector.broadcast %11 : vector<8x1xf32> to vector<8x16xf32>
    %13 = arith.subf %9, %12 : vector<8x16xf32>
    %14 = math.exp %13 : vector<8x16xf32>
    %cst_9 = arith.constant dense<0.000000e+00> : vector<8xf32>
    %15 = vector.multi_reduction <add>, %14, %cst_9 [1] : vector<8x16xf32> to vector<8xf32>
    %16 = vector.shape_cast %15 : vector<8xf32> to vector<8x1xf32>
    %17 = tpu.reciprocal %16 {approx = true} : vector<8x1xf32> -> vector<8x1xf32>
    %18 = vector.broadcast %17 : vector<8x1xf32> to vector<8x16xf32>
    %19 = arith.mulf %14, %18 : vector<8x16xf32>
    %20 = arith.truncf %19 : vector<8x16xf32> to vector<8x16xbf16>
    %cst_10 = arith.constant dense<0.000000e+00> : vector<8x8xf32>
    %21 = tpu.matmul %20, %8, %cst_10 {dimension_numbers = #tpu.dot_dimension_numbers<[1], [0], [0], [1], [0, 0, 1, 1], [], []>} : vector<8x16xbf16>, vector<16x8xbf16>, vector<8x8xf32> -> vector<8x8xf32>
    %22 = vector.extract_strided_slice %1 {offsets = [0, 8], sizes = [8, 8], strides = [1, 1]} : vector<8x16xbf16> to vector<8x8xbf16>
    %23 = vector.extract_strided_slice %3 {offsets = [0, 8], sizes = [16, 8], strides = [1, 1]} : vector<16x16xbf16> to vector<16x8xbf16>
    %24 = vector.extract_strided_slice %5 {offsets = [0, 8], sizes = [16, 8], strides = [1, 1]} : vector<16x16xbf16> to vector<16x8xbf16>
    %cst_11 = arith.constant dense<0.000000e+00> : vector<8x16xf32>
    %25 = tpu.matmul %22, %23, %cst_11 {dimension_numbers = #tpu.dot_dimension_numbers<[1], [1], [0], [0], [0, 0, 1, 0], [], []>} : vector<8x8xbf16>, vector<16x8xbf16>, vector<8x16xf32> -> vector<8x16xf32>
    %cst_12 = arith.constant dense<0xFF800000> : vector<8xf32>
    %26 = vector.multi_reduction <maximumf>, %25, %cst_12 [1] : vector<8x16xf32> to vector<8xf32>
    %27 = vector.shape_cast %26 : vector<8xf32> to vector<8x1xf32>
    %28 = vector.broadcast %27 : vector<8x1xf32> to vector<8x16xf32>
    %29 = arith.subf %25, %28 : vector<8x16xf32>
    %30 = math.exp %29 : vector<8x16xf32>
    %cst_13 = arith.constant dense<0.000000e+00> : vector<8xf32>
    %31 = vector.multi_reduction <add>, %30, %cst_13 [1] : vector<8x16xf32> to vector<8xf32>
    %32 = vector.shape_cast %31 : vector<8xf32> to vector<8x1xf32>
    %33 = tpu.reciprocal %32 {approx = true} : vector<8x1xf32> -> vector<8x1xf32>
    %34 = vector.broadcast %33 : vector<8x1xf32> to vector<8x16xf32>
    %35 = arith.mulf %30, %34 : vector<8x16xf32>
    %36 = arith.truncf %35 : vector<8x16xf32> to vector<8x16xbf16>
    %cst_14 = arith.constant dense<0.000000e+00> : vector<8x8xf32>
    %37 = tpu.matmul %36, %24, %cst_14 {dimension_numbers = #tpu.dot_dimension_numbers<[1], [0], [0], [1], [0, 0, 1, 1], [], []>} : vector<8x16xbf16>, vector<16x8xbf16>, vector<8x8xf32> -> vector<8x8xf32>
    %38 = tpu.concatenate %21, %37 in 1 : vector<8x8xf32>, vector<8x8xf32> -> vector<8x16xf32>
    %39 = arith.truncf %38 : vector<8x16xf32> to vector<8x16xbf16>
    %c0_15 = arith.constant 0 : index
    %c0_16 = arith.constant 0 : index
    %c0_17 = arith.constant 0 : index
    %40 = vector.load %arg5[%c0_15, %c0_16, %c0_17] : memref<1x8x16xbf16, #tpu.memory_space<vmem>>, vector<1x8x16xbf16>
    %41 = vector.shape_cast %40 : vector<1x8x16xbf16> to vector<8x16xbf16>
    %42 = vector.shape_cast %39 : vector<8x16xbf16> to vector<1x8x16xbf16>
    tpu.vector_store %arg5[%c0_15, %c0_16, %c0_17], %42 {strides = array<i32>} : memref<1x8x16xbf16, #tpu.memory_space<vmem>>, vector<1x8x16xbf16>,
    return
  }
  func.func @transform_0(%arg0: i32, %arg1: i32) -> (i32, i32, i32) {
    %c0_i32 = arith.constant 0 : i32
    %c0_i32_0 = arith.constant 0 : i32
    return %arg0, %arg1, %c0_i32 : i32, i32, i32
  }
  func.func @transform_1(%arg0: i32, %arg1: i32) -> (i32, i32, i32) {
    %c0_i32 = arith.constant 0 : i32
    %c0_i32_0 = arith.constant 0 : i32
    %c0_i32_1 = arith.constant 0 : i32
    return %arg0, %c0_i32, %c0_i32_0 : i32, i32, i32
  }
  func.func @transform_2(%arg0: i32, %arg1: i32) -> (i32, i32, i32) {
    %c0_i32 = arith.constant 0 : i32
    %c0_i32_0 = arith.constant 0 : i32
    %c0_i32_1 = arith.constant 0 : i32
    return %arg0, %c0_i32, %c0_i32_0 : i32, i32, i32
  }
  func.func @transform_3(%arg0: i32, %arg1: i32) -> (i32, i32, i32) {
    %c0_i32 = arith.constant 0 : i32
    %c0_i32_0 = arith.constant 0 : i32
    return %arg0, %arg1, %c0_i32 : i32, i32, i32
  }
}

module attributes {stable_mosaic.version = 11 : i64} {
  func.func @_mlp_kernel(%arg0: i32, %arg1: memref<16x32xbf16, #tpu.memory_space<vmem>>, %arg2: memref<32x64xbf16, #tpu.memory_space<vmem>>, %arg3: memref<1x64xf32, #tpu.memory_space<vmem>>, %arg4: memref<64x32xbf16, #tpu.memory_space<vmem>>, %arg5: memref<1x32xf32, #tpu.memory_space<vmem>>, %arg6: memref<16x32xbf16, #tpu.memory_space<vmem>>, %arg7: memref<1x32xf32, #tpu.memory_space<vmem>>, %arg8: memref<1x32xf32, #tpu.memory_space<vmem>>, %arg9: memref<16x32xbf16, #tpu.memory_space<vmem>>) attributes {dimension_semantics = [#tpu.dimension_semantics<parallel>], iteration_bounds = array<i64: 1>, scalar_prefetch = 0 : i64, scratch_operands = 0 : i64, tpu.core_type = #tpu.core_type<tc>, window_params = [{transform_indices = @transform_0, window_bounds = array<i64: 16, 32>}, {pipeline_mode = #tpu.pipeline_mode<synchronous>, transform_indices = @transform_1, window_bounds = array<i64: 32, 64>}, {pipeline_mode = #tpu.pipeline_mode<synchronous>, transform_indices = @transform_2, window_bounds = array<i64: 1, 64>}, {pipeline_mode = #tpu.pipeline_mode<synchronous>, transform_indices = @transform_3, window_bounds = array<i64: 64, 32>}, {pipeline_mode = #tpu.pipeline_mode<synchronous>, transform_indices = @transform_4, window_bounds = array<i64: 1, 32>}, {transform_indices = @transform_5, window_bounds = array<i64: 16, 32>}, {pipeline_mode = #tpu.pipeline_mode<synchronous>, transform_indices = @transform_6, window_bounds = array<i64: 1, 32>}, {pipeline_mode = #tpu.pipeline_mode<synchronous>, transform_indices = @transform_7, window_bounds = array<i64: 1, 32>}, {transform_indices = @transform_8, window_bounds = array<i64: 16, 32>}]} {
    %c0 = arith.constant 0 : index
    %c0_0 = arith.constant 0 : index
    %0 = vector.load %arg1[%c0, %c0_0] : memref<16x32xbf16, #tpu.memory_space<vmem>>, vector<16x32xbf16>
    %c0_1 = arith.constant 0 : index
    %c0_2 = arith.constant 0 : index
    %1 = vector.load %arg2[%c0_1, %c0_2] : memref<32x64xbf16, #tpu.memory_space<vmem>>, vector<32x64xbf16>
    %cst = arith.constant dense<0.000000e+00> : vector<16x64xf32>
    %2 = tpu.matmul %0, %1, %cst {dimension_numbers = #tpu.dot_dimension_numbers<[1], [0], [0], [1], [0, 0, 1, 1], [], []>} : vector<16x32xbf16>, vector<32x64xbf16>, vector<16x64xf32> -> vector<16x64xf32>
    %c0_3 = arith.constant 0 : index
    %c0_4 = arith.constant 0 : index
    %3 = vector.load %arg3[%c0_3, %c0_4] : memref<1x64xf32, #tpu.memory_space<vmem>>, vector<1x64xf32>
    %4 = vector.broadcast %3 : vector<1x64xf32> to vector<16x64xf32>
    %5 = arith.addf %2, %4 : vector<16x64xf32>
    %cst_5 = arith.constant 0.000000e+00 : f32
    %6 = vector.broadcast %cst_5 : f32 to vector<16x64xf32>
    %7 = arith.maximumf %5, %6 : vector<16x64xf32>
    %8 = arith.truncf %7 : vector<16x64xf32> to vector<16x64xbf16>
    %c0_6 = arith.constant 0 : index
    %c0_7 = arith.constant 0 : index
    %9 = vector.load %arg4[%c0_6, %c0_7] : memref<64x32xbf16, #tpu.memory_space<vmem>>, vector<64x32xbf16>
    %cst_8 = arith.constant dense<0.000000e+00> : vector<16x32xf32>
    %10 = tpu.matmul %8, %9, %cst_8 {dimension_numbers = #tpu.dot_dimension_numbers<[1], [0], [0], [1], [0, 0, 1, 1], [], []>} : vector<16x64xbf16>, vector<64x32xbf16>, vector<16x32xf32> -> vector<16x32xf32>
    %c0_9 = arith.constant 0 : index
    %c0_10 = arith.constant 0 : index
    %11 = vector.load %arg5[%c0_9, %c0_10] : memref<1x32xf32, #tpu.memory_space<vmem>>, vector<1x32xf32>
    %12 = vector.broadcast %11 : vector<1x32xf32> to vector<16x32xf32>
    %13 = arith.addf %10, %12 : vector<16x32xf32>
    %c0_11 = arith.constant 0 : index
    %c0_12 = arith.constant 0 : index
    %14 = vector.load %arg6[%c0_11, %c0_12] : memref<16x32xbf16, #tpu.memory_space<vmem>>, vector<16x32xbf16>
    %15 = arith.extf %14 : vector<16x32xbf16> to vector<16x32xf32>
    %16 = arith.addf %13, %15 : vector<16x32xf32>
    %cst_13 = arith.constant dense<0.000000e+00> : vector<16xf32>
    %17 = vector.multi_reduction <add>, %16, %cst_13 [1] : vector<16x32xf32> to vector<16xf32>
    %18 = vector.shape_cast %17 : vector<16xf32> to vector<16x1xf32>
    %cst_14 = arith.constant 3.200000e+01 : f32
    %19 = vector.broadcast %cst_14 : f32 to vector<16x1xf32>
    %20 = arith.divf %18, %19 : vector<16x1xf32>
    %21 = vector.broadcast %20 : vector<16x1xf32> to vector<16x32xf32>
    %22 = arith.subf %16, %21 : vector<16x32xf32>
    %23 = arith.mulf %22, %22 : vector<16x32xf32>
    %cst_15 = arith.constant dense<0.000000e+00> : vector<16xf32>
    %24 = vector.multi_reduction <add>, %23, %cst_15 [1] : vector<16x32xf32> to vector<16xf32>
    %25 = vector.shape_cast %24 : vector<16xf32> to vector<16x1xf32>
    %cst_16 = arith.constant 3.200000e+01 : f32
    %26 = vector.broadcast %cst_16 : f32 to vector<16x1xf32>
    %27 = arith.divf %25, %26 : vector<16x1xf32>
    %28 = vector.broadcast %20 : vector<16x1xf32> to vector<16x32xf32>
    %29 = arith.subf %16, %28 : vector<16x32xf32>
    %cst_17 = arith.constant 9.99999974E-6 : f32
    %30 = vector.broadcast %cst_17 : f32 to vector<16x1xf32>
    %31 = arith.addf %27, %30 : vector<16x1xf32>
    %32 = math.rsqrt %31 : vector<16x1xf32>
    %33 = vector.broadcast %32 : vector<16x1xf32> to vector<16x32xf32>
    %34 = arith.mulf %29, %33 : vector<16x32xf32>
    %c0_18 = arith.constant 0 : index
    %c0_19 = arith.constant 0 : index
    %35 = vector.load %arg7[%c0_18, %c0_19] : memref<1x32xf32, #tpu.memory_space<vmem>>, vector<1x32xf32>
    %36 = vector.broadcast %35 : vector<1x32xf32> to vector<16x32xf32>
    %37 = arith.mulf %34, %36 : vector<16x32xf32>
    %c0_20 = arith.constant 0 : index
    %c0_21 = arith.constant 0 : index
    %38 = vector.load %arg8[%c0_20, %c0_21] : memref<1x32xf32, #tpu.memory_space<vmem>>, vector<1x32xf32>
    %39 = vector.broadcast %38 : vector<1x32xf32> to vector<16x32xf32>
    %40 = arith.addf %37, %39 : vector<16x32xf32>
    %41 = arith.truncf %40 : vector<16x32xf32> to vector<16x32xbf16>
    %c0_22 = arith.constant 0 : index
    %c0_23 = arith.constant 0 : index
    %42 = vector.load %arg9[%c0_22, %c0_23] : memref<16x32xbf16, #tpu.memory_space<vmem>>, vector<16x32xbf16>
    tpu.vector_store %arg9[%c0_22, %c0_23], %41 {strides = array<i32>} : memref<16x32xbf16, #tpu.memory_space<vmem>>, vector<16x32xbf16>,
    return
  }
  func.func @transform_0(%arg0: i32) -> (i32, i32) {
    %c0_i32 = arith.constant 0 : i32
    %c0_i32_0 = arith.constant 0 : i32
    return %arg0, %c0_i32 : i32, i32
  }
  func.func @transform_1(%arg0: i32) -> (i32, i32) {
    %c0_i32 = arith.constant 0 : i32
    %c0_i32_0 = arith.constant 0 : i32
    %c0_i32_1 = arith.constant 0 : i32
    return %c0_i32, %c0_i32_0 : i32, i32
  }
  func.func @transform_2(%arg0: i32) -> (i32, i32) {
    %c0_i32 = arith.constant 0 : i32
    %c0_i32_0 = arith.constant 0 : i32
    %c0_i32_1 = arith.constant 0 : i32
    return %c0_i32, %c0_i32_0 : i32, i32
  }
  func.func @transform_3(%arg0: i32) -> (i32, i32) {
    %c0_i32 = arith.constant 0 : i32
    %c0_i32_0 = arith.constant 0 : i32
    %c0_i32_1 = arith.constant 0 : i32
    return %c0_i32, %c0_i32_0 : i32, i32
  }
  func.func @transform_4(%arg0: i32) -> (i32, i32) {
    %c0_i32 = arith.constant 0 : i32
    %c0_i32_0 = arith.constant 0 : i32
    %c0_i32_1 = arith.constant 0 : i32
    return %c0_i32, %c0_i32_0 : i32, i32
  }
  func.func @transform_5(%arg0: i32) -> (i32, i32) {
    %c0_i32 = arith.constant 0 : i32
    %c0_i32_0 = arith.constant 0 : i32
    return %arg0, %c0_i32 : i32, i32
  }
  func.func @transform_6(%arg0: i32) -> (i32, i32) {
    %c0_i32 = arith.constant 0 : i32
    %c0_i32_0 = arith.constant 0 : i32
    %c0_i32_1 = arith.constant 0 : i32
    return %c0_i32, %c0_i32_0 : i32, i32
  }
  func.func @transform_7(%arg0: i32) -> (i32, i32) {
    %c0_i32 = arith.constant 0 : i32
    %c0_i32_0 = arith.constant 0 : i32
    %c0_i32_1 = arith.constant 0 : i32
    return %c0_i32, %c0_i32_0 : i32, i32
  }
  func.func @transform_8(%arg0: i32) -> (i32, i32) {
    %c0_i32 = arith.constant 0 : i32
    %c0_i32_0 = arith.constant 0 : i32
    return %arg0, %c0_i32 : i32, i32
  }
}

module attributes {stable_mosaic.version = 11 : i64} {
  func.func @kernel(%arg0: i32, %arg1: memref<16x32xbf16, #tpu.memory_space<vmem>>, %arg2: memref<16x32xbf16, #tpu.memory_space<vmem>>, %arg3: memref<32x16xbf16, #tpu.memory_space<vmem>>, %arg4: memref<1x16xf32, #tpu.memory_space<vmem>>, %arg5: memref<32x16xbf16, #tpu.memory_space<vmem>>, %arg6: memref<1x16xf32, #tpu.memory_space<vmem>>, %arg7: memref<16x16xbf16, #tpu.memory_space<vmem>>, %arg8: memref<16x16xbf16, #tpu.memory_space<vmem>>) attributes {dimension_semantics = [#tpu.dimension_semantics<parallel>], iteration_bounds = array<i64: 1>, scalar_prefetch = 0 : i64, scratch_operands = 0 : i64, tpu.core_type = #tpu.core_type<tc>, window_params = [{transform_indices = @transform_0, window_bounds = array<i64: 16, 32>}, {transform_indices = @transform_1, window_bounds = array<i64: 16, 32>}, {pipeline_mode = #tpu.pipeline_mode<synchronous>, transform_indices = @transform_2, window_bounds = array<i64: 32, 16>}, {pipeline_mode = #tpu.pipeline_mode<synchronous>, transform_indices = @transform_3, window_bounds = array<i64: 1, 16>}, {pipeline_mode = #tpu.pipeline_mode<synchronous>, transform_indices = @transform_4, window_bounds = array<i64: 32, 16>}, {pipeline_mode = #tpu.pipeline_mode<synchronous>, transform_indices = @transform_5, window_bounds = array<i64: 1, 16>}, {transform_indices = @transform_6, window_bounds = array<i64: 16, 16>}, {transform_indices = @transform_7, window_bounds = array<i64: 16, 16>}]} {
    %c0 = arith.constant 0 : index
    %c0_0 = arith.constant 0 : index
    %0 = vector.load %arg1[%c0, %c0_0] : memref<16x32xbf16, #tpu.memory_space<vmem>>, vector<16x32xbf16>
    %c0_1 = arith.constant 0 : index
    %c0_2 = arith.constant 0 : index
    %1 = vector.load %arg2[%c0_1, %c0_2] : memref<16x32xbf16, #tpu.memory_space<vmem>>, vector<16x32xbf16>
    %2 = arith.addf %0, %1 : vector<16x32xbf16>
    %c0_3 = arith.constant 0 : index
    %c0_4 = arith.constant 0 : index
    %3 = vector.load %arg3[%c0_3, %c0_4] : memref<32x16xbf16, #tpu.memory_space<vmem>>, vector<32x16xbf16>
    %cst = arith.constant dense<0.000000e+00> : vector<16x16xf32>
    %4 = tpu.matmul %2, %3, %cst {dimension_numbers = #tpu.dot_dimension_numbers<[1], [0], [0], [1], [0, 0, 1, 1], [], []>} : vector<16x32xbf16>, vector<32x16xbf16>, vector<16x16xf32> -> vector<16x16xf32>
    %c0_5 = arith.constant 0 : index
    %c0_6 = arith.constant 0 : index
    %5 = vector.load %arg4[%c0_5, %c0_6] : memref<1x16xf32, #tpu.memory_space<vmem>>, vector<1x16xf32>
    %6 = vector.broadcast %5 : vector<1x16xf32> to vector<16x16xf32>
    %7 = arith.addf %4, %6 : vector<16x16xf32>
    %c0_7 = arith.constant 0 : index
    %c0_8 = arith.constant 0 : index
    %8 = vector.load %arg5[%c0_7, %c0_8] : memref<32x16xbf16, #tpu.memory_space<vmem>>, vector<32x16xbf16>
    %cst_9 = arith.constant dense<0.000000e+00> : vector<16x16xf32>
    %9 = tpu.matmul %0, %8, %cst_9 {dimension_numbers = #tpu.dot_dimension_numbers<[1], [0], [0], [1], [0, 0, 1, 1], [], []>} : vector<16x32xbf16>, vector<32x16xbf16>, vector<16x16xf32> -> vector<16x16xf32>
    %c0_10 = arith.constant 0 : index
    %c0_11 = arith.constant 0 : index
    %10 = vector.load %arg6[%c0_10, %c0_11] : memref<1x16xf32, #tpu.memory_space<vmem>>, vector<1x16xf32>
    %11 = vector.broadcast %10 : vector<1x16xf32> to vector<16x16xf32>
    %12 = arith.addf %9, %11 : vector<16x16xf32>
    %13 = arith.truncf %7 : vector<16x16xf32> to vector<16x16xbf16>
    %c0_12 = arith.constant 0 : index
    %c0_13 = arith.constant 0 : index
    %14 = vector.load %arg7[%c0_12, %c0_13] : memref<16x16xbf16, #tpu.memory_space<vmem>>, vector<16x16xbf16>
    tpu.vector_store %arg7[%c0_12, %c0_13], %13 {strides = array<i32>} : memref<16x16xbf16, #tpu.memory_space<vmem>>, vector<16x16xbf16>,
    %15 = arith.truncf %12 : vector<16x16xf32> to vector<16x16xbf16>
    %c0_14 = arith.constant 0 : index
    %c0_15 = arith.constant 0 : index
    %16 = vector.load %arg8[%c0_14, %c0_15] : memref<16x16xbf16, #tpu.memory_space<vmem>>, vector<16x16xbf16>
    tpu.vector_store %arg8[%c0_14, %c0_15], %15 {strides = array<i32>} : memref<16x16xbf16, #tpu.memory_space<vmem>>, vector<16x16xbf16>,
    return
  }
  func.func @transform_0(%arg0: i32) -> (i32, i32) {
    %c0_i32 = arith.constant 0 : i32
    %c0_i32_0 = arith.constant 0 : i32
    return %arg0, %c0_i32 : i32, i32
  }
  func.func @transform_1(%arg0: i32) -> (i32, i32) {
    %c0_i32 = arith.constant 0 : i32
    %c0_i32_0 = arith.constant 0 : i32
    return %arg0, %c0_i32 : i32, i32
  }
  func.func @transform_2(%arg0: i32) -> (i32, i32) {
    %c0_i32 = arith.constant 0 : i32
    %c0_i32_0 = arith.constant 0 : i32
    %c0_i32_1 = arith.constant 0 : i32
    return %c0_i32, %c0_i32_0 : i32, i32
  }
  func.func @transform_3(%arg0: i32) -> (i32, i32) {
    %c0_i32 = arith.constant 0 : i32
    %c0_i32_0 = arith.constant 0 : i32
    %c0_i32_1 = arith.constant 0 : i32
    return %c0_i32, %c0_i32_0 : i32, i32
  }
  func.func @transform_4(%arg0: i32) -> (i32, i32) {
    %c0_i32 = arith.constant 0 : i32
    %c0_i32_0 = arith.constant 0 : i32
    %c0_i32_1 = arith.constant 0 : i32
    return %c0_i32, %c0_i32_0 : i32, i32
  }
  func.func @transform_5(%arg0: i32) -> (i32, i32) {
    %c0_i32 = arith.constant 0 : i32
    %c0_i32_0 = arith.constant 0 : i32
    %c0_i32_1 = arith.constant 0 : i32
    return %c0_i32, %c0_i32_0 : i32, i32
  }
  func.func @transform_6(%arg0: i32) -> (i32, i32) {
    %c0_i32 = arith.constant 0 : i32
    %c0_i32_0 = arith.constant 0 : i32
    return %arg0, %c0_i32 : i32, i32
  }
  func.func @transform_7(%arg0: i32) -> (i32, i32) {
    %c0_i32 = arith.constant 0 : i32
    %c0_i32_0 = arith.constant 0 : i32
    return %arg0, %c0_i32 : i32, i32
  }
}

module attributes {stable_mosaic.version = 11 : i64} {
  func.func @kernel(%arg0: i32, %arg1: memref<16x32xbf16, #tpu.memory_space<vmem>>, %arg2: memref<32x32xbf16, #tpu.memory_space<vmem>>, %arg3: memref<1x32xf32, #tpu.memory_space<vmem>>, %arg4: memref<16x32xbf16, #tpu.memory_space<vmem>>, %arg5: memref<1x32xf32, #tpu.memory_space<vmem>>, %arg6: memref<1x32xf32, #tpu.memory_space<vmem>>, %arg7: memref<16x32xbf16, #tpu.memory_space<vmem>>) attributes {dimension_semantics = [#tpu.dimension_semantics<parallel>], iteration_bounds = array<i64: 1>, scalar_prefetch = 0 : i64, scratch_operands = 0 : i64, tpu.core_type = #tpu.core_type<tc>, window_params = [{transform_indices = @transform_0, window_bounds = array<i64: 16, 32>}, {pipeline_mode = #tpu.pipeline_mode<synchronous>, transform_indices = @transform_1, window_bounds = array<i64: 32, 32>}, {pipeline_mode = #tpu.pipeline_mode<synchronous>, transform_indices = @transform_2, window_bounds = array<i64: 1, 32>}, {transform_indices = @transform_3, window_bounds = array<i64: 16, 32>}, {pipeline_mode = #tpu.pipeline_mode<synchronous>, transform_indices = @transform_4, window_bounds = array<i64: 1, 32>}, {pipeline_mode = #tpu.pipeline_mode<synchronous>, transform_indices = @transform_5, window_bounds = array<i64: 1, 32>}, {transform_indices = @transform_6, window_bounds = array<i64: 16, 32>}]} {
    %c0 = arith.constant 0 : index
    %c0_0 = arith.constant 0 : index
    %0 = vector.load %arg1[%c0, %c0_0] : memref<16x32xbf16, #tpu.memory_space<vmem>>, vector<16x32xbf16>
    %c0_1 = arith.constant 0 : index
    %c0_2 = arith.constant 0 : index
    %1 = vector.load %arg2[%c0_1, %c0_2] : memref<32x32xbf16, #tpu.memory_space<vmem>>, vector<32x32xbf16>
    %cst = arith.constant dense<0.000000e+00> : vector<16x32xf32>
    %2 = tpu.matmul %0, %1, %cst {dimension_numbers = #tpu.dot_dimension_numbers<[1], [0], [0], [1], [0, 0, 1, 1], [], []>} : vector<16x32xbf16>, vector<32x32xbf16>, vector<16x32xf32> -> vector<16x32xf32>
    %c0_3 = arith.constant 0 : index
    %c0_4 = arith.constant 0 : index
    %3 = vector.load %arg3[%c0_3, %c0_4] : memref<1x32xf32, #tpu.memory_space<vmem>>, vector<1x32xf32>
    %4 = vector.broadcast %3 : vector<1x32xf32> to vector<16x32xf32>
    %5 = arith.addf %2, %4 : vector<16x32xf32>
    %c0_5 = arith.constant 0 : index
    %c0_6 = arith.constant 0 : index
    %6 = vector.load %arg4[%c0_5, %c0_6] : memref<16x32xbf16, #tpu.memory_space<vmem>>, vector<16x32xbf16>
    %7 = arith.extf %6 : vector<16x32xbf16> to vector<16x32xf32>
    %8 = arith.addf %5, %7 : vector<16x32xf32>
    %cst_7 = arith.constant dense<0.000000e+00> : vector<16xf32>
    %9 = vector.multi_reduction <add>, %8, %cst_7 [1] : vector<16x32xf32> to vector<16xf32>
    %10 = vector.shape_cast %9 : vector<16xf32> to vector<16x1xf32>
    %cst_8 = arith.constant 3.200000e+01 : f32
    %11 = vector.broadcast %cst_8 : f32 to vector<16x1xf32>
    %12 = arith.divf %10, %11 : vector<16x1xf32>
    %13 = vector.broadcast %12 : vector<16x1xf32> to vector<16x32xf32>
    %14 = arith.subf %8, %13 : vector<16x32xf32>
    %15 = arith.mulf %14, %14 : vector<16x32xf32>
    %cst_9 = arith.constant dense<0.000000e+00> : vector<16xf32>
    %16 = vector.multi_reduction <add>, %15, %cst_9 [1] : vector<16x32xf32> to vector<16xf32>
    %17 = vector.shape_cast %16 : vector<16xf32> to vector<16x1xf32>
    %cst_10 = arith.constant 3.200000e+01 : f32
    %18 = vector.broadcast %cst_10 : f32 to vector<16x1xf32>
    %19 = arith.divf %17, %18 : vector<16x1xf32>
    %20 = vector.broadcast %12 : vector<16x1xf32> to vector<16x32xf32>
    %21 = arith.subf %8, %20 : vector<16x32xf32>
    %cst_11 = arith.constant 9.99999974E-6 : f32
    %22 = vector.broadcast %cst_11 : f32 to vector<16x1xf32>
    %23 = arith.addf %19, %22 : vector<16x1xf32>
    %24 = math.rsqrt %23 : vector<16x1xf32>
    %25 = vector.broadcast %24 : vector<16x1xf32> to vector<16x32xf32>
    %26 = arith.mulf %21, %25 : vector<16x32xf32>
    %c0_12 = arith.constant 0 : index
    %c0_13 = arith.constant 0 : index
    %27 = vector.load %arg5[%c0_12, %c0_13] : memref<1x32xf32, #tpu.memory_space<vmem>>, vector<1x32xf32>
    %28 = vector.broadcast %27 : vector<1x32xf32> to vector<16x32xf32>
    %29 = arith.mulf %26, %28 : vector<16x32xf32>
    %c0_14 = arith.constant 0 : index
    %c0_15 = arith.constant 0 : index
    %30 = vector.load %arg6[%c0_14, %c0_15] : memref<1x32xf32, #tpu.memory_space<vmem>>, vector<1x32xf32>
    %31 = vector.broadcast %30 : vector<1x32xf32> to vector<16x32xf32>
    %32 = arith.addf %29, %31 : vector<16x32xf32>
    %33 = arith.truncf %32 : vector<16x32xf32> to vector<16x32xbf16>
    %c0_16 = arith.constant 0 : index
    %c0_17 = arith.constant 0 : index
    %34 = vector.load %arg7[%c0_16, %c0_17] : memref<16x32xbf16, #tpu.memory_space<vmem>>, vector<16x32xbf16>
    tpu.vector_store %arg7[%c0_16, %c0_17], %33 {strides = array<i32>} : memref<16x32xbf16, #tpu.memory_space<vmem>>, vector<16x32xbf16>,
    return
  }
  func.func @transform_0(%arg0: i32) -> (i32, i32) {
    %c0_i32 = arith.constant 0 : i32
    %c0_i32_0 = arith.constant 0 : i32
    return %arg0, %c0_i32 : i32, i32
  }
  func.func @transform_1(%arg0: i32) -> (i32, i32) {
    %c0_i32 = arith.constant 0 : i32
    %c0_i32_0 = arith.constant 0 : i32
    %c0_i32_1 = arith.constant 0 : i32
    return %c0_i32, %c0_i32_0 : i32, i32
  }
  func.func @transform_2(%arg0: i32) -> (i32, i32) {
    %c0_i32 = arith.constant 0 : i32
    %c0_i32_0 = arith.constant 0 : i32
    %c0_i32_1 = arith.constant 0 : i32
    return %c0_i32, %c0_i32_0 : i32, i32
  }
  func.func @transform_3(%arg0: i32) -> (i32, i32) {
    %c0_i32 = arith.constant 0 : i32
    %c0_i32_0 = arith.constant 0 : i32
    return %arg0, %c0_i32 : i32, i32
  }
  func.func @transform_4(%arg0: i32) -> (i32, i32) {
    %c0_i32 = arith.constant 0 : i32
    %c0_i32_0 = arith.constant 0 : i32
    %c0_i32_1 = arith.constant 0 : i32
    return %c0_i32, %c0_i32_0 : i32, i32
  }
  func.func @transform_5(%arg0: i32) -> (i32, i32) {
    %c0_i32 = arith.constant 0 : i32
    %c0_i32_0 = arith.constant 0 : i32
    %c0_i32_1 = arith.constant 0 : i32
    return %c0_i32, %c0_i32_0 : i32, i32
  }
  func.func @transform_6(%arg0: i32) -> (i32, i32) {
    %c0_i32 = arith.constant 0 : i32
    %c0_i32_0 = arith.constant 0 : i32
    return %arg0, %c0_i32 : i32, i32
  }
}

module attributes {stable_mosaic.version = 11 : i64} {
  func.func @kernel(%arg0: i32, %arg1: memref<16x32xbf16, #tpu.memory_space<vmem>>, %arg2: memref<16x32xbf16, #tpu.memory_space<vmem>>, %arg3: memref<32x32xbf16, #tpu.memory_space<vmem>>, %arg4: memref<1x32xf32, #tpu.memory_space<vmem>>, %arg5: memref<32x32xbf16, #tpu.memory_space<vmem>>, %arg6: memref<1x32xf32, #tpu.memory_space<vmem>>, %arg7: memref<32x32xbf16, #tpu.memory_space<vmem>>, %arg8: memref<1x32xf32, #tpu.memory_space<vmem>>, %arg9: memref<16x32xbf16, #tpu.memory_space<vmem>>, %arg10: memref<16x32xbf16, #tpu.memory_space<vmem>>, %arg11: memref<16x32xbf16, #tpu.memory_space<vmem>>) attributes {dimension_semantics = [#tpu.dimension_semantics<parallel>], iteration_bounds = array<i64: 1>, scalar_prefetch = 0 : i64, scratch_operands = 0 : i64, tpu.core_type = #tpu.core_type<tc>, window_params = [{transform_indices = @transform_0, window_bounds = array<i64: 16, 32>}, {transform_indices = @transform_1, window_bounds = array<i64: 16, 32>}, {pipeline_mode = #tpu.pipeline_mode<synchronous>, transform_indices = @transform_2, window_bounds = array<i64: 32, 32>}, {pipeline_mode = #tpu.pipeline_mode<synchronous>, transform_indices = @transform_3, window_bounds = array<i64: 1, 32>}, {pipeline_mode = #tpu.pipeline_mode<synchronous>, transform_indices = @transform_4, window_bounds = array<i64: 32, 32>}, {pipeline_mode = #tpu.pipeline_mode<synchronous>, transform_indices = @transform_5, window_bounds = array<i64: 1, 32>}, {pipeline_mode = #tpu.pipeline_mode<synchronous>, transform_indices = @transform_6, window_bounds = array<i64: 32, 32>}, {pipeline_mode = #tpu.pipeline_mode<synchronous>, transform_indices = @transform_7, window_bounds = array<i64: 1, 32>}, {transform_indices = @transform_8, window_bounds = array<i64: 16, 32>}, {transform_indices = @transform_9, window_bounds = array<i64: 16, 32>}, {transform_indices = @transform_10, window_bounds = array<i64: 16, 32>}]} {
    %c0 = arith.constant 0 : index
    %c0_0 = arith.constant 0 : index
    %0 = vector.load %arg1[%c0, %c0_0] : memref<16x32xbf16, #tpu.memory_space<vmem>>, vector<16x32xbf16>
    %c0_1 = arith.constant 0 : index
    %c0_2 = arith.constant 0 : index
    %1 = vector.load %arg2[%c0_1, %c0_2] : memref<16x32xbf16, #tpu.memory_space<vmem>>, vector<16x32xbf16>
    %2 = arith.addf %0, %1 : vector<16x32xbf16>
    %c0_3 = arith.constant 0 : index
    %c0_4 = arith.constant 0 : index
    %3 = vector.load %arg3[%c0_3, %c0_4] : memref<32x32xbf16, #tpu.memory_space<vmem>>, vector<32x32xbf16>
    %cst = arith.constant dense<0.000000e+00> : vector<16x32xf32>
    %4 = tpu.matmul %2, %3, %cst {dimension_numbers = #tpu.dot_dimension_numbers<[1], [0], [0], [1], [0, 0, 1, 1], [], []>} : vector<16x32xbf16>, vector<32x32xbf16>, vector<16x32xf32> -> vector<16x32xf32>
    %c0_5 = arith.constant 0 : index
    %c0_6 = arith.constant 0 : index
    %5 = vector.load %arg4[%c0_5, %c0_6] : memref<1x32xf32, #tpu.memory_space<vmem>>, vector<1x32xf32>
    %6 = vector.broadcast %5 : vector<1x32xf32> to vector<16x32xf32>
    %7 = arith.addf %4, %6 : vector<16x32xf32>
    %c0_7 = arith.constant 0 : index
    %c0_8 = arith.constant 0 : index
    %8 = vector.load %arg5[%c0_7, %c0_8] : memref<32x32xbf16, #tpu.memory_space<vmem>>, vector<32x32xbf16>
    %cst_9 = arith.constant dense<0.000000e+00> : vector<16x32xf32>
    %9 = tpu.matmul %2, %8, %cst_9 {dimension_numbers = #tpu.dot_dimension_numbers<[1], [0], [0], [1], [0, 0, 1, 1], [], []>} : vector<16x32xbf16>, vector<32x32xbf16>, vector<16x32xf32> -> vector<16x32xf32>
    %c0_10 = arith.constant 0 : index
    %c0_11 = arith.constant 0 : index
    %10 = vector.load %arg6[%c0_10, %c0_11] : memref<1x32xf32, #tpu.memory_space<vmem>>, vector<1x32xf32>
    %11 = vector.broadcast %10 : vector<1x32xf32> to vector<16x32xf32>
    %12 = arith.addf %9, %11 : vector<16x32xf32>
    %c0_12 = arith.constant 0 : index
    %c0_13 = arith.constant 0 : index
    %13 = vector.load %arg7[%c0_12, %c0_13] : memref<32x32xbf16, #tpu.memory_space<vmem>>, vector<32x32xbf16>
    %cst_14 = arith.constant dense<0.000000e+00> : vector<16x32xf32>
    %14 = tpu.matmul %0, %13, %cst_14 {dimension_numbers = #tpu.dot_dimension_numbers<[1], [0], [0], [1], [0, 0, 1, 1], [], []>} : vector<16x32xbf16>, vector<32x32xbf16>, vector<16x32xf32> -> vector<16x32xf32>
    %c0_15 = arith.constant 0 : index
    %c0_16 = arith.constant 0 : index
    %15 = vector.load %arg8[%c0_15, %c0_16] : memref<1x32xf32, #tpu.memory_space<vmem>>, vector<1x32xf32>
    %16 = vector.broadcast %15 : vector<1x32xf32> to vector<16x32xf32>
    %17 = arith.addf %14, %16 : vector<16x32xf32>
    %18 = arith.truncf %7 : vector<16x32xf32> to vector<16x32xbf16>
    %c0_17 = arith.constant 0 : index
    %c0_18 = arith.constant 0 : index
    %19 = vector.load %arg9[%c0_17, %c0_18] : memref<16x32xbf16, #tpu.memory_space<vmem>>, vector<16x32xbf16>
    tpu.vector_store %arg9[%c0_17, %c0_18], %18 {strides = array<i32>} : memref<16x32xbf16, #tpu.memory_space<vmem>>, vector<16x32xbf16>,
    %20 = arith.truncf %12 : vector<16x32xf32> to vector<16x32xbf16>
    %c0_19 = arith.constant 0 : index
    %c0_20 = arith.constant 0 : index
    %21 = vector.load %arg10[%c0_19, %c0_20] : memref<16x32xbf16, #tpu.memory_space<vmem>>, vector<16x32xbf16>
    tpu.vector_store %arg10[%c0_19, %c0_20], %20 {strides = array<i32>} : memref<16x32xbf16, #tpu.memory_space<vmem>>, vector<16x32xbf16>,
    %22 = arith.truncf %17 : vector<16x32xf32> to vector<16x32xbf16>
    %c0_21 = arith.constant 0 : index
    %c0_22 = arith.constant 0 : index
    %23 = vector.load %arg11[%c0_21, %c0_22] : memref<16x32xbf16, #tpu.memory_space<vmem>>, vector<16x32xbf16>
    tpu.vector_store %arg11[%c0_21, %c0_22], %22 {strides = array<i32>} : memref<16x32xbf16, #tpu.memory_space<vmem>>, vector<16x32xbf16>,
    return
  }
  func.func @transform_0(%arg0: i32) -> (i32, i32) {
    %c0_i32 = arith.constant 0 : i32
    %c0_i32_0 = arith.constant 0 : i32
    return %arg0, %c0_i32 : i32, i32
  }
  func.func @transform_1(%arg0: i32) -> (i32, i32) {
    %c0_i32 = arith.constant 0 : i32
    %c0_i32_0 = arith.constant 0 : i32
    return %arg0, %c0_i32 : i32, i32
  }
  func.func @transform_2(%arg0: i32) -> (i32, i32) {
    %c0_i32 = arith.constant 0 : i32
    %c0_i32_0 = arith.constant 0 : i32
    %c0_i32_1 = arith.constant 0 : i32
    return %c0_i32, %c0_i32_0 : i32, i32
  }
  func.func @transform_3(%arg0: i32) -> (i32, i32) {
    %c0_i32 = arith.constant 0 : i32
    %c0_i32_0 = arith.constant 0 : i32
    %c0_i32_1 = arith.constant 0 : i32
    return %c0_i32, %c0_i32_0 : i32, i32
  }
  func.func @transform_4(%arg0: i32) -> (i32, i32) {
    %c0_i32 = arith.constant 0 : i32
    %c0_i32_0 = arith.constant 0 : i32
    %c0_i32_1 = arith.constant 0 : i32
    return %c0_i32, %c0_i32_0 : i32, i32
  }
  func.func @transform_5(%arg0: i32) -> (i32, i32) {
    %c0_i32 = arith.constant 0 : i32
    %c0_i32_0 = arith.constant 0 : i32
    %c0_i32_1 = arith.constant 0 : i32
    return %c0_i32, %c0_i32_0 : i32, i32
  }
  func.func @transform_6(%arg0: i32) -> (i32, i32) {
    %c0_i32 = arith.constant 0 : i32
    %c0_i32_0 = arith.constant 0 : i32
    %c0_i32_1 = arith.constant 0 : i32
    return %c0_i32, %c0_i32_0 : i32, i32
  }
  func.func @transform_7(%arg0: i32) -> (i32, i32) {
    %c0_i32 = arith.constant 0 : i32
    %c0_i32_0 = arith.constant 0 : i32
    %c0_i32_1 = arith.constant 0 : i32
    return %c0_i32, %c0_i32_0 : i32, i32
  }
  func.func @transform_8(%arg0: i32) -> (i32, i32) {
    %c0_i32 = arith.constant 0 : i32
    %c0_i32_0 = arith.constant 0 : i32
    return %arg0, %c0_i32 : i32, i32
  }
  func.func @transform_9(%arg0: i32) -> (i32, i32) {
    %c0_i32 = arith.constant 0 : i32
    %c0_i32_0 = arith.constant 0 : i32
    return %arg0, %c0_i32 : i32, i32
  }
  func.func @transform_10(%arg0: i32) -> (i32, i32) {
    %c0_i32 = arith.constant 0 : i32
    %c0_i32_0 = arith.constant 0 : i32
    return %arg0, %c0_i32 : i32, i32
  }
}

module attributes {stable_mosaic.version = 11 : i64} {
  func.func @kernel(%arg0: i32, %arg1: memref<32x32xbf16, #tpu.memory_space<vmem>>, %arg2: memref<32x32xbf16, #tpu.memory_space<vmem>>, %arg3: memref<32x16xbf16, #tpu.memory_space<vmem>>, %arg4: memref<1x16xf32, #tpu.memory_space<vmem>>, %arg5: memref<32x16xbf16, #tpu.memory_space<vmem>>) attributes {dimension_semantics = [#tpu.dimension_semantics<parallel>], iteration_bounds = array<i64: 1>, scalar_prefetch = 0 : i64, scratch_operands = 0 : i64, tpu.core_type = #tpu.core_type<tc>, window_params = [{transform_indices = @transform_0, window_bounds = array<i64: 32, 32>}, {transform_indices = @transform_1, window_bounds = array<i64: 32, 32>}, {pipeline_mode = #tpu.pipeline_mode<synchronous>, transform_indices = @transform_2, window_bounds = array<i64: 32, 16>}, {pipeline_mode = #tpu.pipeline_mode<synchronous>, transform_indices = @transform_3, window_bounds = array<i64: 1, 16>}, {transform_indices = @transform_4, window_bounds = array<i64: 32, 16>}]} {
    %c0 = arith.constant 0 : index
    %c0_0 = arith.constant 0 : index
    %0 = vector.load %arg1[%c0, %c0_0] : memref<32x32xbf16, #tpu.memory_space<vmem>>, vector<32x32xbf16>
    %c0_1 = arith.constant 0 : index
    %c0_2 = arith.constant 0 : index
    %1 = vector.load %arg2[%c0_1, %c0_2] : memref<32x32xbf16, #tpu.memory_space<vmem>>, vector<32x32xbf16>
    %2 = arith.addf %0, %1 : vector<32x32xbf16>
    %c0_3 = arith.constant 0 : index
    %c0_4 = arith.constant 0 : index
    %3 = vector.load %arg3[%c0_3, %c0_4] : memref<32x16xbf16, #tpu.memory_space<vmem>>, vector<32x16xbf16>
    %cst = arith.constant dense<0.000000e+00> : vector<32x16xf32>
    %4 = tpu.matmul %2, %3, %cst {dimension_numbers = #tpu.dot_dimension_numbers<[1], [0], [0], [1], [0, 0, 1, 1], [], []>} : vector<32x32xbf16>, vector<32x16xbf16>, vector<32x16xf32> -> vector<32x16xf32>
    %c0_5 = arith.constant 0 : index
    %c0_6 = arith.constant 0 : index
    %5 = vector.load %arg4[%c0_5, %c0_6] : memref<1x16xf32, #tpu.memory_space<vmem>>, vector<1x16xf32>
    %6 = vector.broadcast %5 : vector<1x16xf32> to vector<32x16xf32>
    %7 = arith.addf %4, %6 : vector<32x16xf32>
    %8 = arith.truncf %7 : vector<32x16xf32> to vector<32x16xbf16>
    %c0_7 = arith.constant 0 : index
    %c0_8 = arith.constant 0 : index
    %9 = vector.load %arg5[%c0_7, %c0_8] : memref<32x16xbf16, #tpu.memory_space<vmem>>, vector<32x16xbf16>
    tpu.vector_store %arg5[%c0_7, %c0_8], %8 {strides = array<i32>} : memref<32x16xbf16, #tpu.memory_space<vmem>>, vector<32x16xbf16>,
    return
  }
  func.func @transform_0(%arg0: i32) -> (i32, i32) {
    %c0_i32 = arith.constant 0 : i32
    %c0_i32_0 = arith.constant 0 : i32
    return %arg0, %c0_i32 : i32, i32
  }
  func.func @transform_1(%arg0: i32) -> (i32, i32) {
    %c0_i32 = arith.constant 0 : i32
    %c0_i32_0 = arith.constant 0 : i32
    return %arg0, %c0_i32 : i32, i32
  }
  func.func @transform_2(%arg0: i32) -> (i32, i32) {
    %c0_i32 = arith.constant 0 : i32
    %c0_i32_0 = arith.constant 0 : i32
    %c0_i32_1 = arith.constant 0 : i32
    return %c0_i32, %c0_i32_0 : i32, i32
  }
  func.func @transform_3(%arg0: i32) -> (i32, i32) {
    %c0_i32 = arith.constant 0 : i32
    %c0_i32_0 = arith.constant 0 : i32
    %c0_i32_1 = arith.constant 0 : i32
    return %c0_i32, %c0_i32_0 : i32, i32
  }
  func.func @transform_4(%arg0: i32) -> (i32, i32) {
    %c0_i32 = arith.constant 0 : i32
    %c0_i32_0 = arith.constant 0 : i32
    return %arg0, %c0_i32 : i32, i32
  }
}

module attributes {stable_mosaic.version = 11 : i64} {
  func.func @_attn_core_kernel(%arg0: i32, %arg1: i32, %arg2: memref<1x16x16xbf16, #tpu.memory_space<vmem>>, %arg3: memref<1x8x16xbf16, #tpu.memory_space<vmem>>, %arg4: memref<1x8x16xbf16, #tpu.memory_space<vmem>>, %arg5: memref<1x16x16xbf16, #tpu.memory_space<vmem>>) attributes {dimension_semantics = [#tpu.dimension_semantics<parallel>, #tpu.dimension_semantics<parallel>], iteration_bounds = array<i64: 2, 1>, scalar_prefetch = 0 : i64, scratch_operands = 0 : i64, tpu.core_type = #tpu.core_type<tc>, window_params = [{transform_indices = @transform_0, window_bounds = array<i64: 1, 16, 16>}, {transform_indices = @transform_1, window_bounds = array<i64: 1, 8, 16>}, {transform_indices = @transform_2, window_bounds = array<i64: 1, 8, 16>}, {transform_indices = @transform_3, window_bounds = array<i64: 1, 16, 16>}]} {
    %c0 = arith.constant 0 : index
    %c0_0 = arith.constant 0 : index
    %c0_1 = arith.constant 0 : index
    %0 = vector.load %arg2[%c0, %c0_0, %c0_1] : memref<1x16x16xbf16, #tpu.memory_space<vmem>>, vector<1x16x16xbf16>
    %1 = vector.shape_cast %0 : vector<1x16x16xbf16> to vector<16x16xbf16>
    %c0_2 = arith.constant 0 : index
    %c0_3 = arith.constant 0 : index
    %c0_4 = arith.constant 0 : index
    %2 = vector.load %arg3[%c0_2, %c0_3, %c0_4] : memref<1x8x16xbf16, #tpu.memory_space<vmem>>, vector<1x8x16xbf16>
    %3 = vector.shape_cast %2 : vector<1x8x16xbf16> to vector<8x16xbf16>
    %c0_5 = arith.constant 0 : index
    %c0_6 = arith.constant 0 : index
    %c0_7 = arith.constant 0 : index
    %4 = vector.load %arg4[%c0_5, %c0_6, %c0_7] : memref<1x8x16xbf16, #tpu.memory_space<vmem>>, vector<1x8x16xbf16>
    %5 = vector.shape_cast %4 : vector<1x8x16xbf16> to vector<8x16xbf16>
    %6 = vector.extract_strided_slice %1 {offsets = [0, 0], sizes = [16, 8], strides = [1, 1]} : vector<16x16xbf16> to vector<16x8xbf16>
    %7 = vector.extract_strided_slice %3 {offsets = [0, 0], sizes = [8, 8], strides = [1, 1]} : vector<8x16xbf16> to vector<8x8xbf16>
    %8 = vector.extract_strided_slice %5 {offsets = [0, 0], sizes = [8, 8], strides = [1, 1]} : vector<8x16xbf16> to vector<8x8xbf16>
    %cst = arith.constant dense<0.000000e+00> : vector<16x8xf32>
    %9 = tpu.matmul %6, %7, %cst {dimension_numbers = #tpu.dot_dimension_numbers<[1], [1], [0], [0], [0, 0, 1, 0], [], []>} : vector<16x8xbf16>, vector<8x8xbf16>, vector<16x8xf32> -> vector<16x8xf32>
    %cst_8 = arith.constant dense<0xFF800000> : vector<16xf32>
    %10 = vector.multi_reduction <maximumf>, %9, %cst_8 [1] : vector<16x8xf32> to vector<16xf32>
    %11 = vector.shape_cast %10 : vector<16xf32> to vector<16x1xf32>
    %12 = vector.broadcast %11 : vector<16x1xf32> to vector<16x8xf32>
    %13 = arith.subf %9, %12 : vector<16x8xf32>
    %14 = math.exp %13 : vector<16x8xf32>
    %cst_9 = arith.constant dense<0.000000e+00> : vector<16xf32>
    %15 = vector.multi_reduction <add>, %14, %cst_9 [1] : vector<16x8xf32> to vector<16xf32>
    %16 = vector.shape_cast %15 : vector<16xf32> to vector<16x1xf32>
    %17 = tpu.reciprocal %16 {approx = true} : vector<16x1xf32> -> vector<16x1xf32>
    %18 = vector.broadcast %17 : vector<16x1xf32> to vector<16x8xf32>
    %19 = arith.mulf %14, %18 : vector<16x8xf32>
    %20 = arith.truncf %19 : vector<16x8xf32> to vector<16x8xbf16>
    %cst_10 = arith.constant dense<0.000000e+00> : vector<16x8xf32>
    %21 = tpu.matmul %20, %8, %cst_10 {dimension_numbers = #tpu.dot_dimension_numbers<[1], [0], [0], [1], [0, 0, 1, 1], [], []>} : vector<16x8xbf16>, vector<8x8xbf16>, vector<16x8xf32> -> vector<16x8xf32>
    %22 = vector.extract_strided_slice %1 {offsets = [0, 8], sizes = [16, 8], strides = [1, 1]} : vector<16x16xbf16> to vector<16x8xbf16>
    %23 = vector.extract_strided_slice %3 {offsets = [0, 8], sizes = [8, 8], strides = [1, 1]} : vector<8x16xbf16> to vector<8x8xbf16>
    %24 = vector.extract_strided_slice %5 {offsets = [0, 8], sizes = [8, 8], strides = [1, 1]} : vector<8x16xbf16> to vector<8x8xbf16>
    %cst_11 = arith.constant dense<0.000000e+00> : vector<16x8xf32>
    %25 = tpu.matmul %22, %23, %cst_11 {dimension_numbers = #tpu.dot_dimension_numbers<[1], [1], [0], [0], [0, 0, 1, 0], [], []>} : vector<16x8xbf16>, vector<8x8xbf16>, vector<16x8xf32> -> vector<16x8xf32>
    %cst_12 = arith.constant dense<0xFF800000> : vector<16xf32>
    %26 = vector.multi_reduction <maximumf>, %25, %cst_12 [1] : vector<16x8xf32> to vector<16xf32>
    %27 = vector.shape_cast %26 : vector<16xf32> to vector<16x1xf32>
    %28 = vector.broadcast %27 : vector<16x1xf32> to vector<16x8xf32>
    %29 = arith.subf %25, %28 : vector<16x8xf32>
    %30 = math.exp %29 : vector<16x8xf32>
    %cst_13 = arith.constant dense<0.000000e+00> : vector<16xf32>
    %31 = vector.multi_reduction <add>, %30, %cst_13 [1] : vector<16x8xf32> to vector<16xf32>
    %32 = vector.shape_cast %31 : vector<16xf32> to vector<16x1xf32>
    %33 = tpu.reciprocal %32 {approx = true} : vector<16x1xf32> -> vector<16x1xf32>
    %34 = vector.broadcast %33 : vector<16x1xf32> to vector<16x8xf32>
    %35 = arith.mulf %30, %34 : vector<16x8xf32>
    %36 = arith.truncf %35 : vector<16x8xf32> to vector<16x8xbf16>
    %cst_14 = arith.constant dense<0.000000e+00> : vector<16x8xf32>
    %37 = tpu.matmul %36, %24, %cst_14 {dimension_numbers = #tpu.dot_dimension_numbers<[1], [0], [0], [1], [0, 0, 1, 1], [], []>} : vector<16x8xbf16>, vector<8x8xbf16>, vector<16x8xf32> -> vector<16x8xf32>
    %38 = tpu.concatenate %21, %37 in 1 : vector<16x8xf32>, vector<16x8xf32> -> vector<16x16xf32>
    %39 = arith.truncf %38 : vector<16x16xf32> to vector<16x16xbf16>
    %c0_15 = arith.constant 0 : index
    %c0_16 = arith.constant 0 : index
    %c0_17 = arith.constant 0 : index
    %40 = vector.load %arg5[%c0_15, %c0_16, %c0_17] : memref<1x16x16xbf16, #tpu.memory_space<vmem>>, vector<1x16x16xbf16>
    %41 = vector.shape_cast %40 : vector<1x16x16xbf16> to vector<16x16xbf16>
    %42 = vector.shape_cast %39 : vector<16x16xbf16> to vector<1x16x16xbf16>
    tpu.vector_store %arg5[%c0_15, %c0_16, %c0_17], %42 {strides = array<i32>} : memref<1x16x16xbf16, #tpu.memory_space<vmem>>, vector<1x16x16xbf16>,
    return
  }
  func.func @transform_0(%arg0: i32, %arg1: i32) -> (i32, i32, i32) {
    %c0_i32 = arith.constant 0 : i32
    %c0_i32_0 = arith.constant 0 : i32
    return %arg0, %arg1, %c0_i32 : i32, i32, i32
  }
  func.func @transform_1(%arg0: i32, %arg1: i32) -> (i32, i32, i32) {
    %c0_i32 = arith.constant 0 : i32
    %c0_i32_0 = arith.constant 0 : i32
    %c0_i32_1 = arith.constant 0 : i32
    return %arg0, %c0_i32, %c0_i32_0 : i32, i32, i32
  }
  func.func @transform_2(%arg0: i32, %arg1: i32) -> (i32, i32, i32) {
    %c0_i32 = arith.constant 0 : i32
    %c0_i32_0 = arith.constant 0 : i32
    %c0_i32_1 = arith.constant 0 : i32
    return %arg0, %c0_i32, %c0_i32_0 : i32, i32, i32
  }
  func.func @transform_3(%arg0: i32, %arg1: i32) -> (i32, i32, i32) {
    %c0_i32 = arith.constant 0 : i32
    %c0_i32_0 = arith.constant 0 : i32
    return %arg0, %arg1, %c0_i32 : i32, i32, i32
  }
}

module attributes {stable_mosaic.version = 11 : i64} {
  func.func @kernel(%arg0: i32, %arg1: memref<32x16xbf16, #tpu.memory_space<vmem>>, %arg2: memref<16x32xbf16, #tpu.memory_space<vmem>>, %arg3: memref<1x32xf32, #tpu.memory_space<vmem>>, %arg4: memref<32x32xbf16, #tpu.memory_space<vmem>>, %arg5: memref<1x32xf32, #tpu.memory_space<vmem>>, %arg6: memref<1x32xf32, #tpu.memory_space<vmem>>, %arg7: memref<32x32xbf16, #tpu.memory_space<vmem>>) attributes {dimension_semantics = [#tpu.dimension_semantics<parallel>], iteration_bounds = array<i64: 1>, scalar_prefetch = 0 : i64, scratch_operands = 0 : i64, tpu.core_type = #tpu.core_type<tc>, window_params = [{transform_indices = @transform_0, window_bounds = array<i64: 32, 16>}, {pipeline_mode = #tpu.pipeline_mode<synchronous>, transform_indices = @transform_1, window_bounds = array<i64: 16, 32>}, {pipeline_mode = #tpu.pipeline_mode<synchronous>, transform_indices = @transform_2, window_bounds = array<i64: 1, 32>}, {transform_indices = @transform_3, window_bounds = array<i64: 32, 32>}, {pipeline_mode = #tpu.pipeline_mode<synchronous>, transform_indices = @transform_4, window_bounds = array<i64: 1, 32>}, {pipeline_mode = #tpu.pipeline_mode<synchronous>, transform_indices = @transform_5, window_bounds = array<i64: 1, 32>}, {transform_indices = @transform_6, window_bounds = array<i64: 32, 32>}]} {
    %c0 = arith.constant 0 : index
    %c0_0 = arith.constant 0 : index
    %0 = vector.load %arg1[%c0, %c0_0] : memref<32x16xbf16, #tpu.memory_space<vmem>>, vector<32x16xbf16>
    %c0_1 = arith.constant 0 : index
    %c0_2 = arith.constant 0 : index
    %1 = vector.load %arg2[%c0_1, %c0_2] : memref<16x32xbf16, #tpu.memory_space<vmem>>, vector<16x32xbf16>
    %cst = arith.constant dense<0.000000e+00> : vector<32x32xf32>
    %2 = tpu.matmul %0, %1, %cst {dimension_numbers = #tpu.dot_dimension_numbers<[1], [0], [0], [1], [0, 0, 1, 1], [], []>} : vector<32x16xbf16>, vector<16x32xbf16>, vector<32x32xf32> -> vector<32x32xf32>
    %c0_3 = arith.constant 0 : index
    %c0_4 = arith.constant 0 : index
    %3 = vector.load %arg3[%c0_3, %c0_4] : memref<1x32xf32, #tpu.memory_space<vmem>>, vector<1x32xf32>
    %4 = vector.broadcast %3 : vector<1x32xf32> to vector<32x32xf32>
    %5 = arith.addf %2, %4 : vector<32x32xf32>
    %c0_5 = arith.constant 0 : index
    %c0_6 = arith.constant 0 : index
    %6 = vector.load %arg4[%c0_5, %c0_6] : memref<32x32xbf16, #tpu.memory_space<vmem>>, vector<32x32xbf16>
    %7 = arith.extf %6 : vector<32x32xbf16> to vector<32x32xf32>
    %8 = arith.addf %5, %7 : vector<32x32xf32>
    %cst_7 = arith.constant dense<0.000000e+00> : vector<32xf32>
    %9 = vector.multi_reduction <add>, %8, %cst_7 [1] : vector<32x32xf32> to vector<32xf32>
    %10 = vector.shape_cast %9 : vector<32xf32> to vector<32x1xf32>
    %cst_8 = arith.constant 3.200000e+01 : f32
    %11 = vector.broadcast %cst_8 : f32 to vector<32x1xf32>
    %12 = arith.divf %10, %11 : vector<32x1xf32>
    %13 = vector.broadcast %12 : vector<32x1xf32> to vector<32x32xf32>
    %14 = arith.subf %8, %13 : vector<32x32xf32>
    %15 = arith.mulf %14, %14 : vector<32x32xf32>
    %cst_9 = arith.constant dense<0.000000e+00> : vector<32xf32>
    %16 = vector.multi_reduction <add>, %15, %cst_9 [1] : vector<32x32xf32> to vector<32xf32>
    %17 = vector.shape_cast %16 : vector<32xf32> to vector<32x1xf32>
    %cst_10 = arith.constant 3.200000e+01 : f32
    %18 = vector.broadcast %cst_10 : f32 to vector<32x1xf32>
    %19 = arith.divf %17, %18 : vector<32x1xf32>
    %20 = vector.broadcast %12 : vector<32x1xf32> to vector<32x32xf32>
    %21 = arith.subf %8, %20 : vector<32x32xf32>
    %cst_11 = arith.constant 9.99999974E-6 : f32
    %22 = vector.broadcast %cst_11 : f32 to vector<32x1xf32>
    %23 = arith.addf %19, %22 : vector<32x1xf32>
    %24 = math.rsqrt %23 : vector<32x1xf32>
    %25 = vector.broadcast %24 : vector<32x1xf32> to vector<32x32xf32>
    %26 = arith.mulf %21, %25 : vector<32x32xf32>
    %c0_12 = arith.constant 0 : index
    %c0_13 = arith.constant 0 : index
    %27 = vector.load %arg5[%c0_12, %c0_13] : memref<1x32xf32, #tpu.memory_space<vmem>>, vector<1x32xf32>
    %28 = vector.broadcast %27 : vector<1x32xf32> to vector<32x32xf32>
    %29 = arith.mulf %26, %28 : vector<32x32xf32>
    %c0_14 = arith.constant 0 : index
    %c0_15 = arith.constant 0 : index
    %30 = vector.load %arg6[%c0_14, %c0_15] : memref<1x32xf32, #tpu.memory_space<vmem>>, vector<1x32xf32>
    %31 = vector.broadcast %30 : vector<1x32xf32> to vector<32x32xf32>
    %32 = arith.addf %29, %31 : vector<32x32xf32>
    %33 = arith.truncf %32 : vector<32x32xf32> to vector<32x32xbf16>
    %c0_16 = arith.constant 0 : index
    %c0_17 = arith.constant 0 : index
    %34 = vector.load %arg7[%c0_16, %c0_17] : memref<32x32xbf16, #tpu.memory_space<vmem>>, vector<32x32xbf16>
    tpu.vector_store %arg7[%c0_16, %c0_17], %33 {strides = array<i32>} : memref<32x32xbf16, #tpu.memory_space<vmem>>, vector<32x32xbf16>,
    return
  }
  func.func @transform_0(%arg0: i32) -> (i32, i32) {
    %c0_i32 = arith.constant 0 : i32
    %c0_i32_0 = arith.constant 0 : i32
    return %arg0, %c0_i32 : i32, i32
  }
  func.func @transform_1(%arg0: i32) -> (i32, i32) {
    %c0_i32 = arith.constant 0 : i32
    %c0_i32_0 = arith.constant 0 : i32
    %c0_i32_1 = arith.constant 0 : i32
    return %c0_i32, %c0_i32_0 : i32, i32
  }
  func.func @transform_2(%arg0: i32) -> (i32, i32) {
    %c0_i32 = arith.constant 0 : i32
    %c0_i32_0 = arith.constant 0 : i32
    %c0_i32_1 = arith.constant 0 : i32
    return %c0_i32, %c0_i32_0 : i32, i32
  }
  func.func @transform_3(%arg0: i32) -> (i32, i32) {
    %c0_i32 = arith.constant 0 : i32
    %c0_i32_0 = arith.constant 0 : i32
    return %arg0, %c0_i32 : i32, i32
  }
  func.func @transform_4(%arg0: i32) -> (i32, i32) {
    %c0_i32 = arith.constant 0 : i32
    %c0_i32_0 = arith.constant 0 : i32
    %c0_i32_1 = arith.constant 0 : i32
    return %c0_i32, %c0_i32_0 : i32, i32
  }
  func.func @transform_5(%arg0: i32) -> (i32, i32) {
    %c0_i32 = arith.constant 0 : i32
    %c0_i32_0 = arith.constant 0 : i32
    %c0_i32_1 = arith.constant 0 : i32
    return %c0_i32, %c0_i32_0 : i32, i32
  }
  func.func @transform_6(%arg0: i32) -> (i32, i32) {
    %c0_i32 = arith.constant 0 : i32
    %c0_i32_0 = arith.constant 0 : i32
    return %arg0, %c0_i32 : i32, i32
  }
}

</mosaic_0001>

<llo_original>
// kernel: two_way_transformer.29
$region0: #{two_way_transformer.29}
  #allocation0 [shape = 'u32[]', space=smem, size = 0x4, offset = 0x4, fixed_abs, tag = 'smem constant byte address 0x4 - core index']
  #allocation1 [shape = 'u32[72,128]{1,0:T(1,128)}', space=vmem, size = 0x9000, scoped, tag = 'internal scratch']
  %s0 = inlined_call_operand.vmem [shape: bf16[2,8,32], index: 0, kind: input, shape index: {}]
  %s1 = inlined_call_operand.vmem [shape: bf16[2,8,32], index: 1, kind: input, shape index: {}]
  %s2 = inlined_call_operand.vmem [shape: bf16[2,8,32], index: 2, kind: input, shape index: {}]
  %s3 = inlined_call_operand.vmem [shape: bf16[2,8,32], index: 3, kind: output, shape index: {}]
  %s4 = sld [smem:[#allocation0]]
  $region45: #{two_way_transformer.29} parent=0
    _
  %s6 = ssub.s32 1, %s4
  %s7 = scalar_select 0, %s6, %s4
  loop: start=0, step=1, limit=4
  $region2: #{two_way_transformer.29} parent=0 // loop_pre_header
    _
  $region3: #{two_way_transformer.29} parent=0 // loop_header
    %s9 = sphi 0, %s13
    %p10 = scmp.ge.s32.totalorder %s9, 4
    %s16 = sphi 0, %s28
    %s17 = sphi 0, %s24
    %s18 = sphi 0, %s16
    %s19 = sphi 0, %s17
    %s20 = sphi 0, %s18
    %s21 = sphi 0, %s19
    %s33 = sphi 0, %s35
    %s36 = sphi 0, %s33
    %s37 = sphi 0, %s36
    %s53 = sphi 0, %s37
    %s59 = sphi 0, %s61
    %s62 = sphi 0, %s59
    %s63 = sphi 0, %s62
    %s79 = sphi 0, %s63
    %s85 = sphi 0, %s87
    %s88 = sphi 0, %s85
    %s89 = sphi 0, %s88
    %s105 = sphi 0, %s89
    %s113 = sphi 0, %s115
    %s116 = sphi 0, %s113
    %s117 = sphi 0, %s116
    %s133 = sphi 0, %s117
  $region4: #{two_way_transformer.29} parent=0 // loop_header_branch
    %12 = sbr.rel (%p10) target = $region8
  $region5: #{two_way_transformer.29} parent=0 // loop_body
    %s14 = ssub.s32 %s9, 1
    %s15 = ssub.s32 %s9, 2
    %s22 = sadd.s32 1, %s17
    %p23 = scmp.ge.s32.totalorder %s22, 1
    %s24 = scalar_select %p23, 0, %s22
    %s25 = sadd.s32 1, %s16
    %s26 = scalar_select %p23, %s25, %s16
    %p27 = scmp.ge.s32.totalorder %s26, 2
    %s28 = scalar_select %p27, 0, %s26
    %s29 = ssub.s32 %s16, %s28
    %s30 = ssub.s32 %s17, %s24
    %s31 = sor.u32 %s29, %s30
    %p32 = scmp.eq.s32.totalorder %s31, 0
    %s34 = sadd.s32 %s33, 1
    %s35 = scalar_select %p32, %s33, %s34
    %p38 = pneg %p32
    %p39 = scmp.eq.s32.totalorder %s9, 1
    %p40 = por %p38, %p39
    %p41 = scmp.ne.s32.totalorder %s33, %s36
    %p42 = scmp.eq.s32.totalorder %s9, 0
    %p43 = por %p41, %p42
    %p44 = scmp.ne.s32.totalorder %s33, %s36
    %p45 = scmp.eq.s32.totalorder %s14, 1
    %p46 = por %p44, %p45
    %p47 = scmp.ne.s32.totalorder %s36, %s37
    %p48 = scmp.eq.s32.totalorder %s14, 0
    %p49 = por %p47, %p48
    %p50 = scmp.ne.s32.totalorder %s36, %s37
    %p51 = scmp.eq.s32.totalorder %s15, 1
    %p52 = por %p50, %p51
    %p54 = scmp.ne.s32.totalorder %s37, %s53
    %p55 = scmp.eq.s32.totalorder %s15, 0
    %p56 = por %p54, %p55
    %s57 = ssub.s32 %s16, %s28
    %p58 = scmp.eq.s32.totalorder %s57, 0
    %s60 = sadd.s32 %s59, 1
    %s61 = scalar_select %p58, %s59, %s60
    %p64 = pneg %p58
    %p65 = scmp.eq.s32.totalorder %s9, 1
    %p66 = por %p64, %p65
    %p67 = scmp.ne.s32.totalorder %s59, %s62
    %p68 = scmp.eq.s32.totalorder %s9, 0
    %p69 = por %p67, %p68
    %p70 = scmp.ne.s32.totalorder %s59, %s62
    %p71 = scmp.eq.s32.totalorder %s14, 1
    %p72 = por %p70, %p71
    %p73 = scmp.ne.s32.totalorder %s62, %s63
    %p74 = scmp.eq.s32.totalorder %s14, 0
    %p75 = por %p73, %p74
    %p76 = scmp.ne.s32.totalorder %s62, %s63
    %p77 = scmp.eq.s32.totalorder %s15, 1
    %p78 = por %p76, %p77
    %p80 = scmp.ne.s32.totalorder %s63, %s79
    %p81 = scmp.eq.s32.totalorder %s15, 0
    %p82 = por %p80, %p81
    %s83 = ssub.s32 %s16, %s28
    %p84 = scmp.eq.s32.totalorder %s83, 0
    %s86 = sadd.s32 %s85, 1
    %s87 = scalar_select %p84, %s85, %s86
    %p90 = pneg %p84
    %p91 = scmp.eq.s32.totalorder %s9, 1
    %p92 = por %p90, %p91
    %p93 = scmp.ne.s32.totalorder %s85, %s88
    %p94 = scmp.eq.s32.totalorder %s9, 0
    %p95 = por %p93, %p94
    %p96 = scmp.ne.s32.totalorder %s85, %s88
    %p97 = scmp.eq.s32.totalorder %s14, 1
    %p98 = por %p96, %p97
    %p99 = scmp.ne.s32.totalorder %s88, %s89
    %p100 = scmp.eq.s32.totalorder %s14, 0
    %p101 = por %p99, %p100
    %p102 = scmp.ne.s32.totalorder %s88, %s89
    %p103 = scmp.eq.s32.totalorder %s15, 1
    %p104 = por %p102, %p103
    %p106 = scmp.ne.s32.totalorder %s89, %s105
    %p107 = scmp.eq.s32.totalorder %s15, 0
    %p108 = por %p106, %p107
    %s109 = ssub.s32 %s16, %s28
    %s110 = ssub.s32 %s17, %s24
    %s111 = sor.u32 %s109, %s110
    %p112 = scmp.eq.s32.totalorder %s111, 0
    %s114 = sadd.s32 %s113, 1
    %s115 = scalar_select %p112, %s113, %s114
    %p118 = pneg %p112
    %p119 = scmp.eq.s32.totalorder %s9, 1
    %p120 = por %p118, %p119
    %p121 = scmp.ne.s32.totalorder %s113, %s116
    %p122 = scmp.eq.s32.totalorder %s9, 0
    %p123 = por %p121, %p122
    %p124 = scmp.ne.s32.totalorder %s113, %s116
    %p125 = scmp.eq.s32.totalorder %s14, 1
    %p126 = por %p124, %p125
    %p127 = scmp.ne.s32.totalorder %s116, %s117
    %p128 = scmp.eq.s32.totalorder %s14, 0
    %p129 = por %p127, %p128
    %p130 = scmp.ne.s32.totalorder %s116, %s117
    %p131 = scmp.eq.s32.totalorder %s15, 1
    %p132 = por %p130, %p131
    %p134 = scmp.ne.s32.totalorder %s117, %s133
    %p135 = scmp.eq.s32.totalorder %s15, 0
    %p136 = por %p134, %p135
    %p137 = scmp.le.s32.totalorder 1, %s9
    %p138 = scmp.lt.s32.totalorder %s9, 3
    %p139 = pnand %p137, %p138
    %p140 = pneg %p139
    // Predicated region
    $region9: #{two_way_transformer.29} parent=5 // pred_check
      _
    $region10: #{two_way_transformer.29} parent=5 // pred_check_branch
      %142 = sbr.rel (%p139) target = $region12
    $region11: #{two_way_transformer.29} parent=5 // pred_region
      %s143 = ssub.s32 %s9, 1
    $region12: #{two_way_transformer.29} parent=5 // pred_fallthru
      _
    %p144 = scmp.lt.s32.totalorder %s9, 2
    // Predicated region
    $region13: #{two_way_transformer.29} parent=5 // pred_check
      %p145 = pneg %p144
    $region14: #{two_way_transformer.29} parent=5 // pred_check_branch
      %147 = sbr.rel (%p145) target = $region16
    $region15: #{two_way_transformer.29} parent=5 // pred_region
      // Predicated region
      $region17: #{two_way_transformer.29} parent=15 // pred_check
        %p148 = pneg %p43
      $region18: #{two_way_transformer.29} parent=15 // pred_check_branch
        %150 = sbr.rel (%p148) target = $region20
      $region19: #{two_way_transformer.29} parent=15 // pred_region
        %p151 = scmp.lt.s32.totalorder %s16, 1
        %s152 = scalar_select %p151, %s16, 1
        %p153 = scmp.lt.s32.totalorder %s17, 0
        %s154 = scalar_select %p153, %s17, 0
        %s155 = sadd.s32 %s154, %s152
        %s156 = smul.addr %s155, 4
        %s157 = scalar_lea.vmem %s0, %s156
      $region20: #{two_way_transformer.29} parent=15 // pred_fallthru
        _
      // Predicated region
      $region21: #{two_way_transformer.29} parent=15 // pred_check
        %p158 = pneg %p69
      $region22: #{two_way_transformer.29} parent=15 // pred_check_branch
        %160 = sbr.rel (%p158) target = $region24
      $region23: #{two_way_transformer.29} parent=15 // pred_region
        %p161 = scmp.lt.s32.totalorder %s16, 1
        %s162 = scalar_select %p161, %s16, 1
        %s163 = smul.addr %s162, 4
        %s164 = scalar_lea.vmem %s1, %s163
      $region24: #{two_way_transformer.29} parent=15 // pred_fallthru
        _
      // Predicated region
      $region25: #{two_way_transformer.29} parent=15 // pred_check
        %p165 = pneg %p95
      $region26: #{two_way_transformer.29} parent=15 // pred_check_branch
        %167 = sbr.rel (%p165) target = $region28
      $region27: #{two_way_transformer.29} parent=15 // pred_region
        %p168 = scmp.lt.s32.totalorder %s16, 1
        %s169 = scalar_select %p168, %s16, 1
        %s170 = smul.addr %s169, 4
        %s171 = scalar_lea.vmem %s2, %s170
      $region28: #{two_way_transformer.29} parent=15 // pred_fallthru
        _
    $region16: #{two_way_transformer.29} parent=5 // pred_fallthru
      _
    %p172 = scmp.le.s32.totalorder 1, %s9
    %p173 = scmp.lt.s32.totalorder %s9, 3
    %p174 = pnand %p172, %p173
    %p175 = pneg %p174
    // Predicated region
    $region29: #{two_way_transformer.29} parent=5 // pred_check
      _
    $region30: #{two_way_transformer.29} parent=5 // pred_check_branch
      %177 = sbr.rel (%p174) target = $region32
    $region31: #{two_way_transformer.29} parent=5 // pred_region
      %s178 = ssub.s32 %s9, 1
      %p179 = scmp.lt.s32.totalorder %s18, 1
      %s180 = scalar_select %p179, %s18, 1
      %p181 = scmp.lt.s32.totalorder %s19, 0
      %s182 = scalar_select %p181, %s19, 0
      %s183 = sadd.s32 %s182, %s180
      %s184 = smul.addr %s183, 4
      %s185 = scalar_lea.vmem %s0, %s184
      %p186 = pneg %p49
      %p187 = pneg %p46
      %p188 = scmp.lt.s32.totalorder %s18, 1
      %s189 = scalar_select %p188, %s18, 1
      %s190 = smul.addr %s189, 4
      %s191 = scalar_lea.vmem %s1, %s190
      %p192 = pneg %p75
      %p193 = pneg %p72
      %p194 = scmp.lt.s32.totalorder %s18, 1
      %s195 = scalar_select %p194, %s18, 1
      %s196 = smul.addr %s195, 4
      %s197 = scalar_lea.vmem %s2, %s196
      %p198 = pneg %p101
      %p199 = pneg %p98
      %p200 = pneg %p129
      %p201 = pneg %p126
      %p202 = scmp.lt.s32.totalorder %s18, 1
      %s203 = scalar_select %p202, %s18, 1
      %p204 = scmp.lt.s32.totalorder %s19, 0
      %s205 = scalar_select %p204, %s19, 0
      %s206 = sadd.s32 %s205, %s203
      %s207 = smul.addr %s206, 4
      %s208 = scalar_lea.vmem %s3, %s207
      %p209 = scmp.lt.s32.totalorder %s18, 1
      %s210 = scalar_select %p209, %s18, 1
      %p211 = scmp.lt.s32.totalorder %s19, 0
      %s212 = scalar_select %p211, %s19, 0
      %s213 = sadd.s32 %s212, %s210
      %s214 = smul.addr %s213, 4
      %s215 = scalar_lea.vmem %s0, %s214
      %p216 = scmp.lt.s32.totalorder %s18, 1
      %s217 = scalar_select %p216, %s18, 1
      %s218 = smul.addr %s217, 4
      %s219 = scalar_lea.vmem %s1, %s218
      %p220 = scmp.lt.s32.totalorder %s18, 1
      %s221 = scalar_select %p220, %s18, 1
      %s222 = smul.addr %s221, 4
      %s223 = scalar_lea.vmem %s2, %s222
      %p224 = scmp.lt.s32.totalorder %s18, 1
      %s225 = scalar_select %p224, %s18, 1
      %p226 = scmp.lt.s32.totalorder %s19, 0
      %s227 = scalar_select %p226, %s19, 0
      %s228 = sadd.s32 %s227, %s225
      %s229 = smul.addr %s228, 4
      %s230 = scalar_lea.vmem %s3, %s229
      %v232 = vld [vmem:[%s215] sm:$0xf]
      %v233 = vld [vmem:[%s219] sm:$0xf]
      %v234 = vld [vmem:[%s223] sm:$0xf]
      %vm235 = vcmask 130048
      %v237 = vsel %vm235, %v232, 0
      %v240 = vsel %vm235, %v233, 0
      %242 = vmatpush.bf16.xpose.msra.mxu0 0
      %243 = vmatpush.bf16.xpose.msra.mxu0 0
      %244 = vmatpush.bf16.xpose.msra.mxu0 0
      %245 = vmatpush.bf16.xpose.msra.mxu0 0
      %246 = vmatpush.bf16.xpose.msra.mxu0 0
      %247 = vmatpush.bf16.xpose.msra.mxu0 0
      %248 = vmatpush.bf16.xpose.msra.mxu0 0
      %249 = vmatpush.bf16.xpose.msra.mxu0 %v240
      %250 = vmatmul.bf16.gmra.mxu0 %v237
      %v251 = vpop.f32.mrf.mxu0
      %v252 = vadd.f32 0.0, %v251
      %v253 = vpop.f32.mrf.mxu0
      %254 = vdwg.mxu0
      %vm255 = vcmask 64512
      %v256 = vsel %vm255, %v252, -inf
      %257 = vmax.xlane.f32.xlu0 %v256
      %v258 = vpop.xlane.xlu0 %257
      %v259 = vsub.f32 %v252, %v258
      %v260 = vmul.f32 %v259, 1.442695
      %v261 = vpow.pop %v260
      %v262 = vsel %vm255, %v261, 0.0
      %263 = vadd.xlane.f32.xlu0 %v262
      %v264 = vpop.xlane.xlu0 %263
      %v265 = vrcp.pop %v264
      %v266 = vmul.f32 %v261, %v265
      %v267 = vpack.c.bf16 %v266, %v266
      %v269 = vsel %vm255, %v267, 0
      %vm271 = vcmask 1043456
      %v273 = vsel %vm271, %v234, 0
      %275 = vmatpush.bf16.msra.mxu0 0
      %276 = vmatpush.bf16.msra.mxu0 0
      %277 = vmatpush.bf16.msra.mxu0 0
      %278 = vmatpush.bf16.msra.mxu0 0
      %279 = vmatpush.bf16.msra.mxu0 0
      %280 = vmatpush.bf16.msra.mxu0 0
      %281 = vmatpush.bf16.msra.mxu0 0
      %282 = vmatpush.bf16.msra.mxu0 %v273
      %283 = vmatmul.bf16.gmra.mxu0 %v269
      %v284 = vpop.f32.mrf.mxu0
      %v285 = vadd.f32 0.0, %v284
      %v286 = vpop.f32.mrf.mxu0
      %287 = vdwg.mxu0
      %v289 = vunpack.c.l.b16 %v232
      %v290 = vpack.c.b16 %v289, %v289
      %291 = vrot.lane.b32.xlu0 %v290, 112
      %v292 = vpop.permute.xlu0 %291
      %v294 = vunpack.c.l.b16 %v233
      %v295 = vpack.c.b16 %v294, %v294
      %296 = vrot.lane.b32.xlu0 %v295, 112
      %v297 = vpop.permute.xlu0 %296
      %v299 = vsel %vm235, %v292, 0
      %v302 = vsel %vm235, %v297, 0
      %304 = vmatpush.bf16.xpose.msra.mxu0 0
      %305 = vmatpush.bf16.xpose.msra.mxu0 0
      %306 = vmatpush.bf16.xpose.msra.mxu0 0
      %307 = vmatpush.bf16.xpose.msra.mxu0 0
      %308 = vmatpush.bf16.xpose.msra.mxu0 0
      %309 = vmatpush.bf16.xpose.msra.mxu0 0
      %310 = vmatpush.bf16.xpose.msra.mxu0 0
      %311 = vmatpush.bf16.xpose.msra.mxu0 %v302
      %312 = vmatmul.bf16.gmra.mxu0 %v299
      %v313 = vpop.f32.mrf.mxu0
      %v314 = vadd.f32 0.0, %v313
      %v315 = vpop.f32.mrf.mxu0
      %316 = vdwg.mxu0
      %v317 = vsel %vm255, %v314, -inf
      %318 = vmax.xlane.f32.xlu0 %v317
      %v319 = vpop.xlane.xlu0 %318
      %v320 = vsub.f32 %v314, %v319
      %v321 = vmul.f32 %v320, 1.442695
      %v322 = vpow.pop %v321
      %v323 = vsel %vm255, %v322, 0.0
      %324 = vadd.xlane.f32.xlu0 %v323
      %v325 = vpop.xlane.xlu0 %324
      %v326 = vrcp.pop %v325
      %v327 = vmul.f32 %v322, %v326
      %v328 = vpack.c.bf16 %v327, %v327
      %v330 = vunpack.c.l.b16 %v234
      %v331 = vpack.c.b16 %v330, %v330
      %332 = vrot.lane.b32.xlu0 %v331, 112
      %v333 = vpop.permute.xlu0 %332
      %v335 = vsel %vm255, %v328, 0
      %v338 = vsel %vm271, %v333, 0
      %340 = vmatpush.bf16.msra.mxu0 0
      %341 = vmatpush.bf16.msra.mxu0 0
      %342 = vmatpush.bf16.msra.mxu0 0
      %343 = vmatpush.bf16.msra.mxu0 0
      %344 = vmatpush.bf16.msra.mxu0 0
      %345 = vmatpush.bf16.msra.mxu0 0
      %346 = vmatpush.bf16.msra.mxu0 0
      %347 = vmatpush.bf16.msra.mxu0 %v338
      %348 = vmatmul.bf16.gmra.mxu0 %v335
      %v349 = vpop.f32.mrf.mxu0
      %v350 = vadd.f32 0.0, %v349
      %v351 = vpop.f32.mrf.mxu0
      %352 = vdwg.mxu0
      %354 = vrot.lane.b32.xlu0 %v350, 16
      %v355 = vpop.permute.xlu0 %354
      %v357 = vsel %vm235, %v285, %v355
      %v358 = vpack.c.bf16 %v357, %v357
      %vm359 = vcmask 257024
      %360 = vst.msk [vmem:[%s230] sm:$0xf] %vm359, %v358
      %p361 = scmp.lt.s32.totalorder %s18, 1
      %s362 = scalar_select %p361, %s18, 1
      %p363 = scmp.lt.s32.totalorder %s19, 0
      %s364 = scalar_select %p363, %s19, 0
      %s365 = sadd.s32 %s364, %s362
      %s366 = smul.addr %s365, 4
      %s367 = scalar_lea.vmem %s3, %s366
      // Predicated region
      $region33: #{two_way_transformer.29} parent=31 // pred_check
        %p368 = pneg %p126
      $region34: #{two_way_transformer.29} parent=31 // pred_check_branch
        %370 = sbr.rel (%p368) target = $region36
      $region35: #{two_way_transformer.29} parent=31 // pred_region
        _
      $region36: #{two_way_transformer.29} parent=31 // pred_fallthru
        _
    $region32: #{two_way_transformer.29} parent=5 // pred_fallthru
      _
    %p371 = scmp.le.s32.totalorder 2, %s9
    // Predicated region
    $region37: #{two_way_transformer.29} parent=5 // pred_check
      %p372 = pneg %p371
    $region38: #{two_way_transformer.29} parent=5 // pred_check_branch
      %374 = sbr.rel (%p372) target = $region40
    $region39: #{two_way_transformer.29} parent=5 // pred_region
      %s375 = ssub.s32 %s9, 2
      // Predicated region
      $region41: #{two_way_transformer.29} parent=39 // pred_check
        %p376 = pneg %p132
      $region42: #{two_way_transformer.29} parent=39 // pred_check_branch
        %378 = sbr.rel (%p376) target = $region44
      $region43: #{two_way_transformer.29} parent=39 // pred_region
        %p379 = scmp.lt.s32.totalorder %s20, 1
        %s380 = scalar_select %p379, %s20, 1
        %p381 = scmp.lt.s32.totalorder %s21, 0
        %s382 = scalar_select %p381, %s21, 0
        %s383 = sadd.s32 %s382, %s380
        %s384 = smul.addr %s383, 4
        %s385 = scalar_lea.vmem %s3, %s384
      $region44: #{two_way_transformer.29} parent=39 // pred_fallthru
        _
    $region40: #{two_way_transformer.29} parent=5 // pred_fallthru
      _
  $region6: #{two_way_transformer.29} parent=0 // loop_footer
    %s13 = sadd.s32 1, %s9
  $region7: #{two_way_transformer.29} parent=0 // loop_footer_branch
    %8 = sbr.rel target = $region3
  $region8: #{two_way_transformer.29} parent=0 // loop_exit
    _

// kernel: two_way_transformer.30
$region0: #{two_way_transformer.30}
  #allocation0 [shape = 'u32[]', space=smem, size = 0x4, offset = 0x4, fixed_abs, tag = 'smem constant byte address 0x4 - core index']
  #allocation1 [shape = 'u32[72,128]{1,0:T(1,128)}', space=vmem, size = 0x9000, scoped, tag = 'internal scratch']
  %s0 = inlined_call_operand.vmem [shape: bf16[16,32], index: 0, kind: input, shape index: {}]
  %s1 = inlined_call_operand.vmem [shape: bf16[32,32], index: 1, kind: input, shape index: {}]
  %s2 = inlined_call_operand.vmem [shape: f32[1,32], index: 2, kind: input, shape index: {}]
  %s3 = inlined_call_operand.vmem [shape: f32[1,32], index: 3, kind: input, shape index: {}]
  %s4 = inlined_call_operand.vmem [shape: f32[1,32], index: 4, kind: input, shape index: {}]
  %s5 = inlined_call_operand.vmem [shape: bf16[16,32], index: 5, kind: output, shape index: {}]
  %s6 = sld [smem:[#allocation0]]
  $region30: #{two_way_transformer.30} parent=0
    _
  %s8 = ssub.s32 1, %s6
  %s9 = scalar_select 0, %s8, %s6
  // Predicated region
  $region2: #{two_way_transformer.30} parent=0 // pred_check
    _
  $region3: #{two_way_transformer.30} parent=0 // pred_check_branch
    %11 = sbr.rel (0) target = $region5
  $region4: #{two_way_transformer.30} parent=0 // pred_region
    _
  $region5: #{two_way_transformer.30} parent=0 // pred_fallthru
    _
  // Predicated region
  $region6: #{two_way_transformer.30} parent=0 // pred_check
    _
  $region7: #{two_way_transformer.30} parent=0 // pred_check_branch
    %13 = sbr.rel (0) target = $region9
  $region8: #{two_way_transformer.30} parent=0 // pred_region
    _
  $region9: #{two_way_transformer.30} parent=0 // pred_fallthru
    _
  // Predicated region
  $region10: #{two_way_transformer.30} parent=0 // pred_check
    _
  $region11: #{two_way_transformer.30} parent=0 // pred_check_branch
    %15 = sbr.rel (0) target = $region13
  $region12: #{two_way_transformer.30} parent=0 // pred_region
    _
  $region13: #{two_way_transformer.30} parent=0 // pred_fallthru
    _
  // Predicated region
  $region14: #{two_way_transformer.30} parent=0 // pred_check
    _
  $region15: #{two_way_transformer.30} parent=0 // pred_check_branch
    %17 = sbr.rel (0) target = $region17
  $region16: #{two_way_transformer.30} parent=0 // pred_region
    _
  $region17: #{two_way_transformer.30} parent=0 // pred_fallthru
    _
  // Predicated region
  $region18: #{two_way_transformer.30} parent=0 // pred_check
    _
  $region19: #{two_way_transformer.30} parent=0 // pred_check_branch
    %19 = sbr.rel (0) target = $region21
  $region20: #{two_way_transformer.30} parent=0 // pred_region
    _
  $region21: #{two_way_transformer.30} parent=0 // pred_fallthru
    _
  %v21 = vld [vmem:[%s0] sm:$0xf]
  %v22 = vld [vmem:[%s0 + $0x4] sm:$0xf]
  %v23 = vld [vmem:[%s1] sm:$0xf]
  %v24 = vld [vmem:[%s1 + $0x4] sm:$0xf]
  %v25 = vld [vmem:[%s1 + $0x8] sm:$0xf]
  %v26 = vld [vmem:[%s1 + $0xc] sm:$0xf]
  %v27 = vld [vmem:[%s2] sm:$0x1]
  %v29 = vperm.slane %v27, 0
  %v33 = vunpack.c.l.b16 %v21
  %v34 = vunpack.c.l.b16 %v22
  %v35 = vpack.c.b16 %v34, %v33
  %v40 = vunpack.c.l.b16 %v23
  %v41 = vunpack.c.l.b16 %v24
  %v42 = vunpack.c.l.b16 %v25
  %v43 = vunpack.c.l.b16 %v26
  %v44 = vpack.c.b16 %v41, %v40
  %v45 = vpack.c.b16 %v43, %v42
  %vm48 = vcmask 261120
  %v50 = vsel %vm48, %v35, 0
  %52 = vmatpush.bf16.msra.mxu0 0
  %53 = vmatpush.bf16.msra.mxu0 0
  %54 = vmatpush.bf16.msra.mxu0 0
  %55 = vmatpush.bf16.msra.mxu0 0
  %56 = vmatpush.bf16.msra.mxu0 0
  %57 = vmatpush.bf16.msra.mxu0 0
  %58 = vmatpush.bf16.msra.mxu0 %v45
  %59 = vmatpush.bf16.msra.mxu0 %v44
  %60 = vmatmul.bf16.gmra.mxu0 %v50
  %v61 = vpop.f32.mrf.mxu0
  %v62 = vadd.f32 %v29, %v61
  %v63 = vpop.f32.mrf.mxu0
  %v64 = vadd.f32 %v29, %v63
  %65 = vdwg.mxu0
  %v66 = vsel %vm48, %v62, 0.0
  %67 = vadd.xlane.f32.xlu0 %v66
  %v68 = vpop.xlane.xlu0 %67
  %v69 = vsel %vm48, %v64, 0.0
  %70 = vadd.xlane.f32.xlu0 %v69
  %v71 = vpop.xlane.xlu0 %70
  %v72 = vrcp.pop 32.0
  %v73 = vmul.f32 32.0, %v72
  %v74 = vsub.f32 1.0, %v73
  %v75 = vmul.f32 %v72, %v74
  %v76 = vadd.f32 %v72, %v75
  %vm77 = vweird.f32 %v72
  %v78 = vsel %vm77, %v72, %v76
  %v79 = vmul.f32 %v68, %v78
  %v80 = vmul.f32 %v71, %v78
  %v81 = vsub.f32 %v62, %v79
  %v82 = vsub.f32 %v64, %v80
  %v83 = vmul.f32 %v81, %v81
  %v84 = vmul.f32 %v82, %v82
  %v85 = vsel %vm48, %v83, 0.0
  %86 = vadd.xlane.f32.xlu0 %v85
  %v87 = vpop.xlane.xlu0 %86
  %v88 = vsel %vm48, %v84, 0.0
  %89 = vadd.xlane.f32.xlu0 %v88
  %v90 = vpop.xlane.xlu0 %89
  %v91 = vmul.f32 %v87, %v78
  %v92 = vmul.f32 %v90, %v78
  %v93 = vadd.f32 %v91, 1e-05
  %v94 = vadd.f32 %v92, 1e-05
  %v95 = vrsqrt.pop %v93
  %v96 = vmul.f32 %v95, %v93
  %v97 = vmul.f32 %v96, %v95
  %v98 = vmul.f32 0.5, %v97
  %v99 = vsub.f32 1.5, %v98
  %v100 = vmul.f32 %v95, %v99
  %vm101 = vweird.f32 %v93
  %vm102 = vweird.f32 %v95
  %vm103 = vmor %vm101, %vm102
  %v104 = vsel %vm103, %v95, %v100
  %v105 = vrsqrt.pop %v94
  %v106 = vmul.f32 %v105, %v94
  %v107 = vmul.f32 %v106, %v105
  %v108 = vmul.f32 0.5, %v107
  %v109 = vsub.f32 1.5, %v108
  %v110 = vmul.f32 %v105, %v109
  %vm111 = vweird.f32 %v94
  %vm112 = vweird.f32 %v105
  %vm113 = vmor %vm111, %vm112
  %v114 = vsel %vm113, %v105, %v110
  %v115 = vmul.f32 %v81, %v104
  %v116 = vmul.f32 %v82, %v114
  %v117 = vld [vmem:[%s3] sm:$0x1]
  %v119 = vperm.slane %v117, 0
  %v121 = vmul.f32 %v115, %v119
  %v122 = vmul.f32 %v116, %v119
  %v123 = vld [vmem:[%s4] sm:$0x1]
  %v125 = vperm.slane %v123, 0
  %v127 = vadd.f32 %v121, %v125
  %v128 = vadd.f32 %v122, %v125
  %v129 = vpack.c.bf16 %v127, %v127
  %v130 = vpack.c.bf16 %v128, %v128
  %vm131 = vcmask 257024
  %132 = vst.msk [vmem:[%s5] sm:$0xf] %vm131, %v129
  %133 = vst.msk [vmem:[%s5 + $0x4] sm:$0xf] %vm131, %v130
  // Predicated region
  $region22: #{two_way_transformer.30} parent=0 // pred_check
    _
  $region23: #{two_way_transformer.30} parent=0 // pred_check_branch
    %135 = sbr.rel (0) target = $region25
  $region24: #{two_way_transformer.30} parent=0 // pred_region
    _
  $region25: #{two_way_transformer.30} parent=0 // pred_fallthru
    _
  // Predicated region
  $region26: #{two_way_transformer.30} parent=0 // pred_check
    _
  $region27: #{two_way_transformer.30} parent=0 // pred_check_branch
    %137 = sbr.rel (0) target = $region29
  $region28: #{two_way_transformer.30} parent=0 // pred_region
    _
  $region29: #{two_way_transformer.30} parent=0 // pred_fallthru
    _

// kernel: two_way_transformer.28
$region0: #{two_way_transformer.28}
  #allocation0 [shape = 'u32[]', space=smem, size = 0x4, offset = 0x4, fixed_abs, tag = 'smem constant byte address 0x4 - core index']
  #allocation1 [shape = 'u32[72,128]{1,0:T(1,128)}', space=vmem, size = 0x9000, scoped, tag = 'internal scratch']
  %s0 = inlined_call_operand.vmem [shape: bf16[16,32], index: 0, kind: input, shape index: {}]
  %s1 = inlined_call_operand.vmem [shape: bf16[32,32], index: 1, kind: input, shape index: {}]
  %s2 = inlined_call_operand.vmem [shape: f32[1,32], index: 2, kind: input, shape index: {}]
  %s3 = inlined_call_operand.vmem [shape: bf16[32,32], index: 3, kind: input, shape index: {}]
  %s4 = inlined_call_operand.vmem [shape: f32[1,32], index: 4, kind: input, shape index: {}]
  %s5 = inlined_call_operand.vmem [shape: bf16[32,32], index: 5, kind: input, shape index: {}]
  %s6 = inlined_call_operand.vmem [shape: f32[1,32], index: 6, kind: input, shape index: {}]
  %s7 = inlined_call_operand.vmem [shape: bf16[16,32], index: 7, kind: output, shape index: {0}]
  %s8 = inlined_call_operand.vmem [shape: bf16[16,32], index: 8, kind: output, shape index: {1}]
  %s9 = inlined_call_operand.vmem [shape: bf16[16,32], index: 9, kind: output, shape index: {2}]
  %10 = xla_tuple %s7, %s8, %s9
  %s11 = sld [smem:[#allocation0]]
  $region54: #{two_way_transformer.28} parent=0
    _
  %s13 = ssub.s32 1, %s11
  %s14 = scalar_select 0, %s13, %s11
  // Predicated region
  $region2: #{two_way_transformer.28} parent=0 // pred_check
    _
  $region3: #{two_way_transformer.28} parent=0 // pred_check_branch
    %16 = sbr.rel (0) target = $region5
  $region4: #{two_way_transformer.28} parent=0 // pred_region
    _
  $region5: #{two_way_transformer.28} parent=0 // pred_fallthru
    _
  // Predicated region
  $region6: #{two_way_transformer.28} parent=0 // pred_check
    _
  $region7: #{two_way_transformer.28} parent=0 // pred_check_branch
    %18 = sbr.rel (0) target = $region9
  $region8: #{two_way_transformer.28} parent=0 // pred_region
    _
  $region9: #{two_way_transformer.28} parent=0 // pred_fallthru
    _
  // Predicated region
  $region10: #{two_way_transformer.28} parent=0 // pred_check
    _
  $region11: #{two_way_transformer.28} parent=0 // pred_check_branch
    %20 = sbr.rel (0) target = $region13
  $region12: #{two_way_transformer.28} parent=0 // pred_region
    _
  $region13: #{two_way_transformer.28} parent=0 // pred_fallthru
    _
  // Predicated region
  $region14: #{two_way_transformer.28} parent=0 // pred_check
    _
  $region15: #{two_way_transformer.28} parent=0 // pred_check_branch
    %22 = sbr.rel (0) target = $region17
  $region16: #{two_way_transformer.28} parent=0 // pred_region
    _
  $region17: #{two_way_transformer.28} parent=0 // pred_fallthru
    _
  // Predicated region
  $region18: #{two_way_transformer.28} parent=0 // pred_check
    _
  $region19: #{two_way_transformer.28} parent=0 // pred_check_branch
    %24 = sbr.rel (0) target = $region21
  $region20: #{two_way_transformer.28} parent=0 // pred_region
    _
  $region21: #{two_way_transformer.28} parent=0 // pred_fallthru
    _
  // Predicated region
  $region22: #{two_way_transformer.28} parent=0 // pred_check
    _
  $region23: #{two_way_transformer.28} parent=0 // pred_check_branch
    %26 = sbr.rel (0) target = $region25
  $region24: #{two_way_transformer.28} parent=0 // pred_region
    _
  $region25: #{two_way_transformer.28} parent=0 // pred_fallthru
    _
  // Predicated region
  $region26: #{two_way_transformer.28} parent=0 // pred_check
    _
  $region27: #{two_way_transformer.28} parent=0 // pred_check_branch
    %28 = sbr.rel (0) target = $region29
  $region28: #{two_way_transformer.28} parent=0 // pred_region
    _
  $region29: #{two_way_transformer.28} parent=0 // pred_fallthru
    _
  %v30 = vld [vmem:[%s0] sm:$0xf]
  %v31 = vld [vmem:[%s0 + $0x4] sm:$0xf]
  %v32 = vld [vmem:[%s1] sm:$0xf]
  %v33 = vld [vmem:[%s1 + $0x4] sm:$0xf]
  %v34 = vld [vmem:[%s1 + $0x8] sm:$0xf]
  %v35 = vld [vmem:[%s1 + $0xc] sm:$0xf]
  %v36 = vld [vmem:[%s2] sm:$0x1]
  %v38 = vperm.slane %v36, 0
  %v42 = vunpack.c.l.b16 %v30
  %v43 = vunpack.c.l.b16 %v31
  %v44 = vpack.c.b16 %v43, %v42
  %v49 = vunpack.c.l.b16 %v32
  %v50 = vunpack.c.l.b16 %v33
  %v51 = vunpack.c.l.b16 %v34
  %v52 = vunpack.c.l.b16 %v35
  %v53 = vpack.c.b16 %v50, %v49
  %v54 = vpack.c.b16 %v52, %v51
  %vm57 = vcmask 261120
  %v59 = vsel %vm57, %v44, 0
  %61 = vmatpush.bf16.msra.mxu0 0
  %62 = vmatpush.bf16.msra.mxu0 0
  %63 = vmatpush.bf16.msra.mxu0 0
  %64 = vmatpush.bf16.msra.mxu0 0
  %65 = vmatpush.bf16.msra.mxu0 0
  %66 = vmatpush.bf16.msra.mxu0 0
  %67 = vmatpush.bf16.msra.mxu0 %v54
  %68 = vmatpush.bf16.msra.mxu0 %v53
  %69 = vmatmul.bf16.gmra.mxu0 %v59
  %v70 = vpop.f32.mrf.mxu0
  %v71 = vadd.f32 %v38, %v70
  %v72 = vpop.f32.mrf.mxu0
  %v73 = vadd.f32 %v38, %v72
  %74 = vdwg.mxu0
  %v75 = vld [vmem:[%s3] sm:$0xf]
  %v76 = vld [vmem:[%s3 + $0x4] sm:$0xf]
  %v77 = vld [vmem:[%s3 + $0x8] sm:$0xf]
  %v78 = vld [vmem:[%s3 + $0xc] sm:$0xf]
  %v79 = vld [vmem:[%s4] sm:$0x1]
  %v81 = vperm.slane %v79, 0
  %v87 = vunpack.c.l.b16 %v75
  %v88 = vunpack.c.l.b16 %v76
  %v89 = vunpack.c.l.b16 %v77
  %v90 = vunpack.c.l.b16 %v78
  %v91 = vpack.c.b16 %v88, %v87
  %v92 = vpack.c.b16 %v90, %v89
  %95 = vmatpush.bf16.msra.mxu0 0
  %96 = vmatpush.bf16.msra.mxu0 0
  %97 = vmatpush.bf16.msra.mxu0 0
  %98 = vmatpush.bf16.msra.mxu0 0
  %99 = vmatpush.bf16.msra.mxu0 0
  %100 = vmatpush.bf16.msra.mxu0 0
  %101 = vmatpush.bf16.msra.mxu0 %v92
  %102 = vmatpush.bf16.msra.mxu0 %v91
  %103 = vmatmul.bf16.gmra.mxu0 %v59
  %v104 = vpop.f32.mrf.mxu0
  %v105 = vadd.f32 %v81, %v104
  %v106 = vpop.f32.mrf.mxu0
  %v107 = vadd.f32 %v81, %v106
  %108 = vdwg.mxu0
  %v109 = vld [vmem:[%s5] sm:$0xf]
  %v110 = vld [vmem:[%s5 + $0x4] sm:$0xf]
  %v111 = vld [vmem:[%s5 + $0x8] sm:$0xf]
  %v112 = vld [vmem:[%s5 + $0xc] sm:$0xf]
  %v113 = vld [vmem:[%s6] sm:$0x1]
  %v115 = vperm.slane %v113, 0
  %v121 = vunpack.c.l.b16 %v109
  %v122 = vunpack.c.l.b16 %v110
  %v123 = vunpack.c.l.b16 %v111
  %v124 = vunpack.c.l.b16 %v112
  %v125 = vpack.c.b16 %v122, %v121
  %v126 = vpack.c.b16 %v124, %v123
  %129 = vmatpush.bf16.msra.mxu0 0
  %130 = vmatpush.bf16.msra.mxu0 0
  %131 = vmatpush.bf16.msra.mxu0 0
  %132 = vmatpush.bf16.msra.mxu0 0
  %133 = vmatpush.bf16.msra.mxu0 0
  %134 = vmatpush.bf16.msra.mxu0 0
  %135 = vmatpush.bf16.msra.mxu0 %v126
  %136 = vmatpush.bf16.msra.mxu0 %v125
  %137 = vmatmul.bf16.gmra.mxu0 %v59
  %v138 = vpop.f32.mrf.mxu0
  %v139 = vadd.f32 %v115, %v138
  %v140 = vpop.f32.mrf.mxu0
  %v141 = vadd.f32 %v115, %v140
  %142 = vdwg.mxu0
  %v143 = vpack.c.bf16 %v71, %v71
  %v144 = vpack.c.bf16 %v73, %v73
  %vm145 = vcmask 257024
  %146 = vst.msk [vmem:[%s7] sm:$0xf] %vm145, %v143
  %147 = vst.msk [vmem:[%s7 + $0x4] sm:$0xf] %vm145, %v144
  %v148 = vpack.c.bf16 %v105, %v105
  %v149 = vpack.c.bf16 %v107, %v107
  %150 = vst.msk [vmem:[%s8] sm:$0xf] %vm145, %v148
  %151 = vst.msk [vmem:[%s8 + $0x4] sm:$0xf] %vm145, %v149
  %v152 = vpack.c.bf16 %v139, %v139
  %v153 = vpack.c.bf16 %v141, %v141
  %154 = vst.msk [vmem:[%s9] sm:$0xf] %vm145, %v152
  %155 = vst.msk [vmem:[%s9 + $0x4] sm:$0xf] %vm145, %v153
  // Predicated region
  $region30: #{two_way_transformer.28} parent=0 // pred_check
    _
  $region31: #{two_way_transformer.28} parent=0 // pred_check_branch
    %157 = sbr.rel (0) target = $region33
  $region32: #{two_way_transformer.28} parent=0 // pred_region
    _
  $region33: #{two_way_transformer.28} parent=0 // pred_fallthru
    _
  // Predicated region
  $region34: #{two_way_transformer.28} parent=0 // pred_check
    _
  $region35: #{two_way_transformer.28} parent=0 // pred_check_branch
    %159 = sbr.rel (0) target = $region37
  $region36: #{two_way_transformer.28} parent=0 // pred_region
    _
  $region37: #{two_way_transformer.28} parent=0 // pred_fallthru
    _
  // Predicated region
  $region38: #{two_way_transformer.28} parent=0 // pred_check
    _
  $region39: #{two_way_transformer.28} parent=0 // pred_check_branch
    %161 = sbr.rel (0) target = $region41
  $region40: #{two_way_transformer.28} parent=0 // pred_region
    _
  $region41: #{two_way_transformer.28} parent=0 // pred_fallthru
    _
  // Predicated region
  $region42: #{two_way_transformer.28} parent=0 // pred_check
    _
  $region43: #{two_way_transformer.28} parent=0 // pred_check_branch
    %163 = sbr.rel (0) target = $region45
  $region44: #{two_way_transformer.28} parent=0 // pred_region
    _
  $region45: #{two_way_transformer.28} parent=0 // pred_fallthru
    _
  // Predicated region
  $region46: #{two_way_transformer.28} parent=0 // pred_check
    _
  $region47: #{two_way_transformer.28} parent=0 // pred_check_branch
    %165 = sbr.rel (0) target = $region49
  $region48: #{two_way_transformer.28} parent=0 // pred_region
    _
  $region49: #{two_way_transformer.28} parent=0 // pred_fallthru
    _
  // Predicated region
  $region50: #{two_way_transformer.28} parent=0 // pred_check
    _
  $region51: #{two_way_transformer.28} parent=0 // pred_check_branch
    %167 = sbr.rel (0) target = $region53
  $region52: #{two_way_transformer.28} parent=0 // pred_region
    _
  $region53: #{two_way_transformer.28} parent=0 // pred_fallthru
    _

// kernel: two_way_transformer.31
$region0: #{two_way_transformer.31}
  #allocation0 [shape = 'u32[]', space=smem, size = 0x4, offset = 0x4, fixed_abs, tag = 'smem constant byte address 0x4 - core index']
  #allocation1 [shape = 'u32[72,128]{1,0:T(1,128)}', space=vmem, size = 0x9000, scoped, tag = 'internal scratch']
  %s0 = inlined_call_operand.vmem [shape: bf16[16,32], index: 0, kind: input, shape index: {}]
  %s1 = inlined_call_operand.vmem [shape: bf16[16,32], index: 1, kind: input, shape index: {}]
  %s2 = inlined_call_operand.vmem [shape: bf16[32,16], index: 2, kind: input, shape index: {}]
  %s3 = inlined_call_operand.vmem [shape: f32[1,16], index: 3, kind: input, shape index: {}]
  %s4 = inlined_call_operand.vmem [shape: bf16[16,16], index: 4, kind: output, shape index: {}]
  %s5 = sld [smem:[#allocation0]]
  $region26: #{two_way_transformer.31} parent=0
    _
  %s7 = ssub.s32 1, %s5
  %s8 = scalar_select 0, %s7, %s5
  // Predicated region
  $region2: #{two_way_transformer.31} parent=0 // pred_check
    _
  $region3: #{two_way_transformer.31} parent=0 // pred_check_branch
    %10 = sbr.rel (0) target = $region5
  $region4: #{two_way_transformer.31} parent=0 // pred_region
    _
  $region5: #{two_way_transformer.31} parent=0 // pred_fallthru
    _
  // Predicated region
  $region6: #{two_way_transformer.31} parent=0 // pred_check
    _
  $region7: #{two_way_transformer.31} parent=0 // pred_check_branch
    %12 = sbr.rel (0) target = $region9
  $region8: #{two_way_transformer.31} parent=0 // pred_region
    _
  $region9: #{two_way_transformer.31} parent=0 // pred_fallthru
    _
  // Predicated region
  $region10: #{two_way_transformer.31} parent=0 // pred_check
    _
  $region11: #{two_way_transformer.31} parent=0 // pred_check_branch
    %14 = sbr.rel (0) target = $region13
  $region12: #{two_way_transformer.31} parent=0 // pred_region
    _
  $region13: #{two_way_transformer.31} parent=0 // pred_fallthru
    _
  // Predicated region
  $region14: #{two_way_transformer.31} parent=0 // pred_check
    _
  $region15: #{two_way_transformer.31} parent=0 // pred_check_branch
    %16 = sbr.rel (0) target = $region17
  $region16: #{two_way_transformer.31} parent=0 // pred_region
    _
  $region17: #{two_way_transformer.31} parent=0 // pred_fallthru
    _
  %v18 = vld [vmem:[%s0] sm:$0xf]
  %v19 = vld [vmem:[%s0 + $0x4] sm:$0xf]
  %v20 = vld [vmem:[%s1] sm:$0xf]
  %v21 = vld [vmem:[%s1 + $0x4] sm:$0xf]
  %v22 = vunpack.c.l.bf16 %v18
  %v23 = vunpack.c.l.bf16 %v19
  %v24 = vunpack.c.l.bf16 %v20
  %v25 = vunpack.c.l.bf16 %v21
  %v26 = vadd.f32 %v22, %v24
  %v27 = vadd.f32 %v23, %v25
  %v28 = vpack.c.bf16 %v27, %v26
  %v29 = vld [vmem:[%s2] sm:$0xf]
  %v30 = vld [vmem:[%s2 + $0x4] sm:$0xf]
  %v31 = vld [vmem:[%s2 + $0x8] sm:$0xf]
  %v32 = vld [vmem:[%s2 + $0xc] sm:$0xf]
  %v33 = vld [vmem:[%s3] sm:$0x1]
  %v35 = vperm.slane %v33, 0
  %v41 = vunpack.c.l.b16 %v29
  %v42 = vunpack.c.l.b16 %v30
  %v43 = vunpack.c.l.b16 %v31
  %v44 = vunpack.c.l.b16 %v32
  %v45 = vpack.c.b16 %v42, %v41
  %v46 = vpack.c.b16 %v44, %v43
  %vm49 = vcmask 261120
  %v51 = vsel %vm49, %v28, 0
  %53 = vmatpush.bf16.msra.mxu0 0
  %54 = vmatpush.bf16.msra.mxu0 0
  %55 = vmatpush.bf16.msra.mxu0 0
  %56 = vmatpush.bf16.msra.mxu0 0
  %57 = vmatpush.bf16.msra.mxu0 0
  %58 = vmatpush.bf16.msra.mxu0 0
  %59 = vmatpush.bf16.msra.mxu0 %v46
  %60 = vmatpush.bf16.msra.mxu0 %v45
  %61 = vmatmul.bf16.gmra.mxu0 %v51
  %v62 = vpop.f32.mrf.mxu0
  %v63 = vadd.f32 %v35, %v62
  %v64 = vpop.f32.mrf.mxu0
  %v65 = vadd.f32 %v35, %v64
  %66 = vdwg.mxu0
  %v67 = vpack.c.bf16 %v63, %v63
  %v68 = vpack.c.bf16 %v65, %v65
  %vm69 = vcmask 125952
  %70 = vst.msk [vmem:[%s4] sm:$0xf] %vm69, %v67
  %71 = vst.msk [vmem:[%s4 + $0x4] sm:$0xf] %vm69, %v68
  // Predicated region
  $region18: #{two_way_transformer.31} parent=0 // pred_check
    _
  $region19: #{two_way_transformer.31} parent=0 // pred_check_branch
    %73 = sbr.rel (0) target = $region21
  $region20: #{two_way_transformer.31} parent=0 // pred_region
    _
  $region21: #{two_way_transformer.31} parent=0 // pred_fallthru
    _
  // Predicated region
  $region22: #{two_way_transformer.31} parent=0 // pred_check
    _
  $region23: #{two_way_transformer.31} parent=0 // pred_check_branch
    %75 = sbr.rel (0) target = $region25
  $region24: #{two_way_transformer.31} parent=0 // pred_region
    _
  $region25: #{two_way_transformer.31} parent=0 // pred_fallthru
    _

// kernel: two_way_transformer.33
$region0: #{two_way_transformer.33}
  #allocation0 [shape = 'u32[]', space=smem, size = 0x4, offset = 0x4, fixed_abs, tag = 'smem constant byte address 0x4 - core index']
  #allocation1 [shape = 'u32[72,128]{1,0:T(1,128)}', space=vmem, size = 0x9000, scoped, tag = 'internal scratch']
  %s0 = inlined_call_operand.vmem [shape: bf16[2,8,16], index: 0, kind: input, shape index: {}]
  %s1 = inlined_call_operand.vmem [shape: bf16[2,16,16], index: 1, kind: input, shape index: {}]
  %s2 = inlined_call_operand.vmem [shape: bf16[2,16,16], index: 2, kind: input, shape index: {}]
  %s3 = inlined_call_operand.vmem [shape: bf16[2,8,16], index: 3, kind: output, shape index: {}]
  %s4 = sld [smem:[#allocation0]]
  $region45: #{two_way_transformer.33} parent=0
    _
  %s6 = ssub.s32 1, %s4
  %s7 = scalar_select 0, %s6, %s4
  loop: start=0, step=1, limit=4
  $region2: #{two_way_transformer.33} parent=0 // loop_pre_header
    _
  $region3: #{two_way_transformer.33} parent=0 // loop_header
    %s9 = sphi 0, %s13
    %p10 = scmp.ge.s32.totalorder %s9, 4
    %s16 = sphi 0, %s28
    %s17 = sphi 0, %s24
    %s18 = sphi 0, %s16
    %s19 = sphi 0, %s17
    %s20 = sphi 0, %s18
    %s21 = sphi 0, %s19
    %s33 = sphi 0, %s35
    %s36 = sphi 0, %s33
    %s37 = sphi 0, %s36
    %s53 = sphi 0, %s37
    %s59 = sphi 0, %s61
    %s62 = sphi 0, %s59
    %s63 = sphi 0, %s62
    %s79 = sphi 0, %s63
    %s85 = sphi 0, %s87
    %s88 = sphi 0, %s85
    %s89 = sphi 0, %s88
    %s105 = sphi 0, %s89
    %s113 = sphi 0, %s115
    %s116 = sphi 0, %s113
    %s117 = sphi 0, %s116
    %s133 = sphi 0, %s117
  $region4: #{two_way_transformer.33} parent=0 // loop_header_branch
    %12 = sbr.rel (%p10) target = $region8
  $region5: #{two_way_transformer.33} parent=0 // loop_body
    %s14 = ssub.s32 %s9, 1
    %s15 = ssub.s32 %s9, 2
    %s22 = sadd.s32 1, %s17
    %p23 = scmp.ge.s32.totalorder %s22, 1
    %s24 = scalar_select %p23, 0, %s22
    %s25 = sadd.s32 1, %s16
    %s26 = scalar_select %p23, %s25, %s16
    %p27 = scmp.ge.s32.totalorder %s26, 2
    %s28 = scalar_select %p27, 0, %s26
    %s29 = ssub.s32 %s16, %s28
    %s30 = ssub.s32 %s17, %s24
    %s31 = sor.u32 %s29, %s30
    %p32 = scmp.eq.s32.totalorder %s31, 0
    %s34 = sadd.s32 %s33, 1
    %s35 = scalar_select %p32, %s33, %s34
    %p38 = pneg %p32
    %p39 = scmp.eq.s32.totalorder %s9, 1
    %p40 = por %p38, %p39
    %p41 = scmp.ne.s32.totalorder %s33, %s36
    %p42 = scmp.eq.s32.totalorder %s9, 0
    %p43 = por %p41, %p42
    %p44 = scmp.ne.s32.totalorder %s33, %s36
    %p45 = scmp.eq.s32.totalorder %s14, 1
    %p46 = por %p44, %p45
    %p47 = scmp.ne.s32.totalorder %s36, %s37
    %p48 = scmp.eq.s32.totalorder %s14, 0
    %p49 = por %p47, %p48
    %p50 = scmp.ne.s32.totalorder %s36, %s37
    %p51 = scmp.eq.s32.totalorder %s15, 1
    %p52 = por %p50, %p51
    %p54 = scmp.ne.s32.totalorder %s37, %s53
    %p55 = scmp.eq.s32.totalorder %s15, 0
    %p56 = por %p54, %p55
    %s57 = ssub.s32 %s16, %s28
    %p58 = scmp.eq.s32.totalorder %s57, 0
    %s60 = sadd.s32 %s59, 1
    %s61 = scalar_select %p58, %s59, %s60
    %p64 = pneg %p58
    %p65 = scmp.eq.s32.totalorder %s9, 1
    %p66 = por %p64, %p65
    %p67 = scmp.ne.s32.totalorder %s59, %s62
    %p68 = scmp.eq.s32.totalorder %s9, 0
    %p69 = por %p67, %p68
    %p70 = scmp.ne.s32.totalorder %s59, %s62
    %p71 = scmp.eq.s32.totalorder %s14, 1
    %p72 = por %p70, %p71
    %p73 = scmp.ne.s32.totalorder %s62, %s63
    %p74 = scmp.eq.s32.totalorder %s14, 0
    %p75 = por %p73, %p74
    %p76 = scmp.ne.s32.totalorder %s62, %s63
    %p77 = scmp.eq.s32.totalorder %s15, 1
    %p78 = por %p76, %p77
    %p80 = scmp.ne.s32.totalorder %s63, %s79
    %p81 = scmp.eq.s32.totalorder %s15, 0
    %p82 = por %p80, %p81
    %s83 = ssub.s32 %s16, %s28
    %p84 = scmp.eq.s32.totalorder %s83, 0
    %s86 = sadd.s32 %s85, 1
    %s87 = scalar_select %p84, %s85, %s86
    %p90 = pneg %p84
    %p91 = scmp.eq.s32.totalorder %s9, 1
    %p92 = por %p90, %p91
    %p93 = scmp.ne.s32.totalorder %s85, %s88
    %p94 = scmp.eq.s32.totalorder %s9, 0
    %p95 = por %p93, %p94
    %p96 = scmp.ne.s32.totalorder %s85, %s88
    %p97 = scmp.eq.s32.totalorder %s14, 1
    %p98 = por %p96, %p97
    %p99 = scmp.ne.s32.totalorder %s88, %s89
    %p100 = scmp.eq.s32.totalorder %s14, 0
    %p101 = por %p99, %p100
    %p102 = scmp.ne.s32.totalorder %s88, %s89
    %p103 = scmp.eq.s32.totalorder %s15, 1
    %p104 = por %p102, %p103
    %p106 = scmp.ne.s32.totalorder %s89, %s105
    %p107 = scmp.eq.s32.totalorder %s15, 0
    %p108 = por %p106, %p107
    %s109 = ssub.s32 %s16, %s28
    %s110 = ssub.s32 %s17, %s24
    %s111 = sor.u32 %s109, %s110
    %p112 = scmp.eq.s32.totalorder %s111, 0
    %s114 = sadd.s32 %s113, 1
    %s115 = scalar_select %p112, %s113, %s114
    %p118 = pneg %p112
    %p119 = scmp.eq.s32.totalorder %s9, 1
    %p120 = por %p118, %p119
    %p121 = scmp.ne.s32.totalorder %s113, %s116
    %p122 = scmp.eq.s32.totalorder %s9, 0
    %p123 = por %p121, %p122
    %p124 = scmp.ne.s32.totalorder %s113, %s116
    %p125 = scmp.eq.s32.totalorder %s14, 1
    %p126 = por %p124, %p125
    %p127 = scmp.ne.s32.totalorder %s116, %s117
    %p128 = scmp.eq.s32.totalorder %s14, 0
    %p129 = por %p127, %p128
    %p130 = scmp.ne.s32.totalorder %s116, %s117
    %p131 = scmp.eq.s32.totalorder %s15, 1
    %p132 = por %p130, %p131
    %p134 = scmp.ne.s32.totalorder %s117, %s133
    %p135 = scmp.eq.s32.totalorder %s15, 0
    %p136 = por %p134, %p135
    %p137 = scmp.le.s32.totalorder 1, %s9
    %p138 = scmp.lt.s32.totalorder %s9, 3
    %p139 = pnand %p137, %p138
    %p140 = pneg %p139
    // Predicated region
    $region9: #{two_way_transformer.33} parent=5 // pred_check
      _
    $region10: #{two_way_transformer.33} parent=5 // pred_check_branch
      %142 = sbr.rel (%p139) target = $region12
    $region11: #{two_way_transformer.33} parent=5 // pred_region
      %s143 = ssub.s32 %s9, 1
    $region12: #{two_way_transformer.33} parent=5 // pred_fallthru
      _
    %p144 = scmp.lt.s32.totalorder %s9, 2
    // Predicated region
    $region13: #{two_way_transformer.33} parent=5 // pred_check
      %p145 = pneg %p144
    $region14: #{two_way_transformer.33} parent=5 // pred_check_branch
      %147 = sbr.rel (%p145) target = $region16
    $region15: #{two_way_transformer.33} parent=5 // pred_region
      // Predicated region
      $region17: #{two_way_transformer.33} parent=15 // pred_check
        %p148 = pneg %p43
      $region18: #{two_way_transformer.33} parent=15 // pred_check_branch
        %150 = sbr.rel (%p148) target = $region20
      $region19: #{two_way_transformer.33} parent=15 // pred_region
        %p151 = scmp.lt.s32.totalorder %s16, 1
        %s152 = scalar_select %p151, %s16, 1
        %p153 = scmp.lt.s32.totalorder %s17, 0
        %s154 = scalar_select %p153, %s17, 0
        %s155 = sadd.s32 %s154, %s152
        %s156 = smul.addr %s155, 4
        %s157 = scalar_lea.vmem %s0, %s156
      $region20: #{two_way_transformer.33} parent=15 // pred_fallthru
        _
      // Predicated region
      $region21: #{two_way_transformer.33} parent=15 // pred_check
        %p158 = pneg %p69
      $region22: #{two_way_transformer.33} parent=15 // pred_check_branch
        %160 = sbr.rel (%p158) target = $region24
      $region23: #{two_way_transformer.33} parent=15 // pred_region
        %p161 = scmp.lt.s32.totalorder %s16, 1
        %s162 = scalar_select %p161, %s16, 1
        %s163 = smul.addr %s162, 2
        %s164 = smul.addr %s163, 4
        %s165 = scalar_lea.vmem %s1, %s164
      $region24: #{two_way_transformer.33} parent=15 // pred_fallthru
        _
      // Predicated region
      $region25: #{two_way_transformer.33} parent=15 // pred_check
        %p166 = pneg %p95
      $region26: #{two_way_transformer.33} parent=15 // pred_check_branch
        %168 = sbr.rel (%p166) target = $region28
      $region27: #{two_way_transformer.33} parent=15 // pred_region
        %p169 = scmp.lt.s32.totalorder %s16, 1
        %s170 = scalar_select %p169, %s16, 1
        %s171 = smul.addr %s170, 2
        %s172 = smul.addr %s171, 4
        %s173 = scalar_lea.vmem %s2, %s172
      $region28: #{two_way_transformer.33} parent=15 // pred_fallthru
        _
    $region16: #{two_way_transformer.33} parent=5 // pred_fallthru
      _
    %p174 = scmp.le.s32.totalorder 1, %s9
    %p175 = scmp.lt.s32.totalorder %s9, 3
    %p176 = pnand %p174, %p175
    %p177 = pneg %p176
    // Predicated region
    $region29: #{two_way_transformer.33} parent=5 // pred_check
      _
    $region30: #{two_way_transformer.33} parent=5 // pred_check_branch
      %179 = sbr.rel (%p176) target = $region32
    $region31: #{two_way_transformer.33} parent=5 // pred_region
      %s180 = ssub.s32 %s9, 1
      %p181 = scmp.lt.s32.totalorder %s18, 1
      %s182 = scalar_select %p181, %s18, 1
      %p183 = scmp.lt.s32.totalorder %s19, 0
      %s184 = scalar_select %p183, %s19, 0
      %s185 = sadd.s32 %s184, %s182
      %s186 = smul.addr %s185, 4
      %s187 = scalar_lea.vmem %s0, %s186
      %p188 = pneg %p49
      %p189 = pneg %p46
      %p190 = scmp.lt.s32.totalorder %s18, 1
      %s191 = scalar_select %p190, %s18, 1
      %s192 = smul.addr %s191, 2
      %s193 = smul.addr %s192, 4
      %s194 = scalar_lea.vmem %s1, %s193
      %p195 = pneg %p75
      %p196 = pneg %p72
      %p197 = scmp.lt.s32.totalorder %s18, 1
      %s198 = scalar_select %p197, %s18, 1
      %s199 = smul.addr %s198, 2
      %s200 = smul.addr %s199, 4
      %s201 = scalar_lea.vmem %s2, %s200
      %p202 = pneg %p101
      %p203 = pneg %p98
      %p204 = pneg %p129
      %p205 = pneg %p126
      %p206 = scmp.lt.s32.totalorder %s18, 1
      %s207 = scalar_select %p206, %s18, 1
      %p208 = scmp.lt.s32.totalorder %s19, 0
      %s209 = scalar_select %p208, %s19, 0
      %s210 = sadd.s32 %s209, %s207
      %s211 = smul.addr %s210, 4
      %s212 = scalar_lea.vmem %s3, %s211
      %p213 = scmp.lt.s32.totalorder %s18, 1
      %s214 = scalar_select %p213, %s18, 1
      %p215 = scmp.lt.s32.totalorder %s19, 0
      %s216 = scalar_select %p215, %s19, 0
      %s217 = sadd.s32 %s216, %s214
      %s218 = smul.addr %s217, 4
      %s219 = scalar_lea.vmem %s0, %s218
      %p220 = scmp.lt.s32.totalorder %s18, 1
      %s221 = scalar_select %p220, %s18, 1
      %s222 = smul.addr %s221, 2
      %s223 = smul.addr %s222, 4
      %s224 = scalar_lea.vmem %s1, %s223
      %p225 = scmp.lt.s32.totalorder %s18, 1
      %s226 = scalar_select %p225, %s18, 1
      %s227 = smul.addr %s226, 2
      %s228 = smul.addr %s227, 4
      %s229 = scalar_lea.vmem %s2, %s228
      %p230 = scmp.lt.s32.totalorder %s18, 1
      %s231 = scalar_select %p230, %s18, 1
      %p232 = scmp.lt.s32.totalorder %s19, 0
      %s233 = scalar_select %p232, %s19, 0
      %s234 = sadd.s32 %s233, %s231
      %s235 = smul.addr %s234, 4
      %s236 = scalar_lea.vmem %s3, %s235
      %v238 = vld [vmem:[%s219] sm:$0xf]
      %v239 = vld [vmem:[%s224] sm:$0xf]
      %v240 = vld [vmem:[%s224 + $0x4] sm:$0xf]
      %v241 = vld [vmem:[%s229] sm:$0xf]
      %v242 = vld [vmem:[%s229 + $0x4] sm:$0xf]
      %v245 = vunpack.c.l.b16 %v239
      %v246 = vunpack.c.l.b16 %v240
      %v247 = vpack.c.b16 %v246, %v245
      %vm248 = vcmask 64512
      %v250 = vsel %vm248, %v238, 0
      %v253 = vsel %vm248, %v247, 0
      %255 = vmatpush.bf16.xpose.msra.mxu0 0
      %256 = vmatpush.bf16.xpose.msra.mxu0 0
      %257 = vmatpush.bf16.xpose.msra.mxu0 0
      %258 = vmatpush.bf16.xpose.msra.mxu0 0
      %259 = vmatpush.bf16.xpose.msra.mxu0 0
      %260 = vmatpush.bf16.xpose.msra.mxu0 0
      %261 = vmatpush.bf16.xpose.msra.mxu0 0
      %262 = vmatpush.bf16.xpose.msra.mxu0 %v253
      %263 = vmatmul.bf16.gmra.mxu0 %v250
      %v264 = vpop.f32.mrf.mxu0
      %v265 = vadd.f32 0.0, %v264
      %v266 = vpop.f32.mrf.mxu0
      %267 = vdwg.mxu0
      %vm268 = vcmask 130048
      %v269 = vsel %vm268, %v265, -inf
      %270 = vmax.xlane.f32.xlu0 %v269
      %v271 = vpop.xlane.xlu0 %270
      %v272 = vsub.f32 %v265, %v271
      %v273 = vmul.f32 %v272, 1.442695
      %v274 = vpow.pop %v273
      %v275 = vsel %vm268, %v274, 0.0
      %276 = vadd.xlane.f32.xlu0 %v275
      %v277 = vpop.xlane.xlu0 %276
      %v278 = vrcp.pop %v277
      %v279 = vmul.f32 %v274, %v278
      %v280 = vpack.c.bf16 %v279, %v279
      %v283 = vunpack.c.l.b16 %v241
      %v284 = vunpack.c.l.b16 %v242
      %v285 = vpack.c.b16 %v284, %v283
      %v288 = vsel %vm268, %v280, 0
      %290 = vmatpush.bf16.msra.mxu0 0
      %291 = vmatpush.bf16.msra.mxu0 0
      %292 = vmatpush.bf16.msra.mxu0 0
      %293 = vmatpush.bf16.msra.mxu0 0
      %294 = vmatpush.bf16.msra.mxu0 0
      %295 = vmatpush.bf16.msra.mxu0 0
      %296 = vmatpush.bf16.msra.mxu0 0
      %297 = vmatpush.bf16.msra.mxu0 %v285
      %298 = vmatmul.bf16.gmra.mxu0 %v288
      %v299 = vpop.f32.mrf.mxu0
      %v300 = vadd.f32 0.0, %v299
      %v301 = vpop.f32.mrf.mxu0
      %302 = vdwg.mxu0
      %v304 = vunpack.c.l.b16 %v238
      %v305 = vpack.c.b16 %v304, %v304
      %306 = vrot.lane.b32.xlu0 %v305, 120
      %v307 = vpop.permute.xlu0 %306
      %308 = vrot.lane.b32.xlu0 %v247, 120
      %v309 = vpop.permute.xlu0 %308
      %v311 = vsel %vm248, %v307, 0
      %v314 = vsel %vm248, %v309, 0
      %316 = vmatpush.bf16.xpose.msra.mxu0 0
      %317 = vmatpush.bf16.xpose.msra.mxu0 0
      %318 = vmatpush.bf16.xpose.msra.mxu0 0
      %319 = vmatpush.bf16.xpose.msra.mxu0 0
      %320 = vmatpush.bf16.xpose.msra.mxu0 0
      %321 = vmatpush.bf16.xpose.msra.mxu0 0
      %322 = vmatpush.bf16.xpose.msra.mxu0 0
      %323 = vmatpush.bf16.xpose.msra.mxu0 %v314
      %324 = vmatmul.bf16.gmra.mxu0 %v311
      %v325 = vpop.f32.mrf.mxu0
      %v326 = vadd.f32 0.0, %v325
      %v327 = vpop.f32.mrf.mxu0
      %328 = vdwg.mxu0
      %v329 = vsel %vm268, %v326, -inf
      %330 = vmax.xlane.f32.xlu0 %v329
      %v331 = vpop.xlane.xlu0 %330
      %v332 = vsub.f32 %v326, %v331
      %v333 = vmul.f32 %v332, 1.442695
      %v334 = vpow.pop %v333
      %v335 = vsel %vm268, %v334, 0.0
      %336 = vadd.xlane.f32.xlu0 %v335
      %v337 = vpop.xlane.xlu0 %336
      %v338 = vrcp.pop %v337
      %v339 = vmul.f32 %v334, %v338
      %v340 = vpack.c.bf16 %v339, %v339
      %341 = vrot.lane.b32.xlu0 %v285, 120
      %v342 = vpop.permute.xlu0 %341
      %v345 = vsel %vm268, %v340, 0
      %347 = vmatpush.bf16.msra.mxu0 0
      %348 = vmatpush.bf16.msra.mxu0 0
      %349 = vmatpush.bf16.msra.mxu0 0
      %350 = vmatpush.bf16.msra.mxu0 0
      %351 = vmatpush.bf16.msra.mxu0 0
      %352 = vmatpush.bf16.msra.mxu0 0
      %353 = vmatpush.bf16.msra.mxu0 0
      %354 = vmatpush.bf16.msra.mxu0 %v342
      %355 = vmatmul.bf16.gmra.mxu0 %v345
      %v356 = vpop.f32.mrf.mxu0
      %v357 = vadd.f32 0.0, %v356
      %v358 = vpop.f32.mrf.mxu0
      %359 = vdwg.mxu0
      %361 = vrot.lane.b32.xlu0 %v357, 8
      %v362 = vpop.permute.xlu0 %361
      %v364 = vsel %vm248, %v300, %v362
      %v365 = vpack.c.bf16 %v364, %v364
      %vm366 = vcmask 125952
      %367 = vst.msk [vmem:[%s236] sm:$0xf] %vm366, %v365
      %p368 = scmp.lt.s32.totalorder %s18, 1
      %s369 = scalar_select %p368, %s18, 1
      %p370 = scmp.lt.s32.totalorder %s19, 0
      %s371 = scalar_select %p370, %s19, 0
      %s372 = sadd.s32 %s371, %s369
      %s373 = smul.addr %s372, 4
      %s374 = scalar_lea.vmem %s3, %s373
      // Predicated region
      $region33: #{two_way_transformer.33} parent=31 // pred_check
        %p375 = pneg %p126
      $region34: #{two_way_transformer.33} parent=31 // pred_check_branch
        %377 = sbr.rel (%p375) target = $region36
      $region35: #{two_way_transformer.33} parent=31 // pred_region
        _
      $region36: #{two_way_transformer.33} parent=31 // pred_fallthru
        _
    $region32: #{two_way_transformer.33} parent=5 // pred_fallthru
      _
    %p378 = scmp.le.s32.totalorder 2, %s9
    // Predicated region
    $region37: #{two_way_transformer.33} parent=5 // pred_check
      %p379 = pneg %p378
    $region38: #{two_way_transformer.33} parent=5 // pred_check_branch
      %381 = sbr.rel (%p379) target = $region40
    $region39: #{two_way_transformer.33} parent=5 // pred_region
      %s382 = ssub.s32 %s9, 2
      // Predicated region
      $region41: #{two_way_transformer.33} parent=39 // pred_check
        %p383 = pneg %p132
      $region42: #{two_way_transformer.33} parent=39 // pred_check_branch
        %385 = sbr.rel (%p383) target = $region44
      $region43: #{two_way_transformer.33} parent=39 // pred_region
        %p386 = scmp.lt.s32.totalorder %s20, 1
        %s387 = scalar_select %p386, %s20, 1
        %p388 = scmp.lt.s32.totalorder %s21, 0
        %s389 = scalar_select %p388, %s21, 0
        %s390 = sadd.s32 %s389, %s387
        %s391 = smul.addr %s390, 4
        %s392 = scalar_lea.vmem %s3, %s391
      $region44: #{two_way_transformer.33} parent=39 // pred_fallthru
        _
    $region40: #{two_way_transformer.33} parent=5 // pred_fallthru
      _
  $region6: #{two_way_transformer.33} parent=0 // loop_footer
    %s13 = sadd.s32 1, %s9
  $region7: #{two_way_transformer.33} parent=0 // loop_footer_branch
    %8 = sbr.rel target = $region3
  $region8: #{two_way_transformer.33} parent=0 // loop_exit
    _

// kernel: two_way_transformer.34
$region0: #{two_way_transformer.34}
  #allocation0 [shape = 'u32[]', space=smem, size = 0x4, offset = 0x4, fixed_abs, tag = 'smem constant byte address 0x4 - core index']
  #allocation1 [shape = 'u32[72,128]{1,0:T(1,128)}', space=vmem, size = 0x9000, scoped, tag = 'internal scratch']
  %s0 = inlined_call_operand.vmem [shape: bf16[16,16], index: 0, kind: input, shape index: {}]
  %s1 = inlined_call_operand.vmem [shape: bf16[16,32], index: 1, kind: input, shape index: {}]
  %s2 = inlined_call_operand.vmem [shape: f32[1,32], index: 2, kind: input, shape index: {}]
  %s3 = inlined_call_operand.vmem [shape: bf16[16,32], index: 3, kind: input, shape index: {}]
  %s4 = inlined_call_operand.vmem [shape: f32[1,32], index: 4, kind: input, shape index: {}]
  %s5 = inlined_call_operand.vmem [shape: f32[1,32], index: 5, kind: input, shape index: {}]
  %s6 = inlined_call_operand.vmem [shape: bf16[16,32], index: 6, kind: output, shape index: {}]
  %s7 = sld [smem:[#allocation0]]
  $region34: #{two_way_transformer.34} parent=0
    _
  %s9 = ssub.s32 1, %s7
  %s10 = scalar_select 0, %s9, %s7
  // Predicated region
  $region2: #{two_way_transformer.34} parent=0 // pred_check
    _
  $region3: #{two_way_transformer.34} parent=0 // pred_check_branch
    %12 = sbr.rel (0) target = $region5
  $region4: #{two_way_transformer.34} parent=0 // pred_region
    _
  $region5: #{two_way_transformer.34} parent=0 // pred_fallthru
    _
  // Predicated region
  $region6: #{two_way_transformer.34} parent=0 // pred_check
    _
  $region7: #{two_way_transformer.34} parent=0 // pred_check_branch
    %14 = sbr.rel (0) target = $region9
  $region8: #{two_way_transformer.34} parent=0 // pred_region
    _
  $region9: #{two_way_transformer.34} parent=0 // pred_fallthru
    _
  // Predicated region
  $region10: #{two_way_transformer.34} parent=0 // pred_check
    _
  $region11: #{two_way_transformer.34} parent=0 // pred_check_branch
    %16 = sbr.rel (0) target = $region13
  $region12: #{two_way_transformer.34} parent=0 // pred_region
    _
  $region13: #{two_way_transformer.34} parent=0 // pred_fallthru
    _
  // Predicated region
  $region14: #{two_way_transformer.34} parent=0 // pred_check
    _
  $region15: #{two_way_transformer.34} parent=0 // pred_check_branch
    %18 = sbr.rel (0) target = $region17
  $region16: #{two_way_transformer.34} parent=0 // pred_region
    _
  $region17: #{two_way_transformer.34} parent=0 // pred_fallthru
    _
  // Predicated region
  $region18: #{two_way_transformer.34} parent=0 // pred_check
    _
  $region19: #{two_way_transformer.34} parent=0 // pred_check_branch
    %20 = sbr.rel (0) target = $region21
  $region20: #{two_way_transformer.34} parent=0 // pred_region
    _
  $region21: #{two_way_transformer.34} parent=0 // pred_fallthru
    _
  // Predicated region
  $region22: #{two_way_transformer.34} parent=0 // pred_check
    _
  $region23: #{two_way_transformer.34} parent=0 // pred_check_branch
    %22 = sbr.rel (0) target = $region25
  $region24: #{two_way_transformer.34} parent=0 // pred_region
    _
  $region25: #{two_way_transformer.34} parent=0 // pred_fallthru
    _
  %v24 = vld [vmem:[%s0] sm:$0xf]
  %v25 = vld [vmem:[%s0 + $0x4] sm:$0xf]
  %v26 = vld [vmem:[%s1] sm:$0xf]
  %v27 = vld [vmem:[%s1 + $0x4] sm:$0xf]
  %v28 = vld [vmem:[%s2] sm:$0x1]
  %v30 = vperm.slane %v28, 0
  %v34 = vunpack.c.l.b16 %v24
  %v35 = vunpack.c.l.b16 %v25
  %v36 = vpack.c.b16 %v35, %v34
  %v39 = vunpack.c.l.b16 %v26
  %v40 = vunpack.c.l.b16 %v27
  %v41 = vpack.c.b16 %v40, %v39
  %vm43 = vcmask 130048
  %v45 = vsel %vm43, %v36, 0
  %47 = vmatpush.bf16.msra.mxu0 0
  %48 = vmatpush.bf16.msra.mxu0 0
  %49 = vmatpush.bf16.msra.mxu0 0
  %50 = vmatpush.bf16.msra.mxu0 0
  %51 = vmatpush.bf16.msra.mxu0 0
  %52 = vmatpush.bf16.msra.mxu0 0
  %53 = vmatpush.bf16.msra.mxu0 0
  %54 = vmatpush.bf16.msra.mxu0 %v41
  %55 = vmatmul.bf16.gmra.mxu0 %v45
  %v56 = vpop.f32.mrf.mxu0
  %v57 = vadd.f32 %v30, %v56
  %v58 = vpop.f32.mrf.mxu0
  %v59 = vadd.f32 %v30, %v58
  %60 = vdwg.mxu0
  %v61 = vld [vmem:[%s3] sm:$0xf]
  %v62 = vld [vmem:[%s3 + $0x4] sm:$0xf]
  %v63 = vunpack.c.l.bf16 %v61
  %v64 = vunpack.c.l.bf16 %v62
  %v65 = vadd.f32 %v57, %v63
  %v66 = vadd.f32 %v59, %v64
  %vm67 = vcmask 261120
  %v68 = vsel %vm67, %v65, 0.0
  %69 = vadd.xlane.f32.xlu0 %v68
  %v70 = vpop.xlane.xlu0 %69
  %v71 = vsel %vm67, %v66, 0.0
  %72 = vadd.xlane.f32.xlu0 %v71
  %v73 = vpop.xlane.xlu0 %72
  %v74 = vrcp.pop 32.0
  %v75 = vmul.f32 32.0, %v74
  %v76 = vsub.f32 1.0, %v75
  %v77 = vmul.f32 %v74, %v76
  %v78 = vadd.f32 %v74, %v77
  %vm79 = vweird.f32 %v74
  %v80 = vsel %vm79, %v74, %v78
  %v81 = vmul.f32 %v70, %v80
  %v82 = vmul.f32 %v73, %v80
  %v83 = vsub.f32 %v65, %v81
  %v84 = vsub.f32 %v66, %v82
  %v85 = vmul.f32 %v83, %v83
  %v86 = vmul.f32 %v84, %v84
  %v87 = vsel %vm67, %v85, 0.0
  %88 = vadd.xlane.f32.xlu0 %v87
  %v89 = vpop.xlane.xlu0 %88
  %v90 = vsel %vm67, %v86, 0.0
  %91 = vadd.xlane.f32.xlu0 %v90
  %v92 = vpop.xlane.xlu0 %91
  %v93 = vmul.f32 %v89, %v80
  %v94 = vmul.f32 %v92, %v80
  %v95 = vadd.f32 %v93, 1e-05
  %v96 = vadd.f32 %v94, 1e-05
  %v97 = vrsqrt.pop %v95
  %v98 = vmul.f32 %v97, %v95
  %v99 = vmul.f32 %v98, %v97
  %v100 = vmul.f32 0.5, %v99
  %v101 = vsub.f32 1.5, %v100
  %v102 = vmul.f32 %v97, %v101
  %vm103 = vweird.f32 %v95
  %vm104 = vweird.f32 %v97
  %vm105 = vmor %vm103, %vm104
  %v106 = vsel %vm105, %v97, %v102
  %v107 = vrsqrt.pop %v96
  %v108 = vmul.f32 %v107, %v96
  %v109 = vmul.f32 %v108, %v107
  %v110 = vmul.f32 0.5, %v109
  %v111 = vsub.f32 1.5, %v110
  %v112 = vmul.f32 %v107, %v111
  %vm113 = vweird.f32 %v96
  %vm114 = vweird.f32 %v107
  %vm115 = vmor %vm113, %vm114
  %v116 = vsel %vm115, %v107, %v112
  %v117 = vmul.f32 %v83, %v106
  %v118 = vmul.f32 %v84, %v116
  %v119 = vld [vmem:[%s4] sm:$0x1]
  %v121 = vperm.slane %v119, 0
  %v123 = vmul.f32 %v117, %v121
  %v124 = vmul.f32 %v118, %v121
  %v125 = vld [vmem:[%s5] sm:$0x1]
  %v127 = vperm.slane %v125, 0
  %v129 = vadd.f32 %v123, %v127
  %v130 = vadd.f32 %v124, %v127
  %v131 = vpack.c.bf16 %v129, %v129
  %v132 = vpack.c.bf16 %v130, %v130
  %vm133 = vcmask 257024
  %134 = vst.msk [vmem:[%s6] sm:$0xf] %vm133, %v131
  %135 = vst.msk [vmem:[%s6 + $0x4] sm:$0xf] %vm133, %v132
  // Predicated region
  $region26: #{two_way_transformer.34} parent=0 // pred_check
    _
  $region27: #{two_way_transformer.34} parent=0 // pred_check_branch
    %137 = sbr.rel (0) target = $region29
  $region28: #{two_way_transformer.34} parent=0 // pred_region
    _
  $region29: #{two_way_transformer.34} parent=0 // pred_fallthru
    _
  // Predicated region
  $region30: #{two_way_transformer.34} parent=0 // pred_check
    _
  $region31: #{two_way_transformer.34} parent=0 // pred_check_branch
    %139 = sbr.rel (0) target = $region33
  $region32: #{two_way_transformer.34} parent=0 // pred_region
    _
  $region33: #{two_way_transformer.34} parent=0 // pred_fallthru
    _

// kernel: two_way_transformer.32
$region0: #{two_way_transformer.32}
  #allocation0 [shape = 'u32[]', space=smem, size = 0x4, offset = 0x4, fixed_abs, tag = 'smem constant byte address 0x4 - core index']
  #allocation1 [shape = 'u32[72,128]{1,0:T(1,128)}', space=vmem, size = 0x9000, scoped, tag = 'internal scratch']
  %s0 = inlined_call_operand.vmem [shape: bf16[32,32], index: 0, kind: input, shape index: {}]
  %s1 = inlined_call_operand.vmem [shape: bf16[32,32], index: 1, kind: input, shape index: {}]
  %s2 = inlined_call_operand.vmem [shape: bf16[32,16], index: 2, kind: input, shape index: {}]
  %s3 = inlined_call_operand.vmem [shape: f32[1,16], index: 3, kind: input, shape index: {}]
  %s4 = inlined_call_operand.vmem [shape: bf16[32,16], index: 4, kind: input, shape index: {}]
  %s5 = inlined_call_operand.vmem [shape: f32[1,16], index: 5, kind: input, shape index: {}]
  %s6 = inlined_call_operand.vmem [shape: bf16[32,16], index: 6, kind: output, shape index: {0}]
  %s7 = inlined_call_operand.vmem [shape: bf16[32,16], index: 7, kind: output, shape index: {1}]
  %8 = xla_tuple %s6, %s7
  %s9 = sld [smem:[#allocation0]]
  $region42: #{two_way_transformer.32} parent=0
    _
  %s11 = ssub.s32 1, %s9
  %s12 = scalar_select 0, %s11, %s9
  // Predicated region
  $region2: #{two_way_transformer.32} parent=0 // pred_check
    _
  $region3: #{two_way_transformer.32} parent=0 // pred_check_branch
    %14 = sbr.rel (0) target = $region5
  $region4: #{two_way_transformer.32} parent=0 // pred_region
    _
  $region5: #{two_way_transformer.32} parent=0 // pred_fallthru
    _
  // Predicated region
  $region6: #{two_way_transformer.32} parent=0 // pred_check
    _
  $region7: #{two_way_transformer.32} parent=0 // pred_check_branch
    %16 = sbr.rel (0) target = $region9
  $region8: #{two_way_transformer.32} parent=0 // pred_region
    _
  $region9: #{two_way_transformer.32} parent=0 // pred_fallthru
    _
  // Predicated region
  $region10: #{two_way_transformer.32} parent=0 // pred_check
    _
  $region11: #{two_way_transformer.32} parent=0 // pred_check_branch
    %18 = sbr.rel (0) target = $region13
  $region12: #{two_way_transformer.32} parent=0 // pred_region
    _
  $region13: #{two_way_transformer.32} parent=0 // pred_fallthru
    _
  // Predicated region
  $region14: #{two_way_transformer.32} parent=0 // pred_check
    _
  $region15: #{two_way_transformer.32} parent=0 // pred_check_branch
    %20 = sbr.rel (0) target = $region17
  $region16: #{two_way_transformer.32} parent=0 // pred_region
    _
  $region17: #{two_way_transformer.32} parent=0 // pred_fallthru
    _
  // Predicated region
  $region18: #{two_way_transformer.32} parent=0 // pred_check
    _
  $region19: #{two_way_transformer.32} parent=0 // pred_check_branch
    %22 = sbr.rel (0) target = $region21
  $region20: #{two_way_transformer.32} parent=0 // pred_region
    _
  $region21: #{two_way_transformer.32} parent=0 // pred_fallthru
    _
  // Predicated region
  $region22: #{two_way_transformer.32} parent=0 // pred_check
    _
  $region23: #{two_way_transformer.32} parent=0 // pred_check_branch
    %24 = sbr.rel (0) target = $region25
  $region24: #{two_way_transformer.32} parent=0 // pred_region
    _
  $region25: #{two_way_transformer.32} parent=0 // pred_fallthru
    _
  %v26 = vld [vmem:[%s0] sm:$0xf]
  %v27 = vld [vmem:[%s0 + $0x4] sm:$0xf]
  %v28 = vld [vmem:[%s0 + $0x8] sm:$0xf]
  %v29 = vld [vmem:[%s0 + $0xc] sm:$0xf]
  %v30 = vld [vmem:[%s1] sm:$0xf]
  %v31 = vld [vmem:[%s1 + $0x4] sm:$0xf]
  %v32 = vld [vmem:[%s1 + $0x8] sm:$0xf]
  %v33 = vld [vmem:[%s1 + $0xc] sm:$0xf]
  %v34 = vunpack.c.l.bf16 %v26
  %v35 = vunpack.c.l.bf16 %v27
  %v36 = vunpack.c.l.bf16 %v28
  %v37 = vunpack.c.l.bf16 %v29
  %v38 = vunpack.c.l.bf16 %v30
  %v39 = vunpack.c.l.bf16 %v31
  %v40 = vunpack.c.l.bf16 %v32
  %v41 = vunpack.c.l.bf16 %v33
  %v42 = vadd.f32 %v34, %v38
  %v43 = vadd.f32 %v35, %v39
  %v44 = vadd.f32 %v36, %v40
  %v45 = vadd.f32 %v37, %v41
  %v46 = vpack.c.bf16 %v43, %v42
  %v47 = vpack.c.bf16 %v45, %v44
  %v48 = vld [vmem:[%s2] sm:$0xf]
  %v49 = vld [vmem:[%s2 + $0x4] sm:$0xf]
  %v50 = vld [vmem:[%s2 + $0x8] sm:$0xf]
  %v51 = vld [vmem:[%s2 + $0xc] sm:$0xf]
  %v52 = vld [vmem:[%s3] sm:$0x1]
  %v54 = vperm.slane %v52, 0
  %v60 = vunpack.c.l.b16 %v48
  %v61 = vunpack.c.l.b16 %v49
  %v62 = vunpack.c.l.b16 %v50
  %v63 = vunpack.c.l.b16 %v51
  %v64 = vpack.c.b16 %v61, %v60
  %v65 = vpack.c.b16 %v63, %v62
  %vm68 = vcmask 261120
  %v70 = vsel %vm68, %v46, 0
  %v73 = vsel %vm68, %v47, 0
  %75 = vmatpush.bf16.msra.mxu0 0
  %76 = vmatpush.bf16.msra.mxu0 0
  %77 = vmatpush.bf16.msra.mxu0 0
  %78 = vmatpush.bf16.msra.mxu0 0
  %79 = vmatpush.bf16.msra.mxu0 0
  %80 = vmatpush.bf16.msra.mxu0 0
  %81 = vmatpush.bf16.msra.mxu0 %v65
  %82 = vmatpush.bf16.msra.mxu0 %v64
  %83 = vmatmul.bf16.gmra.mxu0 %v70
  %v84 = vpop.f32.mrf.mxu0
  %v85 = vadd.f32 %v54, %v84
  %v86 = vpop.f32.mrf.mxu0
  %v87 = vadd.f32 %v54, %v86
  %88 = vmatmul.bf16.gmra.mxu0 %v73
  %v89 = vpop.f32.mrf.mxu0
  %v90 = vadd.f32 %v54, %v89
  %v91 = vpop.f32.mrf.mxu0
  %v92 = vadd.f32 %v54, %v91
  %93 = vdwg.mxu0
  %v94 = vld [vmem:[%s4] sm:$0xf]
  %v95 = vld [vmem:[%s4 + $0x4] sm:$0xf]
  %v96 = vld [vmem:[%s4 + $0x8] sm:$0xf]
  %v97 = vld [vmem:[%s4 + $0xc] sm:$0xf]
  %v98 = vld [vmem:[%s5] sm:$0x1]
  %v100 = vperm.slane %v98, 0
  %v106 = vunpack.c.l.b16 %v26
  %v107 = vunpack.c.l.b16 %v27
  %v108 = vunpack.c.l.b16 %v28
  %v109 = vunpack.c.l.b16 %v29
  %v110 = vpack.c.b16 %v107, %v106
  %v111 = vpack.c.b16 %v109, %v108
  %v116 = vunpack.c.l.b16 %v94
  %v117 = vunpack.c.l.b16 %v95
  %v118 = vunpack.c.l.b16 %v96
  %v119 = vunpack.c.l.b16 %v97
  %v120 = vpack.c.b16 %v117, %v116
  %v121 = vpack.c.b16 %v119, %v118
  %v125 = vsel %vm68, %v110, 0
  %v128 = vsel %vm68, %v111, 0
  %130 = vmatpush.bf16.msra.mxu0 0
  %131 = vmatpush.bf16.msra.mxu0 0
  %132 = vmatpush.bf16.msra.mxu0 0
  %133 = vmatpush.bf16.msra.mxu0 0
  %134 = vmatpush.bf16.msra.mxu0 0
  %135 = vmatpush.bf16.msra.mxu0 0
  %136 = vmatpush.bf16.msra.mxu0 %v121
  %137 = vmatpush.bf16.msra.mxu0 %v120
  %138 = vmatmul.bf16.gmra.mxu0 %v125
  %v139 = vpop.f32.mrf.mxu0
  %v140 = vadd.f32 %v100, %v139
  %v141 = vpop.f32.mrf.mxu0
  %v142 = vadd.f32 %v100, %v141
  %143 = vmatmul.bf16.gmra.mxu0 %v128
  %v144 = vpop.f32.mrf.mxu0
  %v145 = vadd.f32 %v100, %v144
  %v146 = vpop.f32.mrf.mxu0
  %v147 = vadd.f32 %v100, %v146
  %148 = vdwg.mxu0
  %v149 = vpack.c.bf16 %v85, %v85
  %v150 = vpack.c.bf16 %v87, %v87
  %v151 = vpack.c.bf16 %v90, %v90
  %v152 = vpack.c.bf16 %v92, %v92
  %vm153 = vcmask 125952
  %154 = vst.msk [vmem:[%s6] sm:$0xf] %vm153, %v149
  %155 = vst.msk [vmem:[%s6 + $0x4] sm:$0xf] %vm153, %v150
  %156 = vst.msk [vmem:[%s6 + $0x8] sm:$0xf] %vm153, %v151
  %157 = vst.msk [vmem:[%s6 + $0xc] sm:$0xf] %vm153, %v152
  %v158 = vpack.c.bf16 %v140, %v140
  %v159 = vpack.c.bf16 %v142, %v142
  %v160 = vpack.c.bf16 %v145, %v145
  %v161 = vpack.c.bf16 %v147, %v147
  %162 = vst.msk [vmem:[%s7] sm:$0xf] %vm153, %v158
  %163 = vst.msk [vmem:[%s7 + $0x4] sm:$0xf] %vm153, %v159
  %164 = vst.msk [vmem:[%s7 + $0x8] sm:$0xf] %vm153, %v160
  %165 = vst.msk [vmem:[%s7 + $0xc] sm:$0xf] %vm153, %v161
  // Predicated region
  $region26: #{two_way_transformer.32} parent=0 // pred_check
    _
  $region27: #{two_way_transformer.32} parent=0 // pred_check_branch
    %167 = sbr.rel (0) target = $region29
  $region28: #{two_way_transformer.32} parent=0 // pred_region
    _
  $region29: #{two_way_transformer.32} parent=0 // pred_fallthru
    _
  // Predicated region
  $region30: #{two_way_transformer.32} parent=0 // pred_check
    _
  $region31: #{two_way_transformer.32} parent=0 // pred_check_branch
    %169 = sbr.rel (0) target = $region33
  $region32: #{two_way_transformer.32} parent=0 // pred_region
    _
  $region33: #{two_way_transformer.32} parent=0 // pred_fallthru
    _
  // Predicated region
  $region34: #{two_way_transformer.32} parent=0 // pred_check
    _
  $region35: #{two_way_transformer.32} parent=0 // pred_check_branch
    %171 = sbr.rel (0) target = $region37
  $region36: #{two_way_transformer.32} parent=0 // pred_region
    _
  $region37: #{two_way_transformer.32} parent=0 // pred_fallthru
    _
  // Predicated region
  $region38: #{two_way_transformer.32} parent=0 // pred_check
    _
  $region39: #{two_way_transformer.32} parent=0 // pred_check_branch
    %173 = sbr.rel (0) target = $region41
  $region40: #{two_way_transformer.32} parent=0 // pred_region
    _
  $region41: #{two_way_transformer.32} parent=0 // pred_fallthru
    _

// kernel: two_way_transformer.37
$region0: #{two_way_transformer.37}
  #allocation0 [shape = 'u32[]', space=smem, size = 0x4, offset = 0x4, fixed_abs, tag = 'smem constant byte address 0x4 - core index']
  #allocation1 [shape = 'u32[72,128]{1,0:T(1,128)}', space=vmem, size = 0x9000, scoped, tag = 'internal scratch']
  %s0 = inlined_call_operand.vmem [shape: bf16[16,32], index: 0, kind: input, shape index: {}]
  %s1 = inlined_call_operand.vmem [shape: bf16[16,32], index: 1, kind: input, shape index: {}]
  %s2 = inlined_call_operand.vmem [shape: bf16[32,16], index: 2, kind: input, shape index: {}]
  %s3 = inlined_call_operand.vmem [shape: f32[1,16], index: 3, kind: input, shape index: {}]
  %s4 = inlined_call_operand.vmem [shape: bf16[32,16], index: 4, kind: input, shape index: {}]
  %s5 = inlined_call_operand.vmem [shape: f32[1,16], index: 5, kind: input, shape index: {}]
  %s6 = inlined_call_operand.vmem [shape: bf16[16,16], index: 6, kind: output, shape index: {0}]
  %s7 = inlined_call_operand.vmem [shape: bf16[16,16], index: 7, kind: output, shape index: {1}]
  %8 = xla_tuple %s6, %s7
  %s9 = sld [smem:[#allocation0]]
  $region42: #{two_way_transformer.37} parent=0
    _
  %s11 = ssub.s32 1, %s9
  %s12 = scalar_select 0, %s11, %s9
  // Predicated region
  $region2: #{two_way_transformer.37} parent=0 // pred_check
    _
  $region3: #{two_way_transformer.37} parent=0 // pred_check_branch
    %14 = sbr.rel (0) target = $region5
  $region4: #{two_way_transformer.37} parent=0 // pred_region
    _
  $region5: #{two_way_transformer.37} parent=0 // pred_fallthru
    _
  // Predicated region
  $region6: #{two_way_transformer.37} parent=0 // pred_check
    _
  $region7: #{two_way_transformer.37} parent=0 // pred_check_branch
    %16 = sbr.rel (0) target = $region9
  $region8: #{two_way_transformer.37} parent=0 // pred_region
    _
  $region9: #{two_way_transformer.37} parent=0 // pred_fallthru
    _
  // Predicated region
  $region10: #{two_way_transformer.37} parent=0 // pred_check
    _
  $region11: #{two_way_transformer.37} parent=0 // pred_check_branch
    %18 = sbr.rel (0) target = $region13
  $region12: #{two_way_transformer.37} parent=0 // pred_region
    _
  $region13: #{two_way_transformer.37} parent=0 // pred_fallthru
    _
  // Predicated region
  $region14: #{two_way_transformer.37} parent=0 // pred_check
    _
  $region15: #{two_way_transformer.37} parent=0 // pred_check_branch
    %20 = sbr.rel (0) target = $region17
  $region16: #{two_way_transformer.37} parent=0 // pred_region
    _
  $region17: #{two_way_transformer.37} parent=0 // pred_fallthru
    _
  // Predicated region
  $region18: #{two_way_transformer.37} parent=0 // pred_check
    _
  $region19: #{two_way_transformer.37} parent=0 // pred_check_branch
    %22 = sbr.rel (0) target = $region21
  $region20: #{two_way_transformer.37} parent=0 // pred_region
    _
  $region21: #{two_way_transformer.37} parent=0 // pred_fallthru
    _
  // Predicated region
  $region22: #{two_way_transformer.37} parent=0 // pred_check
    _
  $region23: #{two_way_transformer.37} parent=0 // pred_check_branch
    %24 = sbr.rel (0) target = $region25
  $region24: #{two_way_transformer.37} parent=0 // pred_region
    _
  $region25: #{two_way_transformer.37} parent=0 // pred_fallthru
    _
  %v26 = vld [vmem:[%s0] sm:$0xf]
  %v27 = vld [vmem:[%s0 + $0x4] sm:$0xf]
  %v28 = vld [vmem:[%s1] sm:$0xf]
  %v29 = vld [vmem:[%s1 + $0x4] sm:$0xf]
  %v30 = vunpack.c.l.bf16 %v26
  %v31 = vunpack.c.l.bf16 %v27
  %v32 = vunpack.c.l.bf16 %v28
  %v33 = vunpack.c.l.bf16 %v29
  %v34 = vadd.f32 %v30, %v32
  %v35 = vadd.f32 %v31, %v33
  %v36 = vpack.c.bf16 %v35, %v34
  %v37 = vld [vmem:[%s2] sm:$0xf]
  %v38 = vld [vmem:[%s2 + $0x4] sm:$0xf]
  %v39 = vld [vmem:[%s2 + $0x8] sm:$0xf]
  %v40 = vld [vmem:[%s2 + $0xc] sm:$0xf]
  %v41 = vld [vmem:[%s3] sm:$0x1]
  %v43 = vperm.slane %v41, 0
  %v49 = vunpack.c.l.b16 %v37
  %v50 = vunpack.c.l.b16 %v38
  %v51 = vunpack.c.l.b16 %v39
  %v52 = vunpack.c.l.b16 %v40
  %v53 = vpack.c.b16 %v50, %v49
  %v54 = vpack.c.b16 %v52, %v51
  %vm57 = vcmask 261120
  %v59 = vsel %vm57, %v36, 0
  %61 = vmatpush.bf16.msra.mxu0 0
  %62 = vmatpush.bf16.msra.mxu0 0
  %63 = vmatpush.bf16.msra.mxu0 0
  %64 = vmatpush.bf16.msra.mxu0 0
  %65 = vmatpush.bf16.msra.mxu0 0
  %66 = vmatpush.bf16.msra.mxu0 0
  %67 = vmatpush.bf16.msra.mxu0 %v54
  %68 = vmatpush.bf16.msra.mxu0 %v53
  %69 = vmatmul.bf16.gmra.mxu0 %v59
  %v70 = vpop.f32.mrf.mxu0
  %v71 = vadd.f32 %v43, %v70
  %v72 = vpop.f32.mrf.mxu0
  %v73 = vadd.f32 %v43, %v72
  %74 = vdwg.mxu0
  %v75 = vld [vmem:[%s4] sm:$0xf]
  %v76 = vld [vmem:[%s4 + $0x4] sm:$0xf]
  %v77 = vld [vmem:[%s4 + $0x8] sm:$0xf]
  %v78 = vld [vmem:[%s4 + $0xc] sm:$0xf]
  %v79 = vld [vmem:[%s5] sm:$0x1]
  %v81 = vperm.slane %v79, 0
  %v85 = vunpack.c.l.b16 %v26
  %v86 = vunpack.c.l.b16 %v27
  %v87 = vpack.c.b16 %v86, %v85
  %v92 = vunpack.c.l.b16 %v75
  %v93 = vunpack.c.l.b16 %v76
  %v94 = vunpack.c.l.b16 %v77
  %v95 = vunpack.c.l.b16 %v78
  %v96 = vpack.c.b16 %v93, %v92
  %v97 = vpack.c.b16 %v95, %v94
  %v101 = vsel %vm57, %v87, 0
  %103 = vmatpush.bf16.msra.mxu0 0
  %104 = vmatpush.bf16.msra.mxu0 0
  %105 = vmatpush.bf16.msra.mxu0 0
  %106 = vmatpush.bf16.msra.mxu0 0
  %107 = vmatpush.bf16.msra.mxu0 0
  %108 = vmatpush.bf16.msra.mxu0 0
  %109 = vmatpush.bf16.msra.mxu0 %v97
  %110 = vmatpush.bf16.msra.mxu0 %v96
  %111 = vmatmul.bf16.gmra.mxu0 %v101
  %v112 = vpop.f32.mrf.mxu0
  %v113 = vadd.f32 %v81, %v112
  %v114 = vpop.f32.mrf.mxu0
  %v115 = vadd.f32 %v81, %v114
  %116 = vdwg.mxu0
  %v117 = vpack.c.bf16 %v71, %v71
  %v118 = vpack.c.bf16 %v73, %v73
  %vm119 = vcmask 125952
  %120 = vst.msk [vmem:[%s6] sm:$0xf] %vm119, %v117
  %121 = vst.msk [vmem:[%s6 + $0x4] sm:$0xf] %vm119, %v118
  %v122 = vpack.c.bf16 %v113, %v113
  %v123 = vpack.c.bf16 %v115, %v115
  %124 = vst.msk [vmem:[%s7] sm:$0xf] %vm119, %v122
  %125 = vst.msk [vmem:[%s7 + $0x4] sm:$0xf] %vm119, %v123
  // Predicated region
  $region26: #{two_way_transformer.37} parent=0 // pred_check
    _
  $region27: #{two_way_transformer.37} parent=0 // pred_check_branch
    %127 = sbr.rel (0) target = $region29
  $region28: #{two_way_transformer.37} parent=0 // pred_region
    _
  $region29: #{two_way_transformer.37} parent=0 // pred_fallthru
    _
  // Predicated region
  $region30: #{two_way_transformer.37} parent=0 // pred_check
    _
  $region31: #{two_way_transformer.37} parent=0 // pred_check_branch
    %129 = sbr.rel (0) target = $region33
  $region32: #{two_way_transformer.37} parent=0 // pred_region
    _
  $region33: #{two_way_transformer.37} parent=0 // pred_fallthru
    _
  // Predicated region
  $region34: #{two_way_transformer.37} parent=0 // pred_check
    _
  $region35: #{two_way_transformer.37} parent=0 // pred_check_branch
    %131 = sbr.rel (0) target = $region37
  $region36: #{two_way_transformer.37} parent=0 // pred_region
    _
  $region37: #{two_way_transformer.37} parent=0 // pred_fallthru
    _
  // Predicated region
  $region38: #{two_way_transformer.37} parent=0 // pred_check
    _
  $region39: #{two_way_transformer.37} parent=0 // pred_check_branch
    %133 = sbr.rel (0) target = $region41
  $region40: #{two_way_transformer.37} parent=0 // pred_region
    _
  $region41: #{two_way_transformer.37} parent=0 // pred_fallthru
    _

// kernel: two_way_transformer.35
$region0: #{two_way_transformer.35}
  #allocation0 [shape = 'u32[]', space=smem, size = 0x4, offset = 0x4, fixed_abs, tag = 'smem constant byte address 0x4 - core index']
  #allocation1 [shape = 'u32[72,128]{1,0:T(1,128)}', space=vmem, size = 0x9000, scoped, tag = 'internal scratch']
  %s0 = inlined_call_operand.vmem [shape: bf16[16,32], index: 0, kind: input, shape index: {}, may-alias: {0,5}]
  %s1 = inlined_call_operand.vmem [shape: bf16[32,64], index: 1, kind: input, shape index: {}]
  %s2 = inlined_call_operand.vmem [shape: f32[1,64], index: 2, kind: input, shape index: {}]
  %s3 = inlined_call_operand.vmem [shape: bf16[64,32], index: 3, kind: input, shape index: {}]
  %s4 = inlined_call_operand.vmem [shape: f32[1,32], index: 4, kind: input, shape index: {}]
  %s5 = inlined_call_operand.vmem [shape: bf16[16,32], index: 5, kind: input, shape index: {}, may-alias: {0,5}]
  %s6 = inlined_call_operand.vmem [shape: f32[1,32], index: 6, kind: input, shape index: {}]
  %s7 = inlined_call_operand.vmem [shape: f32[1,32], index: 7, kind: input, shape index: {}]
  %s8 = inlined_call_operand.vmem [shape: bf16[16,32], index: 8, kind: output, shape index: {}]
  %s9 = sld [smem:[#allocation0]]
  $region42: #{two_way_transformer.35} parent=0
    _
  %s11 = ssub.s32 1, %s9
  %s12 = scalar_select 0, %s11, %s9
  // Predicated region
  $region2: #{two_way_transformer.35} parent=0 // pred_check
    _
  $region3: #{two_way_transformer.35} parent=0 // pred_check_branch
    %14 = sbr.rel (0) target = $region5
  $region4: #{two_way_transformer.35} parent=0 // pred_region
    _
  $region5: #{two_way_transformer.35} parent=0 // pred_fallthru
    _
  // Predicated region
  $region6: #{two_way_transformer.35} parent=0 // pred_check
    _
  $region7: #{two_way_transformer.35} parent=0 // pred_check_branch
    %16 = sbr.rel (0) target = $region9
  $region8: #{two_way_transformer.35} parent=0 // pred_region
    _
  $region9: #{two_way_transformer.35} parent=0 // pred_fallthru
    _
  // Predicated region
  $region10: #{two_way_transformer.35} parent=0 // pred_check
    _
  $region11: #{two_way_transformer.35} parent=0 // pred_check_branch
    %18 = sbr.rel (0) target = $region13
  $region12: #{two_way_transformer.35} parent=0 // pred_region
    _
  $region13: #{two_way_transformer.35} parent=0 // pred_fallthru
    _
  // Predicated region
  $region14: #{two_way_transformer.35} parent=0 // pred_check
    _
  $region15: #{two_way_transformer.35} parent=0 // pred_check_branch
    %20 = sbr.rel (0) target = $region17
  $region16: #{two_way_transformer.35} parent=0 // pred_region
    _
  $region17: #{two_way_transformer.35} parent=0 // pred_fallthru
    _
  // Predicated region
  $region18: #{two_way_transformer.35} parent=0 // pred_check
    _
  $region19: #{two_way_transformer.35} parent=0 // pred_check_branch
    %22 = sbr.rel (0) target = $region21
  $region20: #{two_way_transformer.35} parent=0 // pred_region
    _
  $region21: #{two_way_transformer.35} parent=0 // pred_fallthru
    _
  // Predicated region
  $region22: #{two_way_transformer.35} parent=0 // pred_check
    _
  $region23: #{two_way_transformer.35} parent=0 // pred_check_branch
    %24 = sbr.rel (0) target = $region25
  $region24: #{two_way_transformer.35} parent=0 // pred_region
    _
  $region25: #{two_way_transformer.35} parent=0 // pred_fallthru
    _
  // Predicated region
  $region26: #{two_way_transformer.35} parent=0 // pred_check
    _
  $region27: #{two_way_transformer.35} parent=0 // pred_check_branch
    %26 = sbr.rel (0) target = $region29
  $region28: #{two_way_transformer.35} parent=0 // pred_region
    _
  $region29: #{two_way_transformer.35} parent=0 // pred_fallthru
    _
  // Predicated region
  $region30: #{two_way_transformer.35} parent=0 // pred_check
    _
  $region31: #{two_way_transformer.35} parent=0 // pred_check_branch
    %28 = sbr.rel (0) target = $region33
  $region32: #{two_way_transformer.35} parent=0 // pred_region
    _
  $region33: #{two_way_transformer.35} parent=0 // pred_fallthru
    _
  %v30 = vld [vmem:[%s0] sm:$0xf]
  %v31 = vld [vmem:[%s0 + $0x4] sm:$0xf]
  %v32 = vld [vmem:[%s1] sm:$0xf]
  %v33 = vld [vmem:[%s1 + $0x4] sm:$0xf]
  %v34 = vld [vmem:[%s1 + $0x8] sm:$0xf]
  %v35 = vld [vmem:[%s1 + $0xc] sm:$0xf]
  %v36 = vld [vmem:[%s2] sm:$0x1]
  %v38 = vperm.slane %v36, 0
  %v42 = vunpack.c.l.b16 %v30
  %v43 = vunpack.c.l.b16 %v31
  %v44 = vpack.c.b16 %v43, %v42
  %v49 = vunpack.c.l.b16 %v32
  %v50 = vunpack.c.l.b16 %v33
  %v51 = vunpack.c.l.b16 %v34
  %v52 = vunpack.c.l.b16 %v35
  %v53 = vpack.c.b16 %v50, %v49
  %v54 = vpack.c.b16 %v52, %v51
  %vm57 = vcmask 261120
  %v59 = vsel %vm57, %v44, 0
  %61 = vmatpush.bf16.msra.mxu0 0
  %62 = vmatpush.bf16.msra.mxu0 0
  %63 = vmatpush.bf16.msra.mxu0 0
  %64 = vmatpush.bf16.msra.mxu0 0
  %65 = vmatpush.bf16.msra.mxu0 0
  %66 = vmatpush.bf16.msra.mxu0 0
  %67 = vmatpush.bf16.msra.mxu0 %v54
  %68 = vmatpush.bf16.msra.mxu0 %v53
  %69 = vmatmul.bf16.gmra.mxu0 %v59
  %v70 = vpop.f32.mrf.mxu0
  %v71 = vadd.f32 %v38, %v70
  %v72 = vpop.f32.mrf.mxu0
  %v73 = vadd.f32 %v38, %v72
  %74 = vdwg.mxu0
  %v75 = vmax.f32 %v71, 0.0
  %v76 = vmax.f32 %v73, 0.0
  %v77 = vpack.c.bf16 %v76, %v75
  %v78 = vld [vmem:[%s3] sm:$0xf]
  %v79 = vld [vmem:[%s3 + $0x4] sm:$0xf]
  %v80 = vld [vmem:[%s3 + $0x8] sm:$0xf]
  %v81 = vld [vmem:[%s3 + $0xc] sm:$0xf]
  %v82 = vld [vmem:[%s3 + $0x10] sm:$0xf]
  %v83 = vld [vmem:[%s3 + $0x14] sm:$0xf]
  %v84 = vld [vmem:[%s3 + $0x18] sm:$0xf]
  %v85 = vld [vmem:[%s3 + $0x1c] sm:$0xf]
  %v86 = vld [vmem:[%s4] sm:$0x1]
  %v88 = vperm.slane %v86, 0
  %v98 = vunpack.c.l.b16 %v78
  %v99 = vunpack.c.l.b16 %v79
  %v100 = vunpack.c.l.b16 %v80
  %v101 = vunpack.c.l.b16 %v81
  %v102 = vunpack.c.l.b16 %v82
  %v103 = vunpack.c.l.b16 %v83
  %v104 = vunpack.c.l.b16 %v84
  %v105 = vunpack.c.l.b16 %v85
  %v106 = vpack.c.b16 %v99, %v98
  %v107 = vpack.c.b16 %v101, %v100
  %v108 = vpack.c.b16 %v103, %v102
  %v109 = vpack.c.b16 %v105, %v104
  %vm114 = vcmask 523264
  %v116 = vsel %vm114, %v77, 0
  %118 = vmatpush.bf16.msra.mxu0 0
  %119 = vmatpush.bf16.msra.mxu0 0
  %120 = vmatpush.bf16.msra.mxu0 0
  %121 = vmatpush.bf16.msra.mxu0 0
  %122 = vmatpush.bf16.msra.mxu0 %v109
  %123 = vmatpush.bf16.msra.mxu0 %v108
  %124 = vmatpush.bf16.msra.mxu0 %v107
  %125 = vmatpush.bf16.msra.mxu0 %v106
  %126 = vmatmul.bf16.gmra.mxu0 %v116
  %v127 = vpop.f32.mrf.mxu0
  %v128 = vadd.f32 %v88, %v127
  %v129 = vpop.f32.mrf.mxu0
  %v130 = vadd.f32 %v88, %v129
  %131 = vdwg.mxu0
  %v132 = vld [vmem:[%s5] sm:$0xf]
  %v133 = vld [vmem:[%s5 + $0x4] sm:$0xf]
  %v134 = vunpack.c.l.bf16 %v132
  %v135 = vunpack.c.l.bf16 %v133
  %v136 = vadd.f32 %v128, %v134
  %v137 = vadd.f32 %v130, %v135
  %v138 = vsel %vm57, %v136, 0.0
  %139 = vadd.xlane.f32.xlu0 %v138
  %v140 = vpop.xlane.xlu0 %139
  %v141 = vsel %vm57, %v137, 0.0
  %142 = vadd.xlane.f32.xlu0 %v141
  %v143 = vpop.xlane.xlu0 %142
  %v144 = vrcp.pop 32.0
  %v145 = vmul.f32 32.0, %v144
  %v146 = vsub.f32 1.0, %v145
  %v147 = vmul.f32 %v144, %v146
  %v148 = vadd.f32 %v144, %v147
  %vm149 = vweird.f32 %v144
  %v150 = vsel %vm149, %v144, %v148
  %v151 = vmul.f32 %v140, %v150
  %v152 = vmul.f32 %v143, %v150
  %v153 = vsub.f32 %v136, %v151
  %v154 = vsub.f32 %v137, %v152
  %v155 = vmul.f32 %v153, %v153
  %v156 = vmul.f32 %v154, %v154
  %v157 = vsel %vm57, %v155, 0.0
  %158 = vadd.xlane.f32.xlu0 %v157
  %v159 = vpop.xlane.xlu0 %158
  %v160 = vsel %vm57, %v156, 0.0
  %161 = vadd.xlane.f32.xlu0 %v160
  %v162 = vpop.xlane.xlu0 %161
  %v163 = vmul.f32 %v159, %v150
  %v164 = vmul.f32 %v162, %v150
  %v165 = vadd.f32 %v163, 1e-05
  %v166 = vadd.f32 %v164, 1e-05
  %v167 = vrsqrt.pop %v165
  %v168 = vmul.f32 %v167, %v165
  %v169 = vmul.f32 %v168, %v167
  %v170 = vmul.f32 0.5, %v169
  %v171 = vsub.f32 1.5, %v170
  %v172 = vmul.f32 %v167, %v171
  %vm173 = vweird.f32 %v165
  %vm174 = vweird.f32 %v167
  %vm175 = vmor %vm173, %vm174
  %v176 = vsel %vm175, %v167, %v172
  %v177 = vrsqrt.pop %v166
  %v178 = vmul.f32 %v177, %v166
  %v179 = vmul.f32 %v178, %v177
  %v180 = vmul.f32 0.5, %v179
  %v181 = vsub.f32 1.5, %v180
  %v182 = vmul.f32 %v177, %v181
  %vm183 = vweird.f32 %v166
  %vm184 = vweird.f32 %v177
  %vm185 = vmor %vm183, %vm184
  %v186 = vsel %vm185, %v177, %v182
  %v187 = vmul.f32 %v153, %v176
  %v188 = vmul.f32 %v154, %v186
  %v189 = vld [vmem:[%s6] sm:$0x1]
  %v191 = vperm.slane %v189, 0
  %v193 = vmul.f32 %v187, %v191
  %v194 = vmul.f32 %v188, %v191
  %v195 = vld [vmem:[%s7] sm:$0x1]
  %v197 = vperm.slane %v195, 0
  %v199 = vadd.f32 %v193, %v197
  %v200 = vadd.f32 %v194, %v197
  %v201 = vpack.c.bf16 %v199, %v199
  %v202 = vpack.c.bf16 %v200, %v200
  %vm203 = vcmask 257024
  %204 = vst.msk [vmem:[%s8] sm:$0xf] %vm203, %v201
  %205 = vst.msk [vmem:[%s8 + $0x4] sm:$0xf] %vm203, %v202
  // Predicated region
  $region34: #{two_way_transformer.35} parent=0 // pred_check
    _
  $region35: #{two_way_transformer.35} parent=0 // pred_check_branch
    %207 = sbr.rel (0) target = $region37
  $region36: #{two_way_transformer.35} parent=0 // pred_region
    _
  $region37: #{two_way_transformer.35} parent=0 // pred_fallthru
    _
  // Predicated region
  $region38: #{two_way_transformer.35} parent=0 // pred_check
    _
  $region39: #{two_way_transformer.35} parent=0 // pred_check_branch
    %209 = sbr.rel (0) target = $region41
  $region40: #{two_way_transformer.35} parent=0 // pred_region
    _
  $region41: #{two_way_transformer.35} parent=0 // pred_fallthru
    _

// kernel: two_way_transformer.42
$region0: #{two_way_transformer.42}
  #allocation0 [shape = 'u32[]', space=smem, size = 0x4, offset = 0x4, fixed_abs, tag = 'smem constant byte address 0x4 - core index']
  #allocation1 [shape = 'u32[72,128]{1,0:T(1,128)}', space=vmem, size = 0x9000, scoped, tag = 'internal scratch']
  %s0 = inlined_call_operand.vmem [shape: bf16[16,32], index: 0, kind: input, shape index: {}]
  %s1 = inlined_call_operand.vmem [shape: bf16[32,32], index: 1, kind: input, shape index: {}]
  %s2 = inlined_call_operand.vmem [shape: f32[1,32], index: 2, kind: input, shape index: {}]
  %s3 = inlined_call_operand.vmem [shape: bf16[16,32], index: 3, kind: input, shape index: {}]
  %s4 = inlined_call_operand.vmem [shape: f32[1,32], index: 4, kind: input, shape index: {}]
  %s5 = inlined_call_operand.vmem [shape: f32[1,32], index: 5, kind: input, shape index: {}]
  %s6 = inlined_call_operand.vmem [shape: bf16[16,32], index: 6, kind: output, shape index: {}]
  %s7 = sld [smem:[#allocation0]]
  $region34: #{two_way_transformer.42} parent=0
    _
  %s9 = ssub.s32 1, %s7
  %s10 = scalar_select 0, %s9, %s7
  // Predicated region
  $region2: #{two_way_transformer.42} parent=0 // pred_check
    _
  $region3: #{two_way_transformer.42} parent=0 // pred_check_branch
    %12 = sbr.rel (0) target = $region5
  $region4: #{two_way_transformer.42} parent=0 // pred_region
    _
  $region5: #{two_way_transformer.42} parent=0 // pred_fallthru
    _
  // Predicated region
  $region6: #{two_way_transformer.42} parent=0 // pred_check
    _
  $region7: #{two_way_transformer.42} parent=0 // pred_check_branch
    %14 = sbr.rel (0) target = $region9
  $region8: #{two_way_transformer.42} parent=0 // pred_region
    _
  $region9: #{two_way_transformer.42} parent=0 // pred_fallthru
    _
  // Predicated region
  $region10: #{two_way_transformer.42} parent=0 // pred_check
    _
  $region11: #{two_way_transformer.42} parent=0 // pred_check_branch
    %16 = sbr.rel (0) target = $region13
  $region12: #{two_way_transformer.42} parent=0 // pred_region
    _
  $region13: #{two_way_transformer.42} parent=0 // pred_fallthru
    _
  // Predicated region
  $region14: #{two_way_transformer.42} parent=0 // pred_check
    _
  $region15: #{two_way_transformer.42} parent=0 // pred_check_branch
    %18 = sbr.rel (0) target = $region17
  $region16: #{two_way_transformer.42} parent=0 // pred_region
    _
  $region17: #{two_way_transformer.42} parent=0 // pred_fallthru
    _
  // Predicated region
  $region18: #{two_way_transformer.42} parent=0 // pred_check
    _
  $region19: #{two_way_transformer.42} parent=0 // pred_check_branch
    %20 = sbr.rel (0) target = $region21
  $region20: #{two_way_transformer.42} parent=0 // pred_region
    _
  $region21: #{two_way_transformer.42} parent=0 // pred_fallthru
    _
  // Predicated region
  $region22: #{two_way_transformer.42} parent=0 // pred_check
    _
  $region23: #{two_way_transformer.42} parent=0 // pred_check_branch
    %22 = sbr.rel (0) target = $region25
  $region24: #{two_way_transformer.42} parent=0 // pred_region
    _
  $region25: #{two_way_transformer.42} parent=0 // pred_fallthru
    _
  %v24 = vld [vmem:[%s0] sm:$0xf]
  %v25 = vld [vmem:[%s0 + $0x4] sm:$0xf]
  %v26 = vld [vmem:[%s1] sm:$0xf]
  %v27 = vld [vmem:[%s1 + $0x4] sm:$0xf]
  %v28 = vld [vmem:[%s1 + $0x8] sm:$0xf]
  %v29 = vld [vmem:[%s1 + $0xc] sm:$0xf]
  %v30 = vld [vmem:[%s2] sm:$0x1]
  %v32 = vperm.slane %v30, 0
  %v36 = vunpack.c.l.b16 %v24
  %v37 = vunpack.c.l.b16 %v25
  %v38 = vpack.c.b16 %v37, %v36
  %v43 = vunpack.c.l.b16 %v26
  %v44 = vunpack.c.l.b16 %v27
  %v45 = vunpack.c.l.b16 %v28
  %v46 = vunpack.c.l.b16 %v29
  %v47 = vpack.c.b16 %v44, %v43
  %v48 = vpack.c.b16 %v46, %v45
  %vm51 = vcmask 261120
  %v53 = vsel %vm51, %v38, 0
  %55 = vmatpush.bf16.msra.mxu0 0
  %56 = vmatpush.bf16.msra.mxu0 0
  %57 = vmatpush.bf16.msra.mxu0 0
  %58 = vmatpush.bf16.msra.mxu0 0
  %59 = vmatpush.bf16.msra.mxu0 0
  %60 = vmatpush.bf16.msra.mxu0 0
  %61 = vmatpush.bf16.msra.mxu0 %v48
  %62 = vmatpush.bf16.msra.mxu0 %v47
  %63 = vmatmul.bf16.gmra.mxu0 %v53
  %v64 = vpop.f32.mrf.mxu0
  %v65 = vadd.f32 %v32, %v64
  %v66 = vpop.f32.mrf.mxu0
  %v67 = vadd.f32 %v32, %v66
  %68 = vdwg.mxu0
  %v69 = vld [vmem:[%s3] sm:$0xf]
  %v70 = vld [vmem:[%s3 + $0x4] sm:$0xf]
  %v71 = vunpack.c.l.bf16 %v69
  %v72 = vunpack.c.l.bf16 %v70
  %v73 = vadd.f32 %v65, %v71
  %v74 = vadd.f32 %v67, %v72
  %v75 = vsel %vm51, %v73, 0.0
  %76 = vadd.xlane.f32.xlu0 %v75
  %v77 = vpop.xlane.xlu0 %76
  %v78 = vsel %vm51, %v74, 0.0
  %79 = vadd.xlane.f32.xlu0 %v78
  %v80 = vpop.xlane.xlu0 %79
  %v81 = vrcp.pop 32.0
  %v82 = vmul.f32 32.0, %v81
  %v83 = vsub.f32 1.0, %v82
  %v84 = vmul.f32 %v81, %v83
  %v85 = vadd.f32 %v81, %v84
  %vm86 = vweird.f32 %v81
  %v87 = vsel %vm86, %v81, %v85
  %v88 = vmul.f32 %v77, %v87
  %v89 = vmul.f32 %v80, %v87
  %v90 = vsub.f32 %v73, %v88
  %v91 = vsub.f32 %v74, %v89
  %v92 = vmul.f32 %v90, %v90
  %v93 = vmul.f32 %v91, %v91
  %v94 = vsel %vm51, %v92, 0.0
  %95 = vadd.xlane.f32.xlu0 %v94
  %v96 = vpop.xlane.xlu0 %95
  %v97 = vsel %vm51, %v93, 0.0
  %98 = vadd.xlane.f32.xlu0 %v97
  %v99 = vpop.xlane.xlu0 %98
  %v100 = vmul.f32 %v96, %v87
  %v101 = vmul.f32 %v99, %v87
  %v102 = vadd.f32 %v100, 1e-05
  %v103 = vadd.f32 %v101, 1e-05
  %v104 = vrsqrt.pop %v102
  %v105 = vmul.f32 %v104, %v102
  %v106 = vmul.f32 %v105, %v104
  %v107 = vmul.f32 0.5, %v106
  %v108 = vsub.f32 1.5, %v107
  %v109 = vmul.f32 %v104, %v108
  %vm110 = vweird.f32 %v102
  %vm111 = vweird.f32 %v104
  %vm112 = vmor %vm110, %vm111
  %v113 = vsel %vm112, %v104, %v109
  %v114 = vrsqrt.pop %v103
  %v115 = vmul.f32 %v114, %v103
  %v116 = vmul.f32 %v115, %v114
  %v117 = vmul.f32 0.5, %v116
  %v118 = vsub.f32 1.5, %v117
  %v119 = vmul.f32 %v114, %v118
  %vm120 = vweird.f32 %v103
  %vm121 = vweird.f32 %v114
  %vm122 = vmor %vm120, %vm121
  %v123 = vsel %vm122, %v114, %v119
  %v124 = vmul.f32 %v90, %v113
  %v125 = vmul.f32 %v91, %v123
  %v126 = vld [vmem:[%s4] sm:$0x1]
  %v128 = vperm.slane %v126, 0
  %v130 = vmul.f32 %v124, %v128
  %v131 = vmul.f32 %v125, %v128
  %v132 = vld [vmem:[%s5] sm:$0x1]
  %v134 = vperm.slane %v132, 0
  %v136 = vadd.f32 %v130, %v134
  %v137 = vadd.f32 %v131, %v134
  %v138 = vpack.c.bf16 %v136, %v136
  %v139 = vpack.c.bf16 %v137, %v137
  %vm140 = vcmask 257024
  %141 = vst.msk [vmem:[%s6] sm:$0xf] %vm140, %v138
  %142 = vst.msk [vmem:[%s6 + $0x4] sm:$0xf] %vm140, %v139
  // Predicated region
  $region26: #{two_way_transformer.42} parent=0 // pred_check
    _
  $region27: #{two_way_transformer.42} parent=0 // pred_check_branch
    %144 = sbr.rel (0) target = $region29
  $region28: #{two_way_transformer.42} parent=0 // pred_region
    _
  $region29: #{two_way_transformer.42} parent=0 // pred_fallthru
    _
  // Predicated region
  $region30: #{two_way_transformer.42} parent=0 // pred_check
    _
  $region31: #{two_way_transformer.42} parent=0 // pred_check_branch
    %146 = sbr.rel (0) target = $region33
  $region32: #{two_way_transformer.42} parent=0 // pred_region
    _
  $region33: #{two_way_transformer.42} parent=0 // pred_fallthru
    _

// kernel: two_way_transformer.40
$region0: #{two_way_transformer.40}
  #allocation0 [shape = 'u32[]', space=smem, size = 0x4, offset = 0x4, fixed_abs, tag = 'smem constant byte address 0x4 - core index']
  #allocation1 [shape = 'u32[72,128]{1,0:T(1,128)}', space=vmem, size = 0x9000, scoped, tag = 'internal scratch']
  %s0 = inlined_call_operand.vmem [shape: bf16[16,32], index: 0, kind: input, shape index: {}]
  %s1 = inlined_call_operand.vmem [shape: bf16[16,32], index: 1, kind: input, shape index: {}]
  %s2 = inlined_call_operand.vmem [shape: bf16[32,32], index: 2, kind: input, shape index: {}]
  %s3 = inlined_call_operand.vmem [shape: f32[1,32], index: 3, kind: input, shape index: {}]
  %s4 = inlined_call_operand.vmem [shape: bf16[32,32], index: 4, kind: input, shape index: {}]
  %s5 = inlined_call_operand.vmem [shape: f32[1,32], index: 5, kind: input, shape index: {}]
  %s6 = inlined_call_operand.vmem [shape: bf16[32,32], index: 6, kind: input, shape index: {}]
  %s7 = inlined_call_operand.vmem [shape: f32[1,32], index: 7, kind: input, shape index: {}]
  %s8 = inlined_call_operand.vmem [shape: bf16[16,32], index: 8, kind: output, shape index: {0}]
  %s9 = inlined_call_operand.vmem [shape: bf16[16,32], index: 9, kind: output, shape index: {1}]
  %s10 = inlined_call_operand.vmem [shape: bf16[16,32], index: 10, kind: output, shape index: {2}]
  %11 = xla_tuple %s8, %s9, %s10
  %s12 = sld [smem:[#allocation0]]
  $region58: #{two_way_transformer.40} parent=0
    _
  %s14 = ssub.s32 1, %s12
  %s15 = scalar_select 0, %s14, %s12
  // Predicated region
  $region2: #{two_way_transformer.40} parent=0 // pred_check
    _
  $region3: #{two_way_transformer.40} parent=0 // pred_check_branch
    %17 = sbr.rel (0) target = $region5
  $region4: #{two_way_transformer.40} parent=0 // pred_region
    _
  $region5: #{two_way_transformer.40} parent=0 // pred_fallthru
    _
  // Predicated region
  $region6: #{two_way_transformer.40} parent=0 // pred_check
    _
  $region7: #{two_way_transformer.40} parent=0 // pred_check_branch
    %19 = sbr.rel (0) target = $region9
  $region8: #{two_way_transformer.40} parent=0 // pred_region
    _
  $region9: #{two_way_transformer.40} parent=0 // pred_fallthru
    _
  // Predicated region
  $region10: #{two_way_transformer.40} parent=0 // pred_check
    _
  $region11: #{two_way_transformer.40} parent=0 // pred_check_branch
    %21 = sbr.rel (0) target = $region13
  $region12: #{two_way_transformer.40} parent=0 // pred_region
    _
  $region13: #{two_way_transformer.40} parent=0 // pred_fallthru
    _
  // Predicated region
  $region14: #{two_way_transformer.40} parent=0 // pred_check
    _
  $region15: #{two_way_transformer.40} parent=0 // pred_check_branch
    %23 = sbr.rel (0) target = $region17
  $region16: #{two_way_transformer.40} parent=0 // pred_region
    _
  $region17: #{two_way_transformer.40} parent=0 // pred_fallthru
    _
  // Predicated region
  $region18: #{two_way_transformer.40} parent=0 // pred_check
    _
  $region19: #{two_way_transformer.40} parent=0 // pred_check_branch
    %25 = sbr.rel (0) target = $region21
  $region20: #{two_way_transformer.40} parent=0 // pred_region
    _
  $region21: #{two_way_transformer.40} parent=0 // pred_fallthru
    _
  // Predicated region
  $region22: #{two_way_transformer.40} parent=0 // pred_check
    _
  $region23: #{two_way_transformer.40} parent=0 // pred_check_branch
    %27 = sbr.rel (0) target = $region25
  $region24: #{two_way_transformer.40} parent=0 // pred_region
    _
  $region25: #{two_way_transformer.40} parent=0 // pred_fallthru
    _
  // Predicated region
  $region26: #{two_way_transformer.40} parent=0 // pred_check
    _
  $region27: #{two_way_transformer.40} parent=0 // pred_check_branch
    %29 = sbr.rel (0) target = $region29
  $region28: #{two_way_transformer.40} parent=0 // pred_region
    _
  $region29: #{two_way_transformer.40} parent=0 // pred_fallthru
    _
  // Predicated region
  $region30: #{two_way_transformer.40} parent=0 // pred_check
    _
  $region31: #{two_way_transformer.40} parent=0 // pred_check_branch
    %31 = sbr.rel (0) target = $region33
  $region32: #{two_way_transformer.40} parent=0 // pred_region
    _
  $region33: #{two_way_transformer.40} parent=0 // pred_fallthru
    _
  %v33 = vld [vmem:[%s0] sm:$0xf]
  %v34 = vld [vmem:[%s0 + $0x4] sm:$0xf]
  %v35 = vld [vmem:[%s1] sm:$0xf]
  %v36 = vld [vmem:[%s1 + $0x4] sm:$0xf]
  %v37 = vunpack.c.l.bf16 %v33
  %v38 = vunpack.c.l.bf16 %v34
  %v39 = vunpack.c.l.bf16 %v35
  %v40 = vunpack.c.l.bf16 %v36
  %v41 = vadd.f32 %v37, %v39
  %v42 = vadd.f32 %v38, %v40
  %v43 = vpack.c.bf16 %v42, %v41
  %v44 = vld [vmem:[%s2] sm:$0xf]
  %v45 = vld [vmem:[%s2 + $0x4] sm:$0xf]
  %v46 = vld [vmem:[%s2 + $0x8] sm:$0xf]
  %v47 = vld [vmem:[%s2 + $0xc] sm:$0xf]
  %v48 = vld [vmem:[%s3] sm:$0x1]
  %v50 = vperm.slane %v48, 0
  %v56 = vunpack.c.l.b16 %v44
  %v57 = vunpack.c.l.b16 %v45
  %v58 = vunpack.c.l.b16 %v46
  %v59 = vunpack.c.l.b16 %v47
  %v60 = vpack.c.b16 %v57, %v56
  %v61 = vpack.c.b16 %v59, %v58
  %vm64 = vcmask 261120
  %v66 = vsel %vm64, %v43, 0
  %68 = vmatpush.bf16.msra.mxu0 0
  %69 = vmatpush.bf16.msra.mxu0 0
  %70 = vmatpush.bf16.msra.mxu0 0
  %71 = vmatpush.bf16.msra.mxu0 0
  %72 = vmatpush.bf16.msra.mxu0 0
  %73 = vmatpush.bf16.msra.mxu0 0
  %74 = vmatpush.bf16.msra.mxu0 %v61
  %75 = vmatpush.bf16.msra.mxu0 %v60
  %76 = vmatmul.bf16.gmra.mxu0 %v66
  %v77 = vpop.f32.mrf.mxu0
  %v78 = vadd.f32 %v50, %v77
  %v79 = vpop.f32.mrf.mxu0
  %v80 = vadd.f32 %v50, %v79
  %81 = vdwg.mxu0
  %v82 = vld [vmem:[%s4] sm:$0xf]
  %v83 = vld [vmem:[%s4 + $0x4] sm:$0xf]
  %v84 = vld [vmem:[%s4 + $0x8] sm:$0xf]
  %v85 = vld [vmem:[%s4 + $0xc] sm:$0xf]
  %v86 = vld [vmem:[%s5] sm:$0x1]
  %v88 = vperm.slane %v86, 0
  %v94 = vunpack.c.l.b16 %v82
  %v95 = vunpack.c.l.b16 %v83
  %v96 = vunpack.c.l.b16 %v84
  %v97 = vunpack.c.l.b16 %v85
  %v98 = vpack.c.b16 %v95, %v94
  %v99 = vpack.c.b16 %v97, %v96
  %102 = vmatpush.bf16.msra.mxu0 0
  %103 = vmatpush.bf16.msra.mxu0 0
  %104 = vmatpush.bf16.msra.mxu0 0
  %105 = vmatpush.bf16.msra.mxu0 0
  %106 = vmatpush.bf16.msra.mxu0 0
  %107 = vmatpush.bf16.msra.mxu0 0
  %108 = vmatpush.bf16.msra.mxu0 %v99
  %109 = vmatpush.bf16.msra.mxu0 %v98
  %110 = vmatmul.bf16.gmra.mxu0 %v66
  %v111 = vpop.f32.mrf.mxu0
  %v112 = vadd.f32 %v88, %v111
  %v113 = vpop.f32.mrf.mxu0
  %v114 = vadd.f32 %v88, %v113
  %115 = vdwg.mxu0
  %v116 = vld [vmem:[%s6] sm:$0xf]
  %v117 = vld [vmem:[%s6 + $0x4] sm:$0xf]
  %v118 = vld [vmem:[%s6 + $0x8] sm:$0xf]
  %v119 = vld [vmem:[%s6 + $0xc] sm:$0xf]
  %v120 = vld [vmem:[%s7] sm:$0x1]
  %v122 = vperm.slane %v120, 0
  %v126 = vunpack.c.l.b16 %v33
  %v127 = vunpack.c.l.b16 %v34
  %v128 = vpack.c.b16 %v127, %v126
  %v133 = vunpack.c.l.b16 %v116
  %v134 = vunpack.c.l.b16 %v117
  %v135 = vunpack.c.l.b16 %v118
  %v136 = vunpack.c.l.b16 %v119
  %v137 = vpack.c.b16 %v134, %v133
  %v138 = vpack.c.b16 %v136, %v135
  %v142 = vsel %vm64, %v128, 0
  %144 = vmatpush.bf16.msra.mxu0 0
  %145 = vmatpush.bf16.msra.mxu0 0
  %146 = vmatpush.bf16.msra.mxu0 0
  %147 = vmatpush.bf16.msra.mxu0 0
  %148 = vmatpush.bf16.msra.mxu0 0
  %149 = vmatpush.bf16.msra.mxu0 0
  %150 = vmatpush.bf16.msra.mxu0 %v138
  %151 = vmatpush.bf16.msra.mxu0 %v137
  %152 = vmatmul.bf16.gmra.mxu0 %v142
  %v153 = vpop.f32.mrf.mxu0
  %v154 = vadd.f32 %v122, %v153
  %v155 = vpop.f32.mrf.mxu0
  %v156 = vadd.f32 %v122, %v155
  %157 = vdwg.mxu0
  %v158 = vpack.c.bf16 %v78, %v78
  %v159 = vpack.c.bf16 %v80, %v80
  %vm160 = vcmask 257024
  %161 = vst.msk [vmem:[%s8] sm:$0xf] %vm160, %v158
  %162 = vst.msk [vmem:[%s8 + $0x4] sm:$0xf] %vm160, %v159
  %v163 = vpack.c.bf16 %v112, %v112
  %v164 = vpack.c.bf16 %v114, %v114
  %165 = vst.msk [vmem:[%s9] sm:$0xf] %vm160, %v163
  %166 = vst.msk [vmem:[%s9 + $0x4] sm:$0xf] %vm160, %v164
  %v167 = vpack.c.bf16 %v154, %v154
  %v168 = vpack.c.bf16 %v156, %v156
  %169 = vst.msk [vmem:[%s10] sm:$0xf] %vm160, %v167
  %170 = vst.msk [vmem:[%s10 + $0x4] sm:$0xf] %vm160, %v168
  // Predicated region
  $region34: #{two_way_transformer.40} parent=0 // pred_check
    _
  $region35: #{two_way_transformer.40} parent=0 // pred_check_branch
    %172 = sbr.rel (0) target = $region37
  $region36: #{two_way_transformer.40} parent=0 // pred_region
    _
  $region37: #{two_way_transformer.40} parent=0 // pred_fallthru
    _
  // Predicated region
  $region38: #{two_way_transformer.40} parent=0 // pred_check
    _
  $region39: #{two_way_transformer.40} parent=0 // pred_check_branch
    %174 = sbr.rel (0) target = $region41
  $region40: #{two_way_transformer.40} parent=0 // pred_region
    _
  $region41: #{two_way_transformer.40} parent=0 // pred_fallthru
    _
  // Predicated region
  $region42: #{two_way_transformer.40} parent=0 // pred_check
    _
  $region43: #{two_way_transformer.40} parent=0 // pred_check_branch
    %176 = sbr.rel (0) target = $region45
  $region44: #{two_way_transformer.40} parent=0 // pred_region
    _
  $region45: #{two_way_transformer.40} parent=0 // pred_fallthru
    _
  // Predicated region
  $region46: #{two_way_transformer.40} parent=0 // pred_check
    _
  $region47: #{two_way_transformer.40} parent=0 // pred_check_branch
    %178 = sbr.rel (0) target = $region49
  $region48: #{two_way_transformer.40} parent=0 // pred_region
    _
  $region49: #{two_way_transformer.40} parent=0 // pred_fallthru
    _
  // Predicated region
  $region50: #{two_way_transformer.40} parent=0 // pred_check
    _
  $region51: #{two_way_transformer.40} parent=0 // pred_check_branch
    %180 = sbr.rel (0) target = $region53
  $region52: #{two_way_transformer.40} parent=0 // pred_region
    _
  $region53: #{two_way_transformer.40} parent=0 // pred_fallthru
    _
  // Predicated region
  $region54: #{two_way_transformer.40} parent=0 // pred_check
    _
  $region55: #{two_way_transformer.40} parent=0 // pred_check_branch
    %182 = sbr.rel (0) target = $region57
  $region56: #{two_way_transformer.40} parent=0 // pred_region
    _
  $region57: #{two_way_transformer.40} parent=0 // pred_fallthru
    _

// kernel: two_way_transformer.36
$region0: #{two_way_transformer.36}
  #allocation0 [shape = 'u32[]', space=smem, size = 0x4, offset = 0x4, fixed_abs, tag = 'smem constant byte address 0x4 - core index']
  #allocation1 [shape = 'u32[72,128]{1,0:T(1,128)}', space=vmem, size = 0x9000, scoped, tag = 'internal scratch']
  %s0 = inlined_call_operand.vmem [shape: bf16[32,32], index: 0, kind: input, shape index: {}]
  %s1 = inlined_call_operand.vmem [shape: bf16[32,32], index: 1, kind: input, shape index: {}]
  %s2 = inlined_call_operand.vmem [shape: bf16[32,16], index: 2, kind: input, shape index: {}]
  %s3 = inlined_call_operand.vmem [shape: f32[1,16], index: 3, kind: input, shape index: {}]
  %s4 = inlined_call_operand.vmem [shape: bf16[32,16], index: 4, kind: output, shape index: {}]
  %s5 = sld [smem:[#allocation0]]
  $region26: #{two_way_transformer.36} parent=0
    _
  %s7 = ssub.s32 1, %s5
  %s8 = scalar_select 0, %s7, %s5
  // Predicated region
  $region2: #{two_way_transformer.36} parent=0 // pred_check
    _
  $region3: #{two_way_transformer.36} parent=0 // pred_check_branch
    %10 = sbr.rel (0) target = $region5
  $region4: #{two_way_transformer.36} parent=0 // pred_region
    _
  $region5: #{two_way_transformer.36} parent=0 // pred_fallthru
    _
  // Predicated region
  $region6: #{two_way_transformer.36} parent=0 // pred_check
    _
  $region7: #{two_way_transformer.36} parent=0 // pred_check_branch
    %12 = sbr.rel (0) target = $region9
  $region8: #{two_way_transformer.36} parent=0 // pred_region
    _
  $region9: #{two_way_transformer.36} parent=0 // pred_fallthru
    _
  // Predicated region
  $region10: #{two_way_transformer.36} parent=0 // pred_check
    _
  $region11: #{two_way_transformer.36} parent=0 // pred_check_branch
    %14 = sbr.rel (0) target = $region13
  $region12: #{two_way_transformer.36} parent=0 // pred_region
    _
  $region13: #{two_way_transformer.36} parent=0 // pred_fallthru
    _
  // Predicated region
  $region14: #{two_way_transformer.36} parent=0 // pred_check
    _
  $region15: #{two_way_transformer.36} parent=0 // pred_check_branch
    %16 = sbr.rel (0) target = $region17
  $region16: #{two_way_transformer.36} parent=0 // pred_region
    _
  $region17: #{two_way_transformer.36} parent=0 // pred_fallthru
    _
  %v18 = vld [vmem:[%s0] sm:$0xf]
  %v19 = vld [vmem:[%s0 + $0x4] sm:$0xf]
  %v20 = vld [vmem:[%s0 + $0x8] sm:$0xf]
  %v21 = vld [vmem:[%s0 + $0xc] sm:$0xf]
  %v22 = vld [vmem:[%s1] sm:$0xf]
  %v23 = vld [vmem:[%s1 + $0x4] sm:$0xf]
  %v24 = vld [vmem:[%s1 + $0x8] sm:$0xf]
  %v25 = vld [vmem:[%s1 + $0xc] sm:$0xf]
  %v26 = vunpack.c.l.bf16 %v18
  %v27 = vunpack.c.l.bf16 %v19
  %v28 = vunpack.c.l.bf16 %v20
  %v29 = vunpack.c.l.bf16 %v21
  %v30 = vunpack.c.l.bf16 %v22
  %v31 = vunpack.c.l.bf16 %v23
  %v32 = vunpack.c.l.bf16 %v24
  %v33 = vunpack.c.l.bf16 %v25
  %v34 = vadd.f32 %v26, %v30
  %v35 = vadd.f32 %v27, %v31
  %v36 = vadd.f32 %v28, %v32
  %v37 = vadd.f32 %v29, %v33
  %v38 = vpack.c.bf16 %v35, %v34
  %v39 = vpack.c.bf16 %v37, %v36
  %v40 = vld [vmem:[%s2] sm:$0xf]
  %v41 = vld [vmem:[%s2 + $0x4] sm:$0xf]
  %v42 = vld [vmem:[%s2 + $0x8] sm:$0xf]
  %v43 = vld [vmem:[%s2 + $0xc] sm:$0xf]
  %v44 = vld [vmem:[%s3] sm:$0x1]
  %v46 = vperm.slane %v44, 0
  %v52 = vunpack.c.l.b16 %v40
  %v53 = vunpack.c.l.b16 %v41
  %v54 = vunpack.c.l.b16 %v42
  %v55 = vunpack.c.l.b16 %v43
  %v56 = vpack.c.b16 %v53, %v52
  %v57 = vpack.c.b16 %v55, %v54
  %vm60 = vcmask 261120
  %v62 = vsel %vm60, %v38, 0
  %v65 = vsel %vm60, %v39, 0
  %67 = vmatpush.bf16.msra.mxu0 0
  %68 = vmatpush.bf16.msra.mxu0 0
  %69 = vmatpush.bf16.msra.mxu0 0
  %70 = vmatpush.bf16.msra.mxu0 0
  %71 = vmatpush.bf16.msra.mxu0 0
  %72 = vmatpush.bf16.msra.mxu0 0
  %73 = vmatpush.bf16.msra.mxu0 %v57
  %74 = vmatpush.bf16.msra.mxu0 %v56
  %75 = vmatmul.bf16.gmra.mxu0 %v62
  %v76 = vpop.f32.mrf.mxu0
  %v77 = vadd.f32 %v46, %v76
  %v78 = vpop.f32.mrf.mxu0
  %v79 = vadd.f32 %v46, %v78
  %80 = vmatmul.bf16.gmra.mxu0 %v65
  %v81 = vpop.f32.mrf.mxu0
  %v82 = vadd.f32 %v46, %v81
  %v83 = vpop.f32.mrf.mxu0
  %v84 = vadd.f32 %v46, %v83
  %85 = vdwg.mxu0
  %v86 = vpack.c.bf16 %v77, %v77
  %v87 = vpack.c.bf16 %v79, %v79
  %v88 = vpack.c.bf16 %v82, %v82
  %v89 = vpack.c.bf16 %v84, %v84
  %vm90 = vcmask 125952
  %91 = vst.msk [vmem:[%s4] sm:$0xf] %vm90, %v86
  %92 = vst.msk [vmem:[%s4 + $0x4] sm:$0xf] %vm90, %v87
  %93 = vst.msk [vmem:[%s4 + $0x8] sm:$0xf] %vm90, %v88
  %94 = vst.msk [vmem:[%s4 + $0xc] sm:$0xf] %vm90, %v89
  // Predicated region
  $region18: #{two_way_transformer.36} parent=0 // pred_check
    _
  $region19: #{two_way_transformer.36} parent=0 // pred_check_branch
    %96 = sbr.rel (0) target = $region21
  $region20: #{two_way_transformer.36} parent=0 // pred_region
    _
  $region21: #{two_way_transformer.36} parent=0 // pred_fallthru
    _
  // Predicated region
  $region22: #{two_way_transformer.36} parent=0 // pred_check
    _
  $region23: #{two_way_transformer.36} parent=0 // pred_check_branch
    %98 = sbr.rel (0) target = $region25
  $region24: #{two_way_transformer.36} parent=0 // pred_region
    _
  $region25: #{two_way_transformer.36} parent=0 // pred_fallthru
    _

// kernel: two_way_transformer.38
$region0: #{two_way_transformer.38}
  #allocation0 [shape = 'u32[]', space=smem, size = 0x4, offset = 0x4, fixed_abs, tag = 'smem constant byte address 0x4 - core index']
  #allocation1 [shape = 'u32[72,128]{1,0:T(1,128)}', space=vmem, size = 0x9000, scoped, tag = 'internal scratch']
  %s0 = inlined_call_operand.vmem [shape: bf16[2,16,16], index: 0, kind: input, shape index: {}]
  %s1 = inlined_call_operand.vmem [shape: bf16[2,8,16], index: 1, kind: input, shape index: {}]
  %s2 = inlined_call_operand.vmem [shape: bf16[2,8,16], index: 2, kind: input, shape index: {}]
  %s3 = inlined_call_operand.vmem [shape: bf16[2,16,16], index: 3, kind: output, shape index: {}]
  %s4 = sld [smem:[#allocation0]]
  $region45: #{two_way_transformer.38} parent=0
    _
  %s6 = ssub.s32 1, %s4
  %s7 = scalar_select 0, %s6, %s4
  loop: start=0, step=1, limit=4
  $region2: #{two_way_transformer.38} parent=0 // loop_pre_header
    _
  $region3: #{two_way_transformer.38} parent=0 // loop_header
    %s9 = sphi 0, %s13
    %p10 = scmp.ge.s32.totalorder %s9, 4
    %s16 = sphi 0, %s28
    %s17 = sphi 0, %s24
    %s18 = sphi 0, %s16
    %s19 = sphi 0, %s17
    %s20 = sphi 0, %s18
    %s21 = sphi 0, %s19
    %s33 = sphi 0, %s35
    %s36 = sphi 0, %s33
    %s37 = sphi 0, %s36
    %s53 = sphi 0, %s37
    %s59 = sphi 0, %s61
    %s62 = sphi 0, %s59
    %s63 = sphi 0, %s62
    %s79 = sphi 0, %s63
    %s85 = sphi 0, %s87
    %s88 = sphi 0, %s85
    %s89 = sphi 0, %s88
    %s105 = sphi 0, %s89
    %s113 = sphi 0, %s115
    %s116 = sphi 0, %s113
    %s117 = sphi 0, %s116
    %s133 = sphi 0, %s117
  $region4: #{two_way_transformer.38} parent=0 // loop_header_branch
    %12 = sbr.rel (%p10) target = $region8
  $region5: #{two_way_transformer.38} parent=0 // loop_body
    %s14 = ssub.s32 %s9, 1
    %s15 = ssub.s32 %s9, 2
    %s22 = sadd.s32 1, %s17
    %p23 = scmp.ge.s32.totalorder %s22, 1
    %s24 = scalar_select %p23, 0, %s22
    %s25 = sadd.s32 1, %s16
    %s26 = scalar_select %p23, %s25, %s16
    %p27 = scmp.ge.s32.totalorder %s26, 2
    %s28 = scalar_select %p27, 0, %s26
    %s29 = ssub.s32 %s16, %s28
    %s30 = ssub.s32 %s17, %s24
    %s31 = sor.u32 %s29, %s30
    %p32 = scmp.eq.s32.totalorder %s31, 0
    %s34 = sadd.s32 %s33, 1
    %s35 = scalar_select %p32, %s33, %s34
    %p38 = pneg %p32
    %p39 = scmp.eq.s32.totalorder %s9, 1
    %p40 = por %p38, %p39
    %p41 = scmp.ne.s32.totalorder %s33, %s36
    %p42 = scmp.eq.s32.totalorder %s9, 0
    %p43 = por %p41, %p42
    %p44 = scmp.ne.s32.totalorder %s33, %s36
    %p45 = scmp.eq.s32.totalorder %s14, 1
    %p46 = por %p44, %p45
    %p47 = scmp.ne.s32.totalorder %s36, %s37
    %p48 = scmp.eq.s32.totalorder %s14, 0
    %p49 = por %p47, %p48
    %p50 = scmp.ne.s32.totalorder %s36, %s37
    %p51 = scmp.eq.s32.totalorder %s15, 1
    %p52 = por %p50, %p51
    %p54 = scmp.ne.s32.totalorder %s37, %s53
    %p55 = scmp.eq.s32.totalorder %s15, 0
    %p56 = por %p54, %p55
    %s57 = ssub.s32 %s16, %s28
    %p58 = scmp.eq.s32.totalorder %s57, 0
    %s60 = sadd.s32 %s59, 1
    %s61 = scalar_select %p58, %s59, %s60
    %p64 = pneg %p58
    %p65 = scmp.eq.s32.totalorder %s9, 1
    %p66 = por %p64, %p65
    %p67 = scmp.ne.s32.totalorder %s59, %s62
    %p68 = scmp.eq.s32.totalorder %s9, 0
    %p69 = por %p67, %p68
    %p70 = scmp.ne.s32.totalorder %s59, %s62
    %p71 = scmp.eq.s32.totalorder %s14, 1
    %p72 = por %p70, %p71
    %p73 = scmp.ne.s32.totalorder %s62, %s63
    %p74 = scmp.eq.s32.totalorder %s14, 0
    %p75 = por %p73, %p74
    %p76 = scmp.ne.s32.totalorder %s62, %s63
    %p77 = scmp.eq.s32.totalorder %s15, 1
    %p78 = por %p76, %p77
    %p80 = scmp.ne.s32.totalorder %s63, %s79
    %p81 = scmp.eq.s32.totalorder %s15, 0
    %p82 = por %p80, %p81
    %s83 = ssub.s32 %s16, %s28
    %p84 = scmp.eq.s32.totalorder %s83, 0
    %s86 = sadd.s32 %s85, 1
    %s87 = scalar_select %p84, %s85, %s86
    %p90 = pneg %p84
    %p91 = scmp.eq.s32.totalorder %s9, 1
    %p92 = por %p90, %p91
    %p93 = scmp.ne.s32.totalorder %s85, %s88
    %p94 = scmp.eq.s32.totalorder %s9, 0
    %p95 = por %p93, %p94
    %p96 = scmp.ne.s32.totalorder %s85, %s88
    %p97 = scmp.eq.s32.totalorder %s14, 1
    %p98 = por %p96, %p97
    %p99 = scmp.ne.s32.totalorder %s88, %s89
    %p100 = scmp.eq.s32.totalorder %s14, 0
    %p101 = por %p99, %p100
    %p102 = scmp.ne.s32.totalorder %s88, %s89
    %p103 = scmp.eq.s32.totalorder %s15, 1
    %p104 = por %p102, %p103
    %p106 = scmp.ne.s32.totalorder %s89, %s105
    %p107 = scmp.eq.s32.totalorder %s15, 0
    %p108 = por %p106, %p107
    %s109 = ssub.s32 %s16, %s28
    %s110 = ssub.s32 %s17, %s24
    %s111 = sor.u32 %s109, %s110
    %p112 = scmp.eq.s32.totalorder %s111, 0
    %s114 = sadd.s32 %s113, 1
    %s115 = scalar_select %p112, %s113, %s114
    %p118 = pneg %p112
    %p119 = scmp.eq.s32.totalorder %s9, 1
    %p120 = por %p118, %p119
    %p121 = scmp.ne.s32.totalorder %s113, %s116
    %p122 = scmp.eq.s32.totalorder %s9, 0
    %p123 = por %p121, %p122
    %p124 = scmp.ne.s32.totalorder %s113, %s116
    %p125 = scmp.eq.s32.totalorder %s14, 1
    %p126 = por %p124, %p125
    %p127 = scmp.ne.s32.totalorder %s116, %s117
    %p128 = scmp.eq.s32.totalorder %s14, 0
    %p129 = por %p127, %p128
    %p130 = scmp.ne.s32.totalorder %s116, %s117
    %p131 = scmp.eq.s32.totalorder %s15, 1
    %p132 = por %p130, %p131
    %p134 = scmp.ne.s32.totalorder %s117, %s133
    %p135 = scmp.eq.s32.totalorder %s15, 0
    %p136 = por %p134, %p135
    %p137 = scmp.le.s32.totalorder 1, %s9
    %p138 = scmp.lt.s32.totalorder %s9, 3
    %p139 = pnand %p137, %p138
    %p140 = pneg %p139
    // Predicated region
    $region9: #{two_way_transformer.38} parent=5 // pred_check
      _
    $region10: #{two_way_transformer.38} parent=5 // pred_check_branch
      %142 = sbr.rel (%p139) target = $region12
    $region11: #{two_way_transformer.38} parent=5 // pred_region
      %s143 = ssub.s32 %s9, 1
    $region12: #{two_way_transformer.38} parent=5 // pred_fallthru
      _
    %p144 = scmp.lt.s32.totalorder %s9, 2
    // Predicated region
    $region13: #{two_way_transformer.38} parent=5 // pred_check
      %p145 = pneg %p144
    $region14: #{two_way_transformer.38} parent=5 // pred_check_branch
      %147 = sbr.rel (%p145) target = $region16
    $region15: #{two_way_transformer.38} parent=5 // pred_region
      // Predicated region
      $region17: #{two_way_transformer.38} parent=15 // pred_check
        %p148 = pneg %p43
      $region18: #{two_way_transformer.38} parent=15 // pred_check_branch
        %150 = sbr.rel (%p148) target = $region20
      $region19: #{two_way_transformer.38} parent=15 // pred_region
        %s151 = smul.u32 2, %s17
        %p152 = scmp.lt.s32.totalorder %s16, 1
        %s153 = scalar_select %p152, %s16, 1
        %p154 = scmp.lt.s32.totalorder %s151, 1
        %s155 = scalar_select %p154, %s151, 1
        %s156 = smul.addr %s153, 2
        %s157 = sadd.s32 %s155, %s156
        %s158 = smul.addr %s157, 4
        %s159 = scalar_lea.vmem %s0, %s158
        %s160 = smul.u32 2, %s17
      $region20: #{two_way_transformer.38} parent=15 // pred_fallthru
        _
      // Predicated region
      $region21: #{two_way_transformer.38} parent=15 // pred_check
        %p161 = pneg %p69
      $region22: #{two_way_transformer.38} parent=15 // pred_check_branch
        %163 = sbr.rel (%p161) target = $region24
      $region23: #{two_way_transformer.38} parent=15 // pred_region
        %p164 = scmp.lt.s32.totalorder %s16, 1
        %s165 = scalar_select %p164, %s16, 1
        %s166 = smul.addr %s165, 4
        %s167 = scalar_lea.vmem %s1, %s166
      $region24: #{two_way_transformer.38} parent=15 // pred_fallthru
        _
      // Predicated region
      $region25: #{two_way_transformer.38} parent=15 // pred_check
        %p168 = pneg %p95
      $region26: #{two_way_transformer.38} parent=15 // pred_check_branch
        %170 = sbr.rel (%p168) target = $region28
      $region27: #{two_way_transformer.38} parent=15 // pred_region
        %p171 = scmp.lt.s32.totalorder %s16, 1
        %s172 = scalar_select %p171, %s16, 1
        %s173 = smul.addr %s172, 4
        %s174 = scalar_lea.vmem %s2, %s173
      $region28: #{two_way_transformer.38} parent=15 // pred_fallthru
        _
    $region16: #{two_way_transformer.38} parent=5 // pred_fallthru
      _
    %p175 = scmp.le.s32.totalorder 1, %s9
    %p176 = scmp.lt.s32.totalorder %s9, 3
    %p177 = pnand %p175, %p176
    %p178 = pneg %p177
    // Predicated region
    $region29: #{two_way_transformer.38} parent=5 // pred_check
      _
    $region30: #{two_way_transformer.38} parent=5 // pred_check_branch
      %180 = sbr.rel (%p177) target = $region32
    $region31: #{two_way_transformer.38} parent=5 // pred_region
      %s181 = ssub.s32 %s9, 1
      %s182 = smul.u32 2, %s19
      %p183 = scmp.lt.s32.totalorder %s18, 1
      %s184 = scalar_select %p183, %s18, 1
      %p185 = scmp.lt.s32.totalorder %s182, 1
      %s186 = scalar_select %p185, %s182, 1
      %s187 = smul.addr %s184, 2
      %s188 = sadd.s32 %s186, %s187
      %s189 = smul.addr %s188, 4
      %s190 = scalar_lea.vmem %s0, %s189
      %p191 = pneg %p49
      %p192 = pneg %p46
      %p193 = scmp.lt.s32.totalorder %s18, 1
      %s194 = scalar_select %p193, %s18, 1
      %s195 = smul.addr %s194, 4
      %s196 = scalar_lea.vmem %s1, %s195
      %p197 = pneg %p75
      %p198 = pneg %p72
      %p199 = scmp.lt.s32.totalorder %s18, 1
      %s200 = scalar_select %p199, %s18, 1
      %s201 = smul.addr %s200, 4
      %s202 = scalar_lea.vmem %s2, %s201
      %p203 = pneg %p101
      %p204 = pneg %p98
      %p205 = pneg %p129
      %p206 = pneg %p126
      %s207 = smul.u32 2, %s19
      %p208 = scmp.lt.s32.totalorder %s18, 1
      %s209 = scalar_select %p208, %s18, 1
      %p210 = scmp.lt.s32.totalorder %s207, 1
      %s211 = scalar_select %p210, %s207, 1
      %s212 = smul.addr %s209, 2
      %s213 = sadd.s32 %s211, %s212
      %s214 = smul.addr %s213, 4
      %s215 = scalar_lea.vmem %s3, %s214
      %s216 = smul.u32 2, %s19
      %p217 = scmp.lt.s32.totalorder %s18, 1
      %s218 = scalar_select %p217, %s18, 1
      %p219 = scmp.lt.s32.totalorder %s216, 1
      %s220 = scalar_select %p219, %s216, 1
      %s221 = smul.addr %s218, 2
      %s222 = sadd.s32 %s220, %s221
      %s223 = smul.addr %s222, 4
      %s224 = scalar_lea.vmem %s0, %s223
      %s225 = smul.u32 2, %s19
      %p226 = scmp.lt.s32.totalorder %s18, 1
      %s227 = scalar_select %p226, %s18, 1
      %s228 = smul.addr %s227, 4
      %s229 = scalar_lea.vmem %s1, %s228
      %p230 = scmp.lt.s32.totalorder %s18, 1
      %s231 = scalar_select %p230, %s18, 1
      %s232 = smul.addr %s231, 4
      %s233 = scalar_lea.vmem %s2, %s232
      %s234 = smul.u32 2, %s19
      %p235 = scmp.lt.s32.totalorder %s18, 1
      %s236 = scalar_select %p235, %s18, 1
      %p237 = scmp.lt.s32.totalorder %s234, 1
      %s238 = scalar_select %p237, %s234, 1
      %s239 = smul.addr %s236, 2
      %s240 = sadd.s32 %s238, %s239
      %s241 = smul.addr %s240, 4
      %s242 = scalar_lea.vmem %s3, %s241
      %s243 = smul.u32 2, %s19
      %v245 = vld [vmem:[%s224] sm:$0xf]
      %v246 = vld [vmem:[%s224 + $0x4] sm:$0xf]
      %v247 = vld [vmem:[%s229] sm:$0xf]
      %v248 = vld [vmem:[%s233] sm:$0xf]
      %v251 = vunpack.c.l.b16 %v245
      %v252 = vunpack.c.l.b16 %v246
      %v253 = vpack.c.b16 %v252, %v251
      %vm254 = vcmask 64512
      %v256 = vsel %vm254, %v253, 0
      %v259 = vsel %vm254, %v247, 0
      %261 = vmatpush.bf16.xpose.msra.mxu0 0
      %262 = vmatpush.bf16.xpose.msra.mxu0 0
      %263 = vmatpush.bf16.xpose.msra.mxu0 0
      %264 = vmatpush.bf16.xpose.msra.mxu0 0
      %265 = vmatpush.bf16.xpose.msra.mxu0 0
      %266 = vmatpush.bf16.xpose.msra.mxu0 0
      %267 = vmatpush.bf16.xpose.msra.mxu0 0
      %268 = vmatpush.bf16.xpose.msra.mxu0 %v259
      %269 = vmatmul.bf16.gmra.mxu0 %v256
      %v270 = vpop.f32.mrf.mxu0
      %v271 = vadd.f32 0.0, %v270
      %v272 = vpop.f32.mrf.mxu0
      %v273 = vadd.f32 0.0, %v272
      %274 = vdwg.mxu0
      %v275 = vsel %vm254, %v271, -inf
      %276 = vmax.xlane.f32.xlu0 %v275
      %v277 = vpop.xlane.xlu0 %276
      %v278 = vsel %vm254, %v273, -inf
      %279 = vmax.xlane.f32.xlu0 %v278
      %v280 = vpop.xlane.xlu0 %279
      %v281 = vsub.f32 %v271, %v277
      %v282 = vsub.f32 %v273, %v280
      %v283 = vmul.f32 %v281, 1.442695
      %v284 = vpow.pop %v283
      %v285 = vmul.f32 %v282, 1.442695
      %v286 = vpow.pop %v285
      %v287 = vsel %vm254, %v284, 0.0
      %288 = vadd.xlane.f32.xlu0 %v287
      %v289 = vpop.xlane.xlu0 %288
      %v290 = vsel %vm254, %v286, 0.0
      %291 = vadd.xlane.f32.xlu0 %v290
      %v292 = vpop.xlane.xlu0 %291
      %v293 = vrcp.pop %v289
      %v294 = vrcp.pop %v292
      %v295 = vmul.f32 %v284, %v293
      %v296 = vmul.f32 %v286, %v294
      %v297 = vpack.c.bf16 %v296, %v295
      %v299 = vsel %vm254, %v297, 0
      %vm301 = vcmask 1043456
      %v303 = vsel %vm301, %v248, 0
      %305 = vmatpush.bf16.msra.mxu0 0
      %306 = vmatpush.bf16.msra.mxu0 0
      %307 = vmatpush.bf16.msra.mxu0 0
      %308 = vmatpush.bf16.msra.mxu0 0
      %309 = vmatpush.bf16.msra.mxu0 0
      %310 = vmatpush.bf16.msra.mxu0 0
      %311 = vmatpush.bf16.msra.mxu0 0
      %312 = vmatpush.bf16.msra.mxu0 %v303
      %313 = vmatmul.bf16.gmra.mxu0 %v299
      %v314 = vpop.f32.mrf.mxu0
      %v315 = vadd.f32 0.0, %v314
      %v316 = vpop.f32.mrf.mxu0
      %v317 = vadd.f32 0.0, %v316
      %318 = vdwg.mxu0
      %319 = vrot.lane.b32.xlu0 %v253, 120
      %v320 = vpop.permute.xlu0 %319
      %v322 = vunpack.c.l.b16 %v247
      %v323 = vpack.c.b16 %v322, %v322
      %324 = vrot.lane.b32.xlu0 %v323, 120
      %v325 = vpop.permute.xlu0 %324
      %v327 = vsel %vm254, %v320, 0
      %v330 = vsel %vm254, %v325, 0
      %332 = vmatpush.bf16.xpose.msra.mxu0 0
      %333 = vmatpush.bf16.xpose.msra.mxu0 0
      %334 = vmatpush.bf16.xpose.msra.mxu0 0
      %335 = vmatpush.bf16.xpose.msra.mxu0 0
      %336 = vmatpush.bf16.xpose.msra.mxu0 0
      %337 = vmatpush.bf16.xpose.msra.mxu0 0
      %338 = vmatpush.bf16.xpose.msra.mxu0 0
      %339 = vmatpush.bf16.xpose.msra.mxu0 %v330
      %340 = vmatmul.bf16.gmra.mxu0 %v327
      %v341 = vpop.f32.mrf.mxu0
      %v342 = vadd.f32 0.0, %v341
      %v343 = vpop.f32.mrf.mxu0
      %v344 = vadd.f32 0.0, %v343
      %345 = vdwg.mxu0
      %v346 = vsel %vm254, %v342, -inf
      %347 = vmax.xlane.f32.xlu0 %v346
      %v348 = vpop.xlane.xlu0 %347
      %v349 = vsel %vm254, %v344, -inf
      %350 = vmax.xlane.f32.xlu0 %v349
      %v351 = vpop.xlane.xlu0 %350
      %v352 = vsub.f32 %v342, %v348
      %v353 = vsub.f32 %v344, %v351
      %v354 = vmul.f32 %v352, 1.442695
      %v355 = vpow.pop %v354
      %v356 = vmul.f32 %v353, 1.442695
      %v357 = vpow.pop %v356
      %v358 = vsel %vm254, %v355, 0.0
      %359 = vadd.xlane.f32.xlu0 %v358
      %v360 = vpop.xlane.xlu0 %359
      %v361 = vsel %vm254, %v357, 0.0
      %362 = vadd.xlane.f32.xlu0 %v361
      %v363 = vpop.xlane.xlu0 %362
      %v364 = vrcp.pop %v360
      %v365 = vrcp.pop %v363
      %v366 = vmul.f32 %v355, %v364
      %v367 = vmul.f32 %v357, %v365
      %v368 = vpack.c.bf16 %v367, %v366
      %v370 = vunpack.c.l.b16 %v248
      %v371 = vpack.c.b16 %v370, %v370
      %372 = vrot.lane.b32.xlu0 %v371, 120
      %v373 = vpop.permute.xlu0 %372
      %v375 = vsel %vm254, %v368, 0
      %v378 = vsel %vm301, %v373, 0
      %380 = vmatpush.bf16.msra.mxu0 0
      %381 = vmatpush.bf16.msra.mxu0 0
      %382 = vmatpush.bf16.msra.mxu0 0
      %383 = vmatpush.bf16.msra.mxu0 0
      %384 = vmatpush.bf16.msra.mxu0 0
      %385 = vmatpush.bf16.msra.mxu0 0
      %386 = vmatpush.bf16.msra.mxu0 0
      %387 = vmatpush.bf16.msra.mxu0 %v378
      %388 = vmatmul.bf16.gmra.mxu0 %v375
      %v389 = vpop.f32.mrf.mxu0
      %v390 = vadd.f32 0.0, %v389
      %v391 = vpop.f32.mrf.mxu0
      %v392 = vadd.f32 0.0, %v391
      %393 = vdwg.mxu0
      %396 = vrot.lane.b32.xlu0 %v390, 8
      %v397 = vpop.permute.xlu0 %396
      %398 = vrot.lane.b32.xlu0 %v392, 8
      %v399 = vpop.permute.xlu0 %398
      %v402 = vsel %vm254, %v315, %v397
      %v403 = vsel %vm254, %v317, %v399
      %v404 = vpack.c.bf16 %v402, %v402
      %v405 = vpack.c.bf16 %v403, %v403
      %vm406 = vcmask 125952
      %407 = vst.msk [vmem:[%s242] sm:$0xf] %vm406, %v404
      %408 = vst.msk [vmem:[%s242 + $0x4] sm:$0xf] %vm406, %v405
      %s409 = smul.u32 2, %s19
      %p410 = scmp.lt.s32.totalorder %s18, 1
      %s411 = scalar_select %p410, %s18, 1
      %p412 = scmp.lt.s32.totalorder %s409, 1
      %s413 = scalar_select %p412, %s409, 1
      %s414 = smul.addr %s411, 2
      %s415 = sadd.s32 %s413, %s414
      %s416 = smul.addr %s415, 4
      %s417 = scalar_lea.vmem %s3, %s416
      // Predicated region
      $region33: #{two_way_transformer.38} parent=31 // pred_check
        %p418 = pneg %p126
      $region34: #{two_way_transformer.38} parent=31 // pred_check_branch
        %420 = sbr.rel (%p418) target = $region36
      $region35: #{two_way_transformer.38} parent=31 // pred_region
        %s421 = smul.u32 2, %s19
      $region36: #{two_way_transformer.38} parent=31 // pred_fallthru
        _
    $region32: #{two_way_transformer.38} parent=5 // pred_fallthru
      _
    %p422 = scmp.le.s32.totalorder 2, %s9
    // Predicated region
    $region37: #{two_way_transformer.38} parent=5 // pred_check
      %p423 = pneg %p422
    $region38: #{two_way_transformer.38} parent=5 // pred_check_branch
      %425 = sbr.rel (%p423) target = $region40
    $region39: #{two_way_transformer.38} parent=5 // pred_region
      %s426 = ssub.s32 %s9, 2
      // Predicated region
      $region41: #{two_way_transformer.38} parent=39 // pred_check
        %p427 = pneg %p132
      $region42: #{two_way_transformer.38} parent=39 // pred_check_branch
        %429 = sbr.rel (%p427) target = $region44
      $region43: #{two_way_transformer.38} parent=39 // pred_region
        %s430 = smul.u32 2, %s21
        %p431 = scmp.lt.s32.totalorder %s20, 1
        %s432 = scalar_select %p431, %s20, 1
        %p433 = scmp.lt.s32.totalorder %s430, 1
        %s434 = scalar_select %p433, %s430, 1
        %s435 = smul.addr %s432, 2
        %s436 = sadd.s32 %s434, %s435
        %s437 = smul.addr %s436, 4
        %s438 = scalar_lea.vmem %s3, %s437
      $region44: #{two_way_transformer.38} parent=39 // pred_fallthru
        _
    $region40: #{two_way_transformer.38} parent=5 // pred_fallthru
      _
  $region6: #{two_way_transformer.38} parent=0 // loop_footer
    %s13 = sadd.s32 1, %s9
  $region7: #{two_way_transformer.38} parent=0 // loop_footer_branch
    %8 = sbr.rel target = $region3
  $region8: #{two_way_transformer.38} parent=0 // loop_exit
    _

// kernel: two_way_transformer.39
$region0: #{two_way_transformer.39}
  #allocation0 [shape = 'u32[]', space=smem, size = 0x4, offset = 0x4, fixed_abs, tag = 'smem constant byte address 0x4 - core index']
  #allocation1 [shape = 'u32[72,128]{1,0:T(1,128)}', space=vmem, size = 0x9000, scoped, tag = 'internal scratch']
  %s0 = inlined_call_operand.vmem [shape: bf16[32,16], index: 0, kind: input, shape index: {}]
  %s1 = inlined_call_operand.vmem [shape: bf16[16,32], index: 1, kind: input, shape index: {}]
  %s2 = inlined_call_operand.vmem [shape: f32[1,32], index: 2, kind: input, shape index: {}]
  %s3 = inlined_call_operand.vmem [shape: bf16[32,32], index: 3, kind: input, shape index: {}]
  %s4 = inlined_call_operand.vmem [shape: f32[1,32], index: 4, kind: input, shape index: {}]
  %s5 = inlined_call_operand.vmem [shape: f32[1,32], index: 5, kind: input, shape index: {}]
  %s6 = inlined_call_operand.vmem [shape: bf16[32,32], index: 6, kind: output, shape index: {}]
  %s7 = sld [smem:[#allocation0]]
  $region34: #{two_way_transformer.39} parent=0
    _
  %s9 = ssub.s32 1, %s7
  %s10 = scalar_select 0, %s9, %s7
  // Predicated region
  $region2: #{two_way_transformer.39} parent=0 // pred_check
    _
  $region3: #{two_way_transformer.39} parent=0 // pred_check_branch
    %12 = sbr.rel (0) target = $region5
  $region4: #{two_way_transformer.39} parent=0 // pred_region
    _
  $region5: #{two_way_transformer.39} parent=0 // pred_fallthru
    _
  // Predicated region
  $region6: #{two_way_transformer.39} parent=0 // pred_check
    _
  $region7: #{two_way_transformer.39} parent=0 // pred_check_branch
    %14 = sbr.rel (0) target = $region9
  $region8: #{two_way_transformer.39} parent=0 // pred_region
    _
  $region9: #{two_way_transformer.39} parent=0 // pred_fallthru
    _
  // Predicated region
  $region10: #{two_way_transformer.39} parent=0 // pred_check
    _
  $region11: #{two_way_transformer.39} parent=0 // pred_check_branch
    %16 = sbr.rel (0) target = $region13
  $region12: #{two_way_transformer.39} parent=0 // pred_region
    _
  $region13: #{two_way_transformer.39} parent=0 // pred_fallthru
    _
  // Predicated region
  $region14: #{two_way_transformer.39} parent=0 // pred_check
    _
  $region15: #{two_way_transformer.39} parent=0 // pred_check_branch
    %18 = sbr.rel (0) target = $region17
  $region16: #{two_way_transformer.39} parent=0 // pred_region
    _
  $region17: #{two_way_transformer.39} parent=0 // pred_fallthru
    _
  // Predicated region
  $region18: #{two_way_transformer.39} parent=0 // pred_check
    _
  $region19: #{two_way_transformer.39} parent=0 // pred_check_branch
    %20 = sbr.rel (0) target = $region21
  $region20: #{two_way_transformer.39} parent=0 // pred_region
    _
  $region21: #{two_way_transformer.39} parent=0 // pred_fallthru
    _
  // Predicated region
  $region22: #{two_way_transformer.39} parent=0 // pred_check
    _
  $region23: #{two_way_transformer.39} parent=0 // pred_check_branch
    %22 = sbr.rel (0) target = $region25
  $region24: #{two_way_transformer.39} parent=0 // pred_region
    _
  $region25: #{two_way_transformer.39} parent=0 // pred_fallthru
    _
  %v24 = vld [vmem:[%s0] sm:$0xf]
  %v25 = vld [vmem:[%s0 + $0x4] sm:$0xf]
  %v26 = vld [vmem:[%s0 + $0x8] sm:$0xf]
  %v27 = vld [vmem:[%s0 + $0xc] sm:$0xf]
  %v28 = vld [vmem:[%s1] sm:$0xf]
  %v29 = vld [vmem:[%s1 + $0x4] sm:$0xf]
  %v30 = vld [vmem:[%s2] sm:$0x1]
  %v32 = vperm.slane %v30, 0
  %v38 = vunpack.c.l.b16 %v24
  %v39 = vunpack.c.l.b16 %v25
  %v40 = vunpack.c.l.b16 %v26
  %v41 = vunpack.c.l.b16 %v27
  %v42 = vpack.c.b16 %v39, %v38
  %v43 = vpack.c.b16 %v41, %v40
  %v46 = vunpack.c.l.b16 %v28
  %v47 = vunpack.c.l.b16 %v29
  %v48 = vpack.c.b16 %v47, %v46
  %vm50 = vcmask 130048
  %v52 = vsel %vm50, %v42, 0
  %v55 = vsel %vm50, %v43, 0
  %57 = vmatpush.bf16.msra.mxu0 0
  %58 = vmatpush.bf16.msra.mxu0 0
  %59 = vmatpush.bf16.msra.mxu0 0
  %60 = vmatpush.bf16.msra.mxu0 0
  %61 = vmatpush.bf16.msra.mxu0 0
  %62 = vmatpush.bf16.msra.mxu0 0
  %63 = vmatpush.bf16.msra.mxu0 0
  %64 = vmatpush.bf16.msra.mxu0 %v48
  %65 = vmatmul.bf16.gmra.mxu0 %v52
  %v66 = vpop.f32.mrf.mxu0
  %v67 = vadd.f32 %v32, %v66
  %v68 = vpop.f32.mrf.mxu0
  %v69 = vadd.f32 %v32, %v68
  %70 = vmatmul.bf16.gmra.mxu0 %v55
  %v71 = vpop.f32.mrf.mxu0
  %v72 = vadd.f32 %v32, %v71
  %v73 = vpop.f32.mrf.mxu0
  %v74 = vadd.f32 %v32, %v73
  %75 = vdwg.mxu0
  %v76 = vld [vmem:[%s3] sm:$0xf]
  %v77 = vld [vmem:[%s3 + $0x4] sm:$0xf]
  %v78 = vld [vmem:[%s3 + $0x8] sm:$0xf]
  %v79 = vld [vmem:[%s3 + $0xc] sm:$0xf]
  %v80 = vunpack.c.l.bf16 %v76
  %v81 = vunpack.c.l.bf16 %v77
  %v82 = vunpack.c.l.bf16 %v78
  %v83 = vunpack.c.l.bf16 %v79
  %v84 = vadd.f32 %v67, %v80
  %v85 = vadd.f32 %v69, %v81
  %v86 = vadd.f32 %v72, %v82
  %v87 = vadd.f32 %v74, %v83
  %vm88 = vcmask 261120
  %v89 = vsel %vm88, %v84, 0.0
  %90 = vadd.xlane.f32.xlu0 %v89
  %v91 = vpop.xlane.xlu0 %90
  %v92 = vsel %vm88, %v85, 0.0
  %93 = vadd.xlane.f32.xlu0 %v92
  %v94 = vpop.xlane.xlu0 %93
  %v95 = vsel %vm88, %v86, 0.0
  %96 = vadd.xlane.f32.xlu0 %v95
  %v97 = vpop.xlane.xlu0 %96
  %v98 = vsel %vm88, %v87, 0.0
  %99 = vadd.xlane.f32.xlu0 %v98
  %v100 = vpop.xlane.xlu0 %99
  %v101 = vrcp.pop 32.0
  %v102 = vmul.f32 32.0, %v101
  %v103 = vsub.f32 1.0, %v102
  %v104 = vmul.f32 %v101, %v103
  %v105 = vadd.f32 %v101, %v104
  %vm106 = vweird.f32 %v101
  %v107 = vsel %vm106, %v101, %v105
  %v108 = vmul.f32 %v91, %v107
  %v109 = vmul.f32 %v94, %v107
  %v110 = vmul.f32 %v97, %v107
  %v111 = vmul.f32 %v100, %v107
  %v112 = vsub.f32 %v84, %v108
  %v113 = vsub.f32 %v85, %v109
  %v114 = vsub.f32 %v86, %v110
  %v115 = vsub.f32 %v87, %v111
  %v116 = vmul.f32 %v112, %v112
  %v117 = vmul.f32 %v113, %v113
  %v118 = vmul.f32 %v114, %v114
  %v119 = vmul.f32 %v115, %v115
  %v120 = vsel %vm88, %v116, 0.0
  %121 = vadd.xlane.f32.xlu0 %v120
  %v122 = vpop.xlane.xlu0 %121
  %v123 = vsel %vm88, %v117, 0.0
  %124 = vadd.xlane.f32.xlu0 %v123
  %v125 = vpop.xlane.xlu0 %124
  %v126 = vsel %vm88, %v118, 0.0
  %127 = vadd.xlane.f32.xlu0 %v126
  %v128 = vpop.xlane.xlu0 %127
  %v129 = vsel %vm88, %v119, 0.0
  %130 = vadd.xlane.f32.xlu0 %v129
  %v131 = vpop.xlane.xlu0 %130
  %v132 = vmul.f32 %v122, %v107
  %v133 = vmul.f32 %v125, %v107
  %v134 = vmul.f32 %v128, %v107
  %v135 = vmul.f32 %v131, %v107
  %v136 = vadd.f32 %v132, 1e-05
  %v137 = vadd.f32 %v133, 1e-05
  %v138 = vadd.f32 %v134, 1e-05
  %v139 = vadd.f32 %v135, 1e-05
  %v140 = vrsqrt.pop %v136
  %v141 = vmul.f32 %v140, %v136
  %v142 = vmul.f32 %v141, %v140
  %v143 = vmul.f32 0.5, %v142
  %v144 = vsub.f32 1.5, %v143
  %v145 = vmul.f32 %v140, %v144
  %vm146 = vweird.f32 %v136
  %vm147 = vweird.f32 %v140
  %vm148 = vmor %vm146, %vm147
  %v149 = vsel %vm148, %v140, %v145
  %v150 = vrsqrt.pop %v137
  %v151 = vmul.f32 %v150, %v137
  %v152 = vmul.f32 %v151, %v150
  %v153 = vmul.f32 0.5, %v152
  %v154 = vsub.f32 1.5, %v153
  %v155 = vmul.f32 %v150, %v154
  %vm156 = vweird.f32 %v137
  %vm157 = vweird.f32 %v150
  %vm158 = vmor %vm156, %vm157
  %v159 = vsel %vm158, %v150, %v155
  %v160 = vrsqrt.pop %v138
  %v161 = vmul.f32 %v160, %v138
  %v162 = vmul.f32 %v161, %v160
  %v163 = vmul.f32 0.5, %v162
  %v164 = vsub.f32 1.5, %v163
  %v165 = vmul.f32 %v160, %v164
  %vm166 = vweird.f32 %v138
  %vm167 = vweird.f32 %v160
  %vm168 = vmor %vm166, %vm167
  %v169 = vsel %vm168, %v160, %v165
  %v170 = vrsqrt.pop %v139
  %v171 = vmul.f32 %v170, %v139
  %v172 = vmul.f32 %v171, %v170
  %v173 = vmul.f32 0.5, %v172
  %v174 = vsub.f32 1.5, %v173
  %v175 = vmul.f32 %v170, %v174
  %vm176 = vweird.f32 %v139
  %vm177 = vweird.f32 %v170
  %vm178 = vmor %vm176, %vm177
  %v179 = vsel %vm178, %v170, %v175
  %v180 = vmul.f32 %v112, %v149
  %v181 = vmul.f32 %v113, %v159
  %v182 = vmul.f32 %v114, %v169
  %v183 = vmul.f32 %v115, %v179
  %v184 = vld [vmem:[%s4] sm:$0x1]
  %v186 = vperm.slane %v184, 0
  %v188 = vmul.f32 %v180, %v186
  %v189 = vmul.f32 %v181, %v186
  %v190 = vmul.f32 %v182, %v186
  %v191 = vmul.f32 %v183, %v186
  %v192 = vld [vmem:[%s5] sm:$0x1]
  %v194 = vperm.slane %v192, 0
  %v196 = vadd.f32 %v188, %v194
  %v197 = vadd.f32 %v189, %v194
  %v198 = vadd.f32 %v190, %v194
  %v199 = vadd.f32 %v191, %v194
  %v200 = vpack.c.bf16 %v196, %v196
  %v201 = vpack.c.bf16 %v197, %v197
  %v202 = vpack.c.bf16 %v198, %v198
  %v203 = vpack.c.bf16 %v199, %v199
  %vm204 = vcmask 257024
  %205 = vst.msk [vmem:[%s6] sm:$0xf] %vm204, %v200
  %206 = vst.msk [vmem:[%s6 + $0x4] sm:$0xf] %vm204, %v201
  %207 = vst.msk [vmem:[%s6 + $0x8] sm:$0xf] %vm204, %v202
  %208 = vst.msk [vmem:[%s6 + $0xc] sm:$0xf] %vm204, %v203
  // Predicated region
  $region26: #{two_way_transformer.39} parent=0 // pred_check
    _
  $region27: #{two_way_transformer.39} parent=0 // pred_check_branch
    %210 = sbr.rel (0) target = $region29
  $region28: #{two_way_transformer.39} parent=0 // pred_region
    _
  $region29: #{two_way_transformer.39} parent=0 // pred_fallthru
    _
  // Predicated region
  $region30: #{two_way_transformer.39} parent=0 // pred_check
    _
  $region31: #{two_way_transformer.39} parent=0 // pred_check_branch
    %212 = sbr.rel (0) target = $region33
  $region32: #{two_way_transformer.39} parent=0 // pred_region
    _
  $region33: #{two_way_transformer.39} parent=0 // pred_fallthru
    _

</llo_original>
